<compile_context>
chip_gen: v6e
topology: v6e:2x2x1
jax: 0.10.0
libtpu: 0.0.40
codegen_flags: <defaults>
</compile_context>

<pallas_src>
import math
from types import SimpleNamespace

import jax
import jax.numpy as jnp
from jax.experimental import pallas as pl
from jax.experimental.pallas import tpu as pltpu

# Reference / host-side fusion matmuls must be true f32 so the tightened
# tolerance compares like with like (TPU default matmul precision is lower).
jax.config.update("jax_default_matmul_precision", "highest")

_SUB = 8        # f32 sublane group: CLS row is replicated host-side to 8 rows
_HEAD_ROWS = 16
_LN_EPS = 1e-5  # PyTorch LayerNorm default


def _normalize(x, eps=_LN_EPS):
    """LayerNorm *without* affine (affine is folded into adjacent linears)."""
    mu = jnp.mean(x, axis=-1, keepdims=True)
    var = jnp.mean((x - mu) ** 2, axis=-1, keepdims=True)
    return (x - mu) * jax.lax.rsqrt(var + eps)


def _layernorm(x, gamma, beta, eps=_LN_EPS):
    return _normalize(x, eps) * gamma + beta


def cls_transformer_kernel(mat_ref, vec_ref, head_ref, out_ref):
    # mat_ref : (L, 3, D, D) per-layer fused matrices:
    #             [0] WA  = diag(g2_{l-1}) @ (I + Wv_l @ Wo_l)   (attn + residual
    #                       + previous layer's LN2 affine; identity for l == 0)
    #             [1] WF1 = diag(g1_l) @ W1_l                    (FF in + LN1 affine)
    #             [2] WF2 = W2_l                                 (FF out)
    # vec_ref : (L, 8, D)  sublane-packed per-layer vectors:
    #             row 0 bA, row 1 bF1, row 2 bF2, row 3 g_res (= g1_l), rows 4-7 pad
    # head_ref: (16, D)    rows 0..7 = CLS row (pre-broadcast), row 8 = fused Wr,
    #                      row 9 = fused br (lane-replicated), rows 10..15 pad
    # out_ref : (1, 128)   lane-dense scalar output (wrapper slices [0:1, 0:1])
    num_layers = mat_ref.shape[0]

    h = head_ref[0:_SUB, :]                                   # (8, D), already aligned

    # Python unroll: L is small (2).  TODO(synk): if L grows into the tens, switch
    # to lax.fori_loop(..., unroll=True) with dynamic mat_ref[l] indexing.
    for l in range(num_layers):
        wa = mat_ref[l, 0]                                    # (D, D)
        wf1 = mat_ref[l, 1]
        wf2 = mat_ref[l, 2]
        vrow = vec_ref[l]                                     # (8, D)
        ba, bf1, bf2, gres = (vrow[0:1, :], vrow[1:2, :],
                              vrow[2:3, :], vrow[3:4, :])

        # Self-attention (seq_len == 1 => softmax == 1) + residual + previous LN2
        # affine, all fused host-side into a single matmul + bias.
        a1 = jnp.dot(h, wa, preferred_element_type=jnp.float32) + ba
        n1 = _normalize(a1)
        # Feed-forward (dim_feedforward == model_dim), ReLU; LN1 affine lives in
        # WF1/bF1, its beta also folded into bF2.  Residual keeps the g1 scale.
        ff = jnp.maximum(jnp.dot(n1, wf1, preferred_element_type=jnp.float32) + bf1, 0.0)
        ff = jnp.dot(ff, wf2, preferred_element_type=jnp.float32) + bf2
        a2 = n1 * gres + ff
        h = _normalize(a2)

    # regresser(cls_output); last layer's LN2 affine is folded into wr/br.
    wr = head_ref[_SUB:_SUB + 1, :]                           # (1, D)
    br = head_ref[_SUB + 1:_SUB + 2, 0:1]                     # (1, 1)
    val = jnp.sum(h[0:1, :] * wr, axis=-1, keepdims=True) + br
    out_ref[...] = jnp.broadcast_to(val, out_ref.shape)


def transformer_forward(x, params):
    """Forward pass of TransformerModel (returns the same (1, 1) as PyTorch).

    TODO(synk): the modeled network is degenerate -- because the encoder sees
    sequence length 1, the returned value depends only on the CLS parameter and
    the layer weights, never on `x`.  Callers should hoist/cache this result
    until the parameters change instead of re-launching per batch.  If multiple
    parameter sets / CLS rows ever need evaluating, batch them along the sublane
    axis of `h` and add a leading "parallel" grid axis (keeps both v7x TCs busy).
    """
    B, input_dim, T = x.shape
    del B, T  # output is independent of x (see TODO above)
    assert input_dim == params["wfc"].shape[0]

    vmem = pl.BlockSpec(memory_space=pltpu.MemorySpace.VMEM)
    out = pl.pallas_call(
        cls_transformer_kernel,
        out_shape=jax.ShapeDtypeStruct((1, 128), jnp.float32),  # lane-dense store
        in_specs=[vmem, vmem, vmem],   # 3 packed slabs, ~40 KB resident total
        out_specs=vmem,
    )(params["mat"], params["vec"], params["head"])
    return out[0:1, 0:1]


def build_fused_slabs(p, num_layers, d_model):
    """Exact host-side fusion into the three kernel slabs (see kernel docstring)."""
    D = d_model
    eye = jnp.eye(D, dtype=jnp.float32)
    mats, vecs = [], []
    g_in = jnp.ones((1, D), jnp.float32)    # affine feeding layer 0 is identity
    b_in = jnp.zeros((1, D), jnp.float32)
    for l in range(num_layers):
        # attention (softmax == 1) + residual:   h + (h@Wv + bv)@Wo + bo
        A = eye + p["wv"][l] @ p["wo"][l]
        c = p["bv"][l] @ p["wo"][l] + p["bo"][l]
        wa = g_in.T * A                      # diag(g_in) @ A
        ba = b_in @ A + c
        # feed-forward with LN1 affine folded in
        wf1 = p["g1"][l].T * p["w1"][l]      # diag(g1) @ W1
        bf1 = p["be1"][l] @ p["w1"][l] + p["bf1"][l]
        wf2 = p["w2"][l]
        bf2 = p["bf2"][l] + p["be1"][l]      # beta1 moves to the additive constant
        gres = p["g1"][l]                    # residual keeps the gamma1 scale
        mats.append(jnp.stack([wa, wf1, wf2]))                       # (3, D, D)
        vecs.append(jnp.concatenate(
            [ba, bf1, bf2, gres, jnp.zeros((_SUB - 4, D), jnp.float32)], axis=0))
        g_in, b_in = p["g2"][l], p["be2"][l]

    # regresser with the last layer's LN2 affine folded in
    wr_row = p["wr"].reshape(1, D) * g_in                            # (1, D)
    br_val = b_in @ p["wr"] + p["br"]                                # (1, 1)
    head = jnp.concatenate(
        [jnp.broadcast_to(p["cls"], (_SUB, D)),                      # rows 0..7
         wr_row,                                                     # row 8
         jnp.broadcast_to(br_val, (1, D)),                           # row 9
         jnp.zeros((_HEAD_ROWS - _SUB - 2, D), jnp.float32)], axis=0)
    return dict(mat=jnp.stack(mats), vec=jnp.stack(vecs), head=head)


def make_params(key, input_dim, d_model, num_layers):
    def linear(k, fan_in, fan_out):
        bound = 1.0 / math.sqrt(fan_in)
        kw, kb = jax.random.split(k)
        w = jax.random.uniform(kw, (fan_in, fan_out), jnp.float32, -bound, bound)
        b = jax.random.uniform(kb, (1, fan_out), jnp.float32, -bound, bound)
        return w, b

    keys = jax.random.split(key, 3 + 4 * num_layers)
    wfc, bfc = linear(keys[0], input_dim, d_model)
    cls = jax.random.uniform(keys[1], (1, d_model), jnp.float32)     # torch.rand
    wr, br = linear(keys[2], d_model, 1)                             # (D,1), (1,1)

    wv, bv, wo, bo, w1, bf1, w2, bf2 = ([] for _ in range(8))
    for l in range(num_layers):
        k0, k1, k2, k3 = keys[3 + 4 * l: 3 + 4 * (l + 1)]
        a, b = linear(k0, d_model, d_model); wv.append(a); bv.append(b)
        a, b = linear(k1, d_model, d_model); wo.append(a); bo.append(b)
        a, b = linear(k2, d_model, d_model); w1.append(a); bf1.append(b)
        a, b = linear(k3, d_model, d_model); w2.append(a); bf2.append(b)

    ones = jnp.ones((num_layers, 1, d_model), jnp.float32)    # LayerNorm default init
    zeros = jnp.zeros((num_layers, 1, d_model), jnp.float32)

    # PositionalEncoding row for position 0: [sin(0), cos(0), ...] (reference only).
    div = jnp.exp(jnp.arange(0, d_model, 2, dtype=jnp.float32)
                  * (-math.log(10000.0) / d_model))
    pe_row = jnp.zeros((1, d_model), jnp.float32)
    pe_row = pe_row.at[:, 0::2].set(jnp.sin(0.0 * div))
    pe_row = pe_row.at[:, 1::2].set(jnp.cos(0.0 * div))

    p = dict(
        wfc=wfc, bfc=bfc, pe_row=pe_row, cls=cls,
        wv=jnp.stack(wv), bv=jnp.stack(bv), wo=jnp.stack(wo), bo=jnp.stack(bo),
        w1=jnp.stack(w1), bf1=jnp.stack(bf1), w2=jnp.stack(w2), bf2=jnp.stack(bf2),
        g1=ones, be1=zeros, g2=ones, be2=zeros,
        wr=wr, br=br,
    )
    p.update(build_fused_slabs(p, num_layers, d_model))
    return p


def reference_forward(x, p, num_layers):
    """Pure-JAX mirror of the full PyTorch forward (eval mode), consuming x,
    using the UNFUSED per-layer weights."""
    B, _, T = x.shape
    emb = jnp.concatenate([x[:, :, i] @ p["wfc"] + p["bfc"] for i in range(T)], axis=0)
    emb = emb + p["pe_row"]
    h = jnp.concatenate([p["cls"], emb], axis=0)
    for l in range(num_layers):
        sa = (h @ p["wv"][l] + p["bv"][l]) @ p["wo"][l] + p["bo"][l]
        h = _layernorm(h + sa, p["g1"][l], p["be1"][l])
        ff = jnp.maximum(h @ p["w1"][l] + p["bf1"][l], 0.0) @ p["w2"][l] + p["bf2"][l]
        h = _layernorm(h + ff, p["g2"][l], p["be2"][l])
    return h[0:1] @ p["wr"] + p["br"]


if __name__ == "__main__":
    # Small config (model hardcodes input_dim = 1882; dim_feedforward = trans_dim).
    args = SimpleNamespace(batch_size=2, trans_head=4, trans_dropout=0.0,
                           trans_layer=2, trans_dim=32, prediction_years=1)
    # TODO(synk): dropout layers are identity here (eval-mode semantics);
    #             regresser_list is initialized in __init__ but unused in forward.
    B, T = args.batch_size, 4
    input_dim, D, L = 1882, args.trans_dim, args.trans_layer

    key = jax.random.PRNGKey(0)
    kx, kp = jax.random.split(key)
    x = jax.random.normal(kx, (B, input_dim, T), jnp.float32)
    params = make_params(kp, input_dim, D, L)

    out = jax.block_until_ready(transformer_forward(x, params))
    assert out.shape == (1, 1), out.shape

    ref = reference_forward(x, params, L)     # full reference, including x path
    # Tolerance tightened from 1e-2 to ~1e-5 (per review); remaining drift is the
    # float reassociation of the host-side Wv@Wo / affine fusions.
    if not jnp.allclose(out, ref, rtol=1e-5, atol=5e-5):
        raise ValueError(f"kernel/reference mismatch: {out} vs {ref}")

    print("KERNEL_OK")
</pallas_src>

<mosaic_0001>
module attributes {stable_mosaic.version = 11 : i64} {
  func.func @cls_transformer_kernel(%arg0: memref<2x3x32x32xf32, #tpu.memory_space<vmem>>, %arg1: memref<2x8x32xf32, #tpu.memory_space<vmem>>, %arg2: memref<16x32xf32, #tpu.memory_space<vmem>>, %arg3: memref<1x128xf32, #tpu.memory_space<vmem>>) attributes {dimension_semantics = [], scalar_prefetch = 0 : i64, scratch_operands = 0 : i64, tpu.core_type = #tpu.core_type<tc>} {
    %c0 = arith.constant 0 : index
    %c0_0 = arith.constant 0 : index
    %0 = vector.load %arg2[%c0, %c0_0] : memref<16x32xf32, #tpu.memory_space<vmem>>, vector<8x32xf32>
    %c0_1 = arith.constant 0 : index
    %c0_2 = arith.constant 0 : index
    %c0_3 = arith.constant 0 : index
    %c0_4 = arith.constant 0 : index
    %1 = vector.load %arg0[%c0_1, %c0_2, %c0_3, %c0_4] : memref<2x3x32x32xf32, #tpu.memory_space<vmem>>, vector<1x1x32x32xf32>
    %2 = vector.shape_cast %1 : vector<1x1x32x32xf32> to vector<32x32xf32>
    %c0_5 = arith.constant 0 : index
    %c1 = arith.constant 1 : index
    %c0_6 = arith.constant 0 : index
    %c0_7 = arith.constant 0 : index
    %3 = vector.load %arg0[%c0_5, %c1, %c0_6, %c0_7] : memref<2x3x32x32xf32, #tpu.memory_space<vmem>>, vector<1x1x32x32xf32>
    %4 = vector.shape_cast %3 : vector<1x1x32x32xf32> to vector<32x32xf32>
    %c0_8 = arith.constant 0 : index
    %c2 = arith.constant 2 : index
    %c0_9 = arith.constant 0 : index
    %c0_10 = arith.constant 0 : index
    %5 = vector.load %arg0[%c0_8, %c2, %c0_9, %c0_10] : memref<2x3x32x32xf32, #tpu.memory_space<vmem>>, vector<1x1x32x32xf32>
    %6 = vector.shape_cast %5 : vector<1x1x32x32xf32> to vector<32x32xf32>
    %c0_11 = arith.constant 0 : index
    %c0_12 = arith.constant 0 : index
    %c0_13 = arith.constant 0 : index
    %7 = vector.load %arg1[%c0_11, %c0_12, %c0_13] : memref<2x8x32xf32, #tpu.memory_space<vmem>>, vector<1x8x32xf32>
    %8 = vector.shape_cast %7 : vector<1x8x32xf32> to vector<8x32xf32>
    %9 = vector.extract_strided_slice %8 {offsets = [0, 0], sizes = [1, 32], strides = [1, 1]} : vector<8x32xf32> to vector<1x32xf32>
    %10 = vector.extract_strided_slice %8 {offsets = [1, 0], sizes = [1, 32], strides = [1, 1]} : vector<8x32xf32> to vector<1x32xf32>
    %11 = vector.extract_strided_slice %8 {offsets = [2, 0], sizes = [1, 32], strides = [1, 1]} : vector<8x32xf32> to vector<1x32xf32>
    %12 = vector.extract_strided_slice %8 {offsets = [3, 0], sizes = [1, 32], strides = [1, 1]} : vector<8x32xf32> to vector<1x32xf32>
    %cst = arith.constant dense<0.000000e+00> : vector<8x32xf32>
    %13 = tpu.matmul %0, %2, %cst {dimension_numbers = #tpu.dot_dimension_numbers<[1], [0], [0], [1], [0, 0, 1, 1], [], []>, precision = #tpu.contract_precision<fp32>} : vector<8x32xf32>, vector<32x32xf32>, vector<8x32xf32> -> vector<8x32xf32>
    %14 = vector.broadcast %9 : vector<1x32xf32> to vector<8x32xf32>
    %15 = arith.addf %13, %14 : vector<8x32xf32>
    %cst_14 = arith.constant dense<0.000000e+00> : vector<8xf32>
    %16 = vector.multi_reduction <add>, %15, %cst_14 [1] : vector<8x32xf32> to vector<8xf32>
    %17 = vector.shape_cast %16 : vector<8xf32> to vector<8x1xf32>
    %cst_15 = arith.constant 3.200000e+01 : f32
    %18 = vector.broadcast %cst_15 : f32 to vector<8x1xf32>
    %19 = arith.divf %17, %18 : vector<8x1xf32>
    %20 = vector.broadcast %19 : vector<8x1xf32> to vector<8x32xf32>
    %21 = arith.subf %15, %20 : vector<8x32xf32>
    %22 = arith.mulf %21, %21 : vector<8x32xf32>
    %cst_16 = arith.constant dense<0.000000e+00> : vector<8xf32>
    %23 = vector.multi_reduction <add>, %22, %cst_16 [1] : vector<8x32xf32> to vector<8xf32>
    %24 = vector.shape_cast %23 : vector<8xf32> to vector<8x1xf32>
    %cst_17 = arith.constant 3.200000e+01 : f32
    %25 = vector.broadcast %cst_17 : f32 to vector<8x1xf32>
    %26 = arith.divf %24, %25 : vector<8x1xf32>
    %27 = vector.broadcast %19 : vector<8x1xf32> to vector<8x32xf32>
    %28 = arith.subf %15, %27 : vector<8x32xf32>
    %cst_18 = arith.constant 9.99999974E-6 : f32
    %29 = vector.broadcast %cst_18 : f32 to vector<8x1xf32>
    %30 = arith.addf %26, %29 : vector<8x1xf32>
    %31 = math.rsqrt %30 : vector<8x1xf32>
    %32 = vector.broadcast %31 : vector<8x1xf32> to vector<8x32xf32>
    %33 = arith.mulf %28, %32 : vector<8x32xf32>
    %cst_19 = arith.constant dense<0.000000e+00> : vector<8x32xf32>
    %34 = tpu.matmul %33, %4, %cst_19 {dimension_numbers = #tpu.dot_dimension_numbers<[1], [0], [0], [1], [0, 0, 1, 1], [], []>, precision = #tpu.contract_precision<fp32>} : vector<8x32xf32>, vector<32x32xf32>, vector<8x32xf32> -> vector<8x32xf32>
    %35 = vector.broadcast %10 : vector<1x32xf32> to vector<8x32xf32>
    %36 = arith.addf %34, %35 : vector<8x32xf32>
    %cst_20 = arith.constant 0.000000e+00 : f32
    %37 = vector.broadcast %cst_20 : f32 to vector<8x32xf32>
    %38 = arith.maximumf %36, %37 : vector<8x32xf32>
    %cst_21 = arith.constant dense<0.000000e+00> : vector<8x32xf32>
    %39 = tpu.matmul %38, %6, %cst_21 {dimension_numbers = #tpu.dot_dimension_numbers<[1], [0], [0], [1], [0, 0, 1, 1], [], []>, precision = #tpu.contract_precision<fp32>} : vector<8x32xf32>, vector<32x32xf32>, vector<8x32xf32> -> vector<8x32xf32>
    %40 = vector.broadcast %11 : vector<1x32xf32> to vector<8x32xf32>
    %41 = arith.addf %39, %40 : vector<8x32xf32>
    %42 = vector.broadcast %12 : vector<1x32xf32> to vector<8x32xf32>
    %43 = arith.mulf %33, %42 : vector<8x32xf32>
    %44 = arith.addf %43, %41 : vector<8x32xf32>
    %cst_22 = arith.constant dense<0.000000e+00> : vector<8xf32>
    %45 = vector.multi_reduction <add>, %44, %cst_22 [1] : vector<8x32xf32> to vector<8xf32>
    %46 = vector.shape_cast %45 : vector<8xf32> to vector<8x1xf32>
    %cst_23 = arith.constant 3.200000e+01 : f32
    %47 = vector.broadcast %cst_23 : f32 to vector<8x1xf32>
    %48 = arith.divf %46, %47 : vector<8x1xf32>
    %49 = vector.broadcast %48 : vector<8x1xf32> to vector<8x32xf32>
    %50 = arith.subf %44, %49 : vector<8x32xf32>
    %51 = arith.mulf %50, %50 : vector<8x32xf32>
    %cst_24 = arith.constant dense<0.000000e+00> : vector<8xf32>
    %52 = vector.multi_reduction <add>, %51, %cst_24 [1] : vector<8x32xf32> to vector<8xf32>
    %53 = vector.shape_cast %52 : vector<8xf32> to vector<8x1xf32>
    %cst_25 = arith.constant 3.200000e+01 : f32
    %54 = vector.broadcast %cst_25 : f32 to vector<8x1xf32>
    %55 = arith.divf %53, %54 : vector<8x1xf32>
    %56 = vector.broadcast %48 : vector<8x1xf32> to vector<8x32xf32>
    %57 = arith.subf %44, %56 : vector<8x32xf32>
    %cst_26 = arith.constant 9.99999974E-6 : f32
    %58 = vector.broadcast %cst_26 : f32 to vector<8x1xf32>
    %59 = arith.addf %55, %58 : vector<8x1xf32>
    %60 = math.rsqrt %59 : vector<8x1xf32>
    %61 = vector.broadcast %60 : vector<8x1xf32> to vector<8x32xf32>
    %62 = arith.mulf %57, %61 : vector<8x32xf32>
    %c1_27 = arith.constant 1 : index
    %c0_28 = arith.constant 0 : index
    %c0_29 = arith.constant 0 : index
    %c0_30 = arith.constant 0 : index
    %63 = vector.load %arg0[%c1_27, %c0_28, %c0_29, %c0_30] : memref<2x3x32x32xf32, #tpu.memory_space<vmem>>, vector<1x1x32x32xf32>
    %64 = vector.shape_cast %63 : vector<1x1x32x32xf32> to vector<32x32xf32>
    %c1_31 = arith.constant 1 : index
    %c1_32 = arith.constant 1 : index
    %c0_33 = arith.constant 0 : index
    %c0_34 = arith.constant 0 : index
    %65 = vector.load %arg0[%c1_31, %c1_32, %c0_33, %c0_34] : memref<2x3x32x32xf32, #tpu.memory_space<vmem>>, vector<1x1x32x32xf32>
    %66 = vector.shape_cast %65 : vector<1x1x32x32xf32> to vector<32x32xf32>
    %c1_35 = arith.constant 1 : index
    %c2_36 = arith.constant 2 : index
    %c0_37 = arith.constant 0 : index
    %c0_38 = arith.constant 0 : index
    %67 = vector.load %arg0[%c1_35, %c2_36, %c0_37, %c0_38] : memref<2x3x32x32xf32, #tpu.memory_space<vmem>>, vector<1x1x32x32xf32>
    %68 = vector.shape_cast %67 : vector<1x1x32x32xf32> to vector<32x32xf32>
    %c1_39 = arith.constant 1 : index
    %c0_40 = arith.constant 0 : index
    %c0_41 = arith.constant 0 : index
    %69 = vector.load %arg1[%c1_39, %c0_40, %c0_41] : memref<2x8x32xf32, #tpu.memory_space<vmem>>, vector<1x8x32xf32>
    %70 = vector.shape_cast %69 : vector<1x8x32xf32> to vector<8x32xf32>
    %71 = vector.extract_strided_slice %70 {offsets = [0, 0], sizes = [1, 32], strides = [1, 1]} : vector<8x32xf32> to vector<1x32xf32>
    %72 = vector.extract_strided_slice %70 {offsets = [1, 0], sizes = [1, 32], strides = [1, 1]} : vector<8x32xf32> to vector<1x32xf32>
    %73 = vector.extract_strided_slice %70 {offsets = [2, 0], sizes = [1, 32], strides = [1, 1]} : vector<8x32xf32> to vector<1x32xf32>
    %74 = vector.extract_strided_slice %70 {offsets = [3, 0], sizes = [1, 32], strides = [1, 1]} : vector<8x32xf32> to vector<1x32xf32>
    %cst_42 = arith.constant dense<0.000000e+00> : vector<8x32xf32>
    %75 = tpu.matmul %62, %64, %cst_42 {dimension_numbers = #tpu.dot_dimension_numbers<[1], [0], [0], [1], [0, 0, 1, 1], [], []>, precision = #tpu.contract_precision<fp32>} : vector<8x32xf32>, vector<32x32xf32>, vector<8x32xf32> -> vector<8x32xf32>
    %76 = vector.broadcast %71 : vector<1x32xf32> to vector<8x32xf32>
    %77 = arith.addf %75, %76 : vector<8x32xf32>
    %cst_43 = arith.constant dense<0.000000e+00> : vector<8xf32>
    %78 = vector.multi_reduction <add>, %77, %cst_43 [1] : vector<8x32xf32> to vector<8xf32>
    %79 = vector.shape_cast %78 : vector<8xf32> to vector<8x1xf32>
    %cst_44 = arith.constant 3.200000e+01 : f32
    %80 = vector.broadcast %cst_44 : f32 to vector<8x1xf32>
    %81 = arith.divf %79, %80 : vector<8x1xf32>
    %82 = vector.broadcast %81 : vector<8x1xf32> to vector<8x32xf32>
    %83 = arith.subf %77, %82 : vector<8x32xf32>
    %84 = arith.mulf %83, %83 : vector<8x32xf32>
    %cst_45 = arith.constant dense<0.000000e+00> : vector<8xf32>
    %85 = vector.multi_reduction <add>, %84, %cst_45 [1] : vector<8x32xf32> to vector<8xf32>
    %86 = vector.shape_cast %85 : vector<8xf32> to vector<8x1xf32>
    %cst_46 = arith.constant 3.200000e+01 : f32
    %87 = vector.broadcast %cst_46 : f32 to vector<8x1xf32>
    %88 = arith.divf %86, %87 : vector<8x1xf32>
    %89 = vector.broadcast %81 : vector<8x1xf32> to vector<8x32xf32>
    %90 = arith.subf %77, %89 : vector<8x32xf32>
    %cst_47 = arith.constant 9.99999974E-6 : f32
    %91 = vector.broadcast %cst_47 : f32 to vector<8x1xf32>
    %92 = arith.addf %88, %91 : vector<8x1xf32>
    %93 = math.rsqrt %92 : vector<8x1xf32>
    %94 = vector.broadcast %93 : vector<8x1xf32> to vector<8x32xf32>
    %95 = arith.mulf %90, %94 : vector<8x32xf32>
    %cst_48 = arith.constant dense<0.000000e+00> : vector<8x32xf32>
    %96 = tpu.matmul %95, %66, %cst_48 {dimension_numbers = #tpu.dot_dimension_numbers<[1], [0], [0], [1], [0, 0, 1, 1], [], []>, precision = #tpu.contract_precision<fp32>} : vector<8x32xf32>, vector<32x32xf32>, vector<8x32xf32> -> vector<8x32xf32>
    %97 = vector.broadcast %72 : vector<1x32xf32> to vector<8x32xf32>
    %98 = arith.addf %96, %97 : vector<8x32xf32>
    %cst_49 = arith.constant 0.000000e+00 : f32
    %99 = vector.broadcast %cst_49 : f32 to vector<8x32xf32>
    %100 = arith.maximumf %98, %99 : vector<8x32xf32>
    %cst_50 = arith.constant dense<0.000000e+00> : vector<8x32xf32>
    %101 = tpu.matmul %100, %68, %cst_50 {dimension_numbers = #tpu.dot_dimension_numbers<[1], [0], [0], [1], [0, 0, 1, 1], [], []>, precision = #tpu.contract_precision<fp32>} : vector<8x32xf32>, vector<32x32xf32>, vector<8x32xf32> -> vector<8x32xf32>
    %102 = vector.broadcast %73 : vector<1x32xf32> to vector<8x32xf32>
    %103 = arith.addf %101, %102 : vector<8x32xf32>
    %104 = vector.broadcast %74 : vector<1x32xf32> to vector<8x32xf32>
    %105 = arith.mulf %95, %104 : vector<8x32xf32>
    %106 = arith.addf %105, %103 : vector<8x32xf32>
    %cst_51 = arith.constant dense<0.000000e+00> : vector<8xf32>
    %107 = vector.multi_reduction <add>, %106, %cst_51 [1] : vector<8x32xf32> to vector<8xf32>
    %108 = vector.shape_cast %107 : vector<8xf32> to vector<8x1xf32>
    %cst_52 = arith.constant 3.200000e+01 : f32
    %109 = vector.broadcast %cst_52 : f32 to vector<8x1xf32>
    %110 = arith.divf %108, %109 : vector<8x1xf32>
    %111 = vector.broadcast %110 : vector<8x1xf32> to vector<8x32xf32>
    %112 = arith.subf %106, %111 : vector<8x32xf32>
    %113 = arith.mulf %112, %112 : vector<8x32xf32>
    %cst_53 = arith.constant dense<0.000000e+00> : vector<8xf32>
    %114 = vector.multi_reduction <add>, %113, %cst_53 [1] : vector<8x32xf32> to vector<8xf32>
    %115 = vector.shape_cast %114 : vector<8xf32> to vector<8x1xf32>
    %cst_54 = arith.constant 3.200000e+01 : f32
    %116 = vector.broadcast %cst_54 : f32 to vector<8x1xf32>
    %117 = arith.divf %115, %116 : vector<8x1xf32>
    %118 = vector.broadcast %110 : vector<8x1xf32> to vector<8x32xf32>
    %119 = arith.subf %106, %118 : vector<8x32xf32>
    %cst_55 = arith.constant 9.99999974E-6 : f32
    %120 = vector.broadcast %cst_55 : f32 to vector<8x1xf32>
    %121 = arith.addf %117, %120 : vector<8x1xf32>
    %122 = math.rsqrt %121 : vector<8x1xf32>
    %123 = vector.broadcast %122 : vector<8x1xf32> to vector<8x32xf32>
    %124 = arith.mulf %119, %123 : vector<8x32xf32>
    %c8 = arith.constant 8 : index
    %c0_56 = arith.constant 0 : index
    %125 = vector.load %arg2[%c8, %c0_56] : memref<16x32xf32, #tpu.memory_space<vmem>>, vector<1x32xf32>
    %c9 = arith.constant 9 : index
    %c0_57 = arith.constant 0 : index
    %126 = vector.load %arg2[%c9, %c0_57] : memref<16x32xf32, #tpu.memory_space<vmem>>, vector<1x1xf32>
    %127 = vector.extract_strided_slice %124 {offsets = [0, 0], sizes = [1, 32], strides = [1, 1]} : vector<8x32xf32> to vector<1x32xf32>
    %128 = arith.mulf %127, %125 : vector<1x32xf32>
    %cst_58 = arith.constant dense<0.000000e+00> : vector<1xf32>
    %129 = vector.multi_reduction <add>, %128, %cst_58 [1] : vector<1x32xf32> to vector<1xf32>
    %130 = vector.shape_cast %129 : vector<1xf32> to vector<1x1xf32>
    %131 = arith.addf %130, %126 : vector<1x1xf32>
    %132 = vector.shape_cast %131 : vector<1x1xf32> to vector<1x1xf32>
    %133 = vector.broadcast %132 : vector<1x1xf32> to vector<1x128xf32>
    %c0_59 = arith.constant 0 : index
    %c0_60 = arith.constant 0 : index
    %134 = vector.load %arg3[%c0_59, %c0_60] : memref<1x128xf32, #tpu.memory_space<vmem>>, vector<1x128xf32>
    tpu.vector_store %arg3[%c0_59, %c0_60], %133 {strides = array<i32>} : memref<1x128xf32, #tpu.memory_space<vmem>>, vector<1x128xf32>,
    return
  }
}

</mosaic_0001>

<llo_original>
// kernel: tpu_custom_call.1
$region0: #{tpu_custom_call.1}
  #allocation0 [shape = 'u32[]', space=smem, size = 0x4, offset = 0x4, fixed_abs, tag = 'smem constant byte address 0x4 - core index']
  #allocation1 [shape = 'u32[144,128]{1,0:T(1,128)}', space=vmem, size = 0x12000, scoped, tag = 'internal scratch']
  %s0 = inlined_call_operand.hbm [shape: f32[2,3,32,32], index: 0, kind: input, shape index: {}]
  %s1 = inlined_call_operand.hbm [shape: f32[2,8,32], index: 1, kind: input, shape index: {}]
  %s2 = inlined_call_operand.hbm [shape: f32[16,32], index: 2, kind: input, shape index: {}]
  %s3 = inlined_call_operand.hbm [shape: f32[1,128], index: 3, kind: output, shape index: {}]
  %s4 = sld [smem:[#allocation0]]
  $region34: #{tpu_custom_call.1} parent=0
    _
  %s6 = ssub.s32 1, %s4
  %s7 = scalar_select 0, %s6, %s4
  $region1: #{tpu_custom_call.1} parent=0
    #allocation2 [shape = 'u8[98304]{0}', space=vmem, size = 0x18000, scoped, tag = 'input window, operand 0, single buffered']
    #allocation3 [shape = 's32[1]{0}', space=sflag, size = 0x4, scoped, tag = 'scoped memory for tpu_custom_call.1']
    #allocation4 [shape = 's32[1]{0}', space=sflag, size = 0x4, scoped, tag = 'scoped memory for tpu_custom_call.1']
    #allocation5 [shape = 'u8[8192]{0}', space=vmem, size = 0x2000, scoped, tag = 'input window, operand 1, single buffered']
    #allocation6 [shape = 's32[1]{0}', space=sflag, size = 0x4, scoped, tag = 'scoped memory for tpu_custom_call.1']
    #allocation7 [shape = 'u8[8192]{0}', space=vmem, size = 0x2000, scoped, tag = 'input window, operand 2, single buffered']
    #allocation8 [shape = 'u8[512]{0}', space=vmem, size = 0x400, scoped, tag = 'output window, operand 0, single buffered']
    %8 = vsyncpa [#allocation3], 0
    %9 = vsyncpa [#allocation6], 0
    %10 = vsyncpa [#allocation4], 0
    // Predicated region
    $region2: #{tpu_custom_call.1} parent=1 // pred_check
      _
    $region3: #{tpu_custom_call.1} parent=1 // pred_check_branch
      %12 = sbr.rel (0) target = $region5
    $region4: #{tpu_custom_call.1} parent=1 // pred_region
      %s14 = ssub.s32 3072, 3072
      %15 = vsyncadd [#allocation3], %s14
      %s16 = sshll.u32 [#allocation2], 4
      %s17 = int_to_ptr.vmem [resolvable:$true] %s16
      %22 = dma.hbm_to_vmem [thread:$0]  %s0, 3072, %s17, [#allocation3], 128, 128, 8
    $region5: #{tpu_custom_call.1} parent=1 // pred_fallthru
      _
    // Predicated region
    $region6: #{tpu_custom_call.1} parent=1 // pred_check
      _
    $region7: #{tpu_custom_call.1} parent=1 // pred_check_branch
      %24 = sbr.rel (0) target = $region9
    $region8: #{tpu_custom_call.1} parent=1 // pred_region
      %s26 = ssub.s32 256, 256
      %27 = vsyncadd [#allocation6], %s26
      %s28 = sshll.u32 [#allocation5], 4
      %s29 = int_to_ptr.vmem [resolvable:$true] %s28
      %34 = dma.hbm_to_vmem [thread:$0]  %s1, 256, %s29, [#allocation6], 128, 128, 8
    $region9: #{tpu_custom_call.1} parent=1 // pred_fallthru
      _
    // Predicated region
    $region10: #{tpu_custom_call.1} parent=1 // pred_check
      _
    $region11: #{tpu_custom_call.1} parent=1 // pred_check_branch
      %36 = sbr.rel (0) target = $region13
    $region12: #{tpu_custom_call.1} parent=1 // pred_region
      %s38 = ssub.s32 256, 256
      %39 = vsyncadd [#allocation6], %s38
      %s40 = sshll.u32 [#allocation7], 4
      %s41 = int_to_ptr.vmem [resolvable:$true] %s40
      %46 = dma.hbm_to_vmem [thread:$0]  %s2, 256, %s41, [#allocation6], 128, 128, 8
    $region13: #{tpu_custom_call.1} parent=1 // pred_fallthru
      _
    // Predicated region
    $region14: #{tpu_custom_call.1} parent=1 // pred_check
      _
    $region15: #{tpu_custom_call.1} parent=1 // pred_check_branch
      %48 = sbr.rel (0) target = $region17
    $region16: #{tpu_custom_call.1} parent=1 // pred_region
      %49 = dma.done [#allocation3], 3072
    $region17: #{tpu_custom_call.1} parent=1 // pred_fallthru
      _
    // Predicated region
    $region18: #{tpu_custom_call.1} parent=1 // pred_check
      _
    $region19: #{tpu_custom_call.1} parent=1 // pred_check_branch
      %51 = sbr.rel (0) target = $region21
    $region20: #{tpu_custom_call.1} parent=1 // pred_region
      %52 = dma.done [#allocation6], 256
    $region21: #{tpu_custom_call.1} parent=1 // pred_fallthru
      _
    // Predicated region
    $region22: #{tpu_custom_call.1} parent=1 // pred_check
      _
    $region23: #{tpu_custom_call.1} parent=1 // pred_check_branch
      %54 = sbr.rel (0) target = $region25
    $region24: #{tpu_custom_call.1} parent=1 // pred_region
      %55 = dma.done [#allocation6], 256
    $region25: #{tpu_custom_call.1} parent=1 // pred_fallthru
      _
    %v56 = vld [vmem:[#allocation7] sm:$0xff]
    %v57 = vld [vmem:[#allocation2] sm:$0xff]
    %v58 = vld [vmem:[#allocation2 + $0x8] sm:$0xff]
    %v59 = vld [vmem:[#allocation2 + $0x10] sm:$0xff]
    %v60 = vld [vmem:[#allocation2 + $0x18] sm:$0xff]
    %s61 = scalar_lea.vmem [#allocation2], 32
    %v62 = vld [vmem:[%s61] sm:$0xff]
    %v63 = vld [vmem:[%s61 + $0x8] sm:$0xff]
    %v64 = vld [vmem:[%s61 + $0x10] sm:$0xff]
    %v65 = vld [vmem:[%s61 + $0x18] sm:$0xff]
    %s66 = scalar_lea.vmem [#allocation2], 64
    %v67 = vld [vmem:[%s66] sm:$0xff]
    %v68 = vld [vmem:[%s66 + $0x8] sm:$0xff]
    %v69 = vld [vmem:[%s66 + $0x10] sm:$0xff]
    %v70 = vld [vmem:[%s66 + $0x18] sm:$0xff]
    %v71 = vld [vmem:[#allocation5] sm:$0xff]
    %v72 = vlaneseq
    %v73 = vshrl.u32 %v72, 7
    %v74 = vsub.s32 0, %v73
    %v75 = vrot.slane %v71, %v74
    %vm76 = vcmask 261120
    %v78 = vsel %vm76, %v56, 0
    %80 = vmatprep.subr.mxu0 0.0
    %81 = vmatpush1.msra.mxu0 0.0
    %82 = vmatprep.subr.mxu0 0.0
    %83 = vmatpush1.msra.mxu0 0.0
    %84 = vmatprep.subr.mxu0 0.0
    %85 = vmatpush1.msra.mxu0 0.0
    %86 = vmatprep.subr.mxu0 0.0
    %87 = vmatpush1.msra.mxu0 0.0
    %88 = vmatprep.subr.mxu0 0.0
    %89 = vmatpush1.msra.mxu0 0.0
    %90 = vmatprep.subr.mxu0 0.0
    %91 = vmatpush1.msra.mxu0 0.0
    %92 = vmatprep.subr.mxu0 0.0
    %93 = vmatpush1.msra.mxu0 0.0
    %94 = vmatprep.subr.mxu0 0.0
    %95 = vmatpush1.msra.mxu0 0.0
    %96 = vmatprep.subr.mxu0 0.0
    %97 = vmatpush1.msra.mxu0 0.0
    %98 = vmatprep.subr.mxu0 0.0
    %99 = vmatpush1.msra.mxu0 0.0
    %100 = vmatprep.subr.mxu0 0.0
    %101 = vmatpush1.msra.mxu0 0.0
    %102 = vmatprep.subr.mxu0 0.0
    %103 = vmatpush1.msra.mxu0 0.0
    %104 = vmatprep.subr.mxu0 0.0
    %v105 = vand.u32 %v60, 4294901760
    %106 = vmatpush1.msra.mxu0 %v105
    %107 = vmatprep.subr.mxu0 0.0
    %v108 = vand.u32 %v59, 4294901760
    %109 = vmatpush1.msra.mxu0 %v108
    %110 = vmatprep.subr.mxu0 0.0
    %v111 = vand.u32 %v58, 4294901760
    %112 = vmatpush1.msra.mxu0 %v111
    %113 = vmatprep.subr.mxu0 0.0
    %v114 = vand.u32 %v57, 4294901760
    %115 = vmatpush1.msra.mxu0 %v114
    %116 = vmatprep.subr.mxu0 0.0
    %117 = vmatpush2.msra.mxu0 0.0
    %118 = vmatprep.subr.mxu0 0.0
    %119 = vmatpush2.msra.mxu0 0.0
    %120 = vmatprep.subr.mxu0 0.0
    %121 = vmatpush2.msra.mxu0 0.0
    %122 = vmatprep.subr.mxu0 0.0
    %123 = vmatpush2.msra.mxu0 0.0
    %124 = vmatprep.subr.mxu0 0.0
    %125 = vmatpush2.msra.mxu0 0.0
    %126 = vmatprep.subr.mxu0 0.0
    %127 = vmatpush2.msra.mxu0 0.0
    %128 = vmatprep.subr.mxu0 0.0
    %129 = vmatpush2.msra.mxu0 0.0
    %130 = vmatprep.subr.mxu0 0.0
    %131 = vmatpush2.msra.mxu0 0.0
    %132 = vmatprep.subr.mxu0 0.0
    %133 = vmatpush2.msra.mxu0 0.0
    %134 = vmatprep.subr.mxu0 0.0
    %135 = vmatpush2.msra.mxu0 0.0
    %136 = vmatprep.subr.mxu0 0.0
    %137 = vmatpush2.msra.mxu0 0.0
    %138 = vmatprep.subr.mxu0 0.0
    %139 = vmatpush2.msra.mxu0 0.0
    %140 = vmatprep.subr.mxu0 0.0
    %141 = vmatpush2.msra.mxu0 0.0
    %142 = vmatprep.subr.mxu0 0.0
    %143 = vmatpush2.msra.mxu0 0.0
    %144 = vmatprep.subr.mxu0 0.0
    %145 = vmatpush2.msra.mxu0 0.0
    %146 = vmatprep.subr.mxu0 0.0
    %147 = vmatpush2.msra.mxu0 0.0
    %148 = vmatprep.mubr.f32.mxu0 0.0
    %v149 = vand.u32 %v78, 4294901760
    %v150 = vsub.f32 %v78, %v149
    %v151 = vand.u32 %v150, 4294901760
    %v152 = vsub.f32 %v150, %v151
    %v153 = vand.u32 %v152, 4294901760
    %154 = vmatmul.mubr.f32.gmra.mxu0 %v153
    %v155 = vpop.f32.mrf.mxu0
    %v156 = vadd.f32 %v75, %v155
    %v157 = vpop.f32.mrf.mxu0
    %158 = vdwg.mxu0
    %159 = vmatprep.subr.mxu0 0.0
    %160 = vmatpush1.msra.mxu0 0.0
    %161 = vmatprep.subr.mxu0 0.0
    %162 = vmatpush1.msra.mxu0 0.0
    %163 = vmatprep.subr.mxu0 0.0
    %164 = vmatpush1.msra.mxu0 0.0
    %165 = vmatprep.subr.mxu0 0.0
    %166 = vmatpush1.msra.mxu0 0.0
    %167 = vmatprep.subr.mxu0 0.0
    %168 = vmatpush1.msra.mxu0 0.0
    %169 = vmatprep.subr.mxu0 0.0
    %170 = vmatpush1.msra.mxu0 0.0
    %171 = vmatprep.subr.mxu0 0.0
    %172 = vmatpush1.msra.mxu0 0.0
    %173 = vmatprep.subr.mxu0 0.0
    %174 = vmatpush1.msra.mxu0 0.0
    %175 = vmatprep.subr.mxu0 0.0
    %176 = vmatpush1.msra.mxu0 0.0
    %177 = vmatprep.subr.mxu0 0.0
    %178 = vmatpush1.msra.mxu0 0.0
    %179 = vmatprep.subr.mxu0 0.0
    %180 = vmatpush1.msra.mxu0 0.0
    %181 = vmatprep.subr.mxu0 0.0
    %182 = vmatpush1.msra.mxu0 0.0
    %183 = vmatprep.subr.mxu0 0.0
    %v184 = vand.u32 %v60, 4294901760
    %v185 = vsub.f32 %v60, %v184
    %v186 = vand.u32 %v185, 4294901760
    %v187 = vsub.f32 %v185, %v186
    %v188 = vand.u32 %v187, 4294901760
    %189 = vmatpush1.msra.mxu0 %v188
    %190 = vmatprep.subr.mxu0 0.0
    %v191 = vand.u32 %v59, 4294901760
    %v192 = vsub.f32 %v59, %v191
    %v193 = vand.u32 %v192, 4294901760
    %v194 = vsub.f32 %v192, %v193
    %v195 = vand.u32 %v194, 4294901760
    %196 = vmatpush1.msra.mxu0 %v195
    %197 = vmatprep.subr.mxu0 0.0
    %v198 = vand.u32 %v58, 4294901760
    %v199 = vsub.f32 %v58, %v198
    %v200 = vand.u32 %v199, 4294901760
    %v201 = vsub.f32 %v199, %v200
    %v202 = vand.u32 %v201, 4294901760
    %203 = vmatpush1.msra.mxu0 %v202
    %204 = vmatprep.subr.mxu0 0.0
    %v205 = vand.u32 %v57, 4294901760
    %v206 = vsub.f32 %v57, %v205
    %v207 = vand.u32 %v206, 4294901760
    %v208 = vsub.f32 %v206, %v207
    %v209 = vand.u32 %v208, 4294901760
    %210 = vmatpush1.msra.mxu0 %v209
    %211 = vmatprep.subr.mxu0 0.0
    %212 = vmatpush2.msra.mxu0 0.0
    %213 = vmatprep.subr.mxu0 0.0
    %214 = vmatpush2.msra.mxu0 0.0
    %215 = vmatprep.subr.mxu0 0.0
    %216 = vmatpush2.msra.mxu0 0.0
    %217 = vmatprep.subr.mxu0 0.0
    %218 = vmatpush2.msra.mxu0 0.0
    %219 = vmatprep.subr.mxu0 0.0
    %220 = vmatpush2.msra.mxu0 0.0
    %221 = vmatprep.subr.mxu0 0.0
    %222 = vmatpush2.msra.mxu0 0.0
    %223 = vmatprep.subr.mxu0 0.0
    %224 = vmatpush2.msra.mxu0 0.0
    %225 = vmatprep.subr.mxu0 0.0
    %226 = vmatpush2.msra.mxu0 0.0
    %227 = vmatprep.subr.mxu0 0.0
    %228 = vmatpush2.msra.mxu0 0.0
    %229 = vmatprep.subr.mxu0 0.0
    %230 = vmatpush2.msra.mxu0 0.0
    %231 = vmatprep.subr.mxu0 0.0
    %232 = vmatpush2.msra.mxu0 0.0
    %233 = vmatprep.subr.mxu0 0.0
    %234 = vmatpush2.msra.mxu0 0.0
    %235 = vmatprep.subr.mxu0 0.0
    %236 = vmatpush2.msra.mxu0 0.0
    %237 = vmatprep.subr.mxu0 0.0
    %238 = vmatpush2.msra.mxu0 0.0
    %239 = vmatprep.subr.mxu0 0.0
    %240 = vmatpush2.msra.mxu0 0.0
    %241 = vmatprep.subr.mxu0 0.0
    %242 = vmatpush2.msra.mxu0 0.0
    %243 = vmatprep.mubr.f32.mxu0 0.0
    %v244 = vand.u32 %v78, 4294901760
    %245 = vmatmul.mubr.f32.gmra.mxu0 %v244
    %v246 = vpop.f32.mrf.mxu0
    %v247 = vadd.f32 %v156, %v246
    %v248 = vpop.f32.mrf.mxu0
    %249 = vdwg.mxu0
    %250 = vmatprep.subr.mxu0 0.0
    %251 = vmatpush1.msra.mxu0 0.0
    %252 = vmatprep.subr.mxu0 0.0
    %253 = vmatpush1.msra.mxu0 0.0
    %254 = vmatprep.subr.mxu0 0.0
    %255 = vmatpush1.msra.mxu0 0.0
    %256 = vmatprep.subr.mxu0 0.0
    %257 = vmatpush1.msra.mxu0 0.0
    %258 = vmatprep.subr.mxu0 0.0
    %259 = vmatpush1.msra.mxu0 0.0
    %260 = vmatprep.subr.mxu0 0.0
    %261 = vmatpush1.msra.mxu0 0.0
    %262 = vmatprep.subr.mxu0 0.0
    %263 = vmatpush1.msra.mxu0 0.0
    %264 = vmatprep.subr.mxu0 0.0
    %265 = vmatpush1.msra.mxu0 0.0
    %266 = vmatprep.subr.mxu0 0.0
    %267 = vmatpush1.msra.mxu0 0.0
    %268 = vmatprep.subr.mxu0 0.0
    %269 = vmatpush1.msra.mxu0 0.0
    %270 = vmatprep.subr.mxu0 0.0
    %271 = vmatpush1.msra.mxu0 0.0
    %272 = vmatprep.subr.mxu0 0.0
    %273 = vmatpush1.msra.mxu0 0.0
    %274 = vmatprep.subr.mxu0 0.0
    %v275 = vand.u32 %v60, 4294901760
    %v276 = vsub.f32 %v60, %v275
    %277 = vmatpush1.msra.mxu0 %v276
    %278 = vmatprep.subr.mxu0 0.0
    %v279 = vand.u32 %v59, 4294901760
    %v280 = vsub.f32 %v59, %v279
    %281 = vmatpush1.msra.mxu0 %v280
    %282 = vmatprep.subr.mxu0 0.0
    %v283 = vand.u32 %v58, 4294901760
    %v284 = vsub.f32 %v58, %v283
    %285 = vmatpush1.msra.mxu0 %v284
    %286 = vmatprep.subr.mxu0 0.0
    %v287 = vand.u32 %v57, 4294901760
    %v288 = vsub.f32 %v57, %v287
    %289 = vmatpush1.msra.mxu0 %v288
    %290 = vmatprep.subr.mxu0 0.0
    %291 = vmatpush2.msra.mxu0 0.0
    %292 = vmatprep.subr.mxu0 0.0
    %293 = vmatpush2.msra.mxu0 0.0
    %294 = vmatprep.subr.mxu0 0.0
    %295 = vmatpush2.msra.mxu0 0.0
    %296 = vmatprep.subr.mxu0 0.0
    %297 = vmatpush2.msra.mxu0 0.0
    %298 = vmatprep.subr.mxu0 0.0
    %299 = vmatpush2.msra.mxu0 0.0
    %300 = vmatprep.subr.mxu0 0.0
    %301 = vmatpush2.msra.mxu0 0.0
    %302 = vmatprep.subr.mxu0 0.0
    %303 = vmatpush2.msra.mxu0 0.0
    %304 = vmatprep.subr.mxu0 0.0
    %305 = vmatpush2.msra.mxu0 0.0
    %306 = vmatprep.subr.mxu0 0.0
    %307 = vmatpush2.msra.mxu0 0.0
    %308 = vmatprep.subr.mxu0 0.0
    %309 = vmatpush2.msra.mxu0 0.0
    %310 = vmatprep.subr.mxu0 0.0
    %311 = vmatpush2.msra.mxu0 0.0
    %312 = vmatprep.subr.mxu0 0.0
    %313 = vmatpush2.msra.mxu0 0.0
    %314 = vmatprep.subr.mxu0 0.0
    %315 = vmatpush2.msra.mxu0 0.0
    %316 = vmatprep.subr.mxu0 0.0
    %317 = vmatpush2.msra.mxu0 0.0
    %318 = vmatprep.subr.mxu0 0.0
    %319 = vmatpush2.msra.mxu0 0.0
    %320 = vmatprep.subr.mxu0 0.0
    %321 = vmatpush2.msra.mxu0 0.0
    %322 = vmatprep.mubr.f32.mxu0 0.0
    %v323 = vand.u32 %v78, 4294901760
    %v324 = vsub.f32 %v78, %v323
    %325 = vmatmul.mubr.f32.gmra.mxu0 %v324
    %v326 = vpop.f32.mrf.mxu0
    %v327 = vadd.f32 %v247, %v326
    %v328 = vpop.f32.mrf.mxu0
    %329 = vdwg.mxu0
    %330 = vmatprep.subr.mxu0 0.0
    %331 = vmatpush1.msra.mxu0 0.0
    %332 = vmatprep.subr.mxu0 0.0
    %333 = vmatpush1.msra.mxu0 0.0
    %334 = vmatprep.subr.mxu0 0.0
    %335 = vmatpush1.msra.mxu0 0.0
    %336 = vmatprep.subr.mxu0 0.0
    %337 = vmatpush1.msra.mxu0 0.0
    %338 = vmatprep.subr.mxu0 0.0
    %339 = vmatpush1.msra.mxu0 0.0
    %340 = vmatprep.subr.mxu0 0.0
    %341 = vmatpush1.msra.mxu0 0.0
    %342 = vmatprep.subr.mxu0 0.0
    %343 = vmatpush1.msra.mxu0 0.0
    %344 = vmatprep.subr.mxu0 0.0
    %345 = vmatpush1.msra.mxu0 0.0
    %346 = vmatprep.subr.mxu0 0.0
    %347 = vmatpush1.msra.mxu0 0.0
    %348 = vmatprep.subr.mxu0 0.0
    %349 = vmatpush1.msra.mxu0 0.0
    %350 = vmatprep.subr.mxu0 0.0
    %351 = vmatpush1.msra.mxu0 0.0
    %352 = vmatprep.subr.mxu0 0.0
    %353 = vmatpush1.msra.mxu0 0.0
    %354 = vmatprep.subr.mxu0 0.0
    %v355 = vand.u32 %v60, 4294901760
    %356 = vmatpush1.msra.mxu0 %v355
    %357 = vmatprep.subr.mxu0 0.0
    %v358 = vand.u32 %v59, 4294901760
    %359 = vmatpush1.msra.mxu0 %v358
    %360 = vmatprep.subr.mxu0 0.0
    %v361 = vand.u32 %v58, 4294901760
    %362 = vmatpush1.msra.mxu0 %v361
    %363 = vmatprep.subr.mxu0 0.0
    %v364 = vand.u32 %v57, 4294901760
    %365 = vmatpush1.msra.mxu0 %v364
    %366 = vmatprep.subr.mxu0 0.0
    %367 = vmatpush2.msra.mxu0 0.0
    %368 = vmatprep.subr.mxu0 0.0
    %369 = vmatpush2.msra.mxu0 0.0
    %370 = vmatprep.subr.mxu0 0.0
    %371 = vmatpush2.msra.mxu0 0.0
    %372 = vmatprep.subr.mxu0 0.0
    %373 = vmatpush2.msra.mxu0 0.0
    %374 = vmatprep.subr.mxu0 0.0
    %375 = vmatpush2.msra.mxu0 0.0
    %376 = vmatprep.subr.mxu0 0.0
    %377 = vmatpush2.msra.mxu0 0.0
    %378 = vmatprep.subr.mxu0 0.0
    %379 = vmatpush2.msra.mxu0 0.0
    %380 = vmatprep.subr.mxu0 0.0
    %381 = vmatpush2.msra.mxu0 0.0
    %382 = vmatprep.subr.mxu0 0.0
    %383 = vmatpush2.msra.mxu0 0.0
    %384 = vmatprep.subr.mxu0 0.0
    %385 = vmatpush2.msra.mxu0 0.0
    %386 = vmatprep.subr.mxu0 0.0
    %387 = vmatpush2.msra.mxu0 0.0
    %388 = vmatprep.subr.mxu0 0.0
    %389 = vmatpush2.msra.mxu0 0.0
    %390 = vmatprep.subr.mxu0 0.0
    %391 = vmatpush2.msra.mxu0 0.0
    %392 = vmatprep.subr.mxu0 0.0
    %393 = vmatpush2.msra.mxu0 0.0
    %394 = vmatprep.subr.mxu0 0.0
    %395 = vmatpush2.msra.mxu0 0.0
    %396 = vmatprep.subr.mxu0 0.0
    %397 = vmatpush2.msra.mxu0 0.0
    %398 = vmatprep.mubr.f32.mxu0 0.0
    %v399 = vand.u32 %v78, 4294901760
    %v400 = vsub.f32 %v78, %v399
    %v401 = vand.u32 %v400, 4294901760
    %402 = vmatmul.mubr.f32.gmra.mxu0 %v401
    %v403 = vpop.f32.mrf.mxu0
    %v404 = vadd.f32 %v327, %v403
    %v405 = vpop.f32.mrf.mxu0
    %406 = vdwg.mxu0
    %407 = vmatprep.subr.mxu0 0.0
    %408 = vmatpush1.msra.mxu0 0.0
    %409 = vmatprep.subr.mxu0 0.0
    %410 = vmatpush1.msra.mxu0 0.0
    %411 = vmatprep.subr.mxu0 0.0
    %412 = vmatpush1.msra.mxu0 0.0
    %413 = vmatprep.subr.mxu0 0.0
    %414 = vmatpush1.msra.mxu0 0.0
    %415 = vmatprep.subr.mxu0 0.0
    %416 = vmatpush1.msra.mxu0 0.0
    %417 = vmatprep.subr.mxu0 0.0
    %418 = vmatpush1.msra.mxu0 0.0
    %419 = vmatprep.subr.mxu0 0.0
    %420 = vmatpush1.msra.mxu0 0.0
    %421 = vmatprep.subr.mxu0 0.0
    %422 = vmatpush1.msra.mxu0 0.0
    %423 = vmatprep.subr.mxu0 0.0
    %424 = vmatpush1.msra.mxu0 0.0
    %425 = vmatprep.subr.mxu0 0.0
    %426 = vmatpush1.msra.mxu0 0.0
    %427 = vmatprep.subr.mxu0 0.0
    %428 = vmatpush1.msra.mxu0 0.0
    %429 = vmatprep.subr.mxu0 0.0
    %430 = vmatpush1.msra.mxu0 0.0
    %431 = vmatprep.subr.mxu0 0.0
    %v432 = vand.u32 %v60, 4294901760
    %v433 = vsub.f32 %v60, %v432
    %v434 = vand.u32 %v433, 4294901760
    %435 = vmatpush1.msra.mxu0 %v434
    %436 = vmatprep.subr.mxu0 0.0
    %v437 = vand.u32 %v59, 4294901760
    %v438 = vsub.f32 %v59, %v437
    %v439 = vand.u32 %v438, 4294901760
    %440 = vmatpush1.msra.mxu0 %v439
    %441 = vmatprep.subr.mxu0 0.0
    %v442 = vand.u32 %v58, 4294901760
    %v443 = vsub.f32 %v58, %v442
    %v444 = vand.u32 %v443, 4294901760
    %445 = vmatpush1.msra.mxu0 %v444
    %446 = vmatprep.subr.mxu0 0.0
    %v447 = vand.u32 %v57, 4294901760
    %v448 = vsub.f32 %v57, %v447
    %v449 = vand.u32 %v448, 4294901760
    %450 = vmatpush1.msra.mxu0 %v449
    %451 = vmatprep.subr.mxu0 0.0
    %452 = vmatpush2.msra.mxu0 0.0
    %453 = vmatprep.subr.mxu0 0.0
    %454 = vmatpush2.msra.mxu0 0.0
    %455 = vmatprep.subr.mxu0 0.0
    %456 = vmatpush2.msra.mxu0 0.0
    %457 = vmatprep.subr.mxu0 0.0
    %458 = vmatpush2.msra.mxu0 0.0
    %459 = vmatprep.subr.mxu0 0.0
    %460 = vmatpush2.msra.mxu0 0.0
    %461 = vmatprep.subr.mxu0 0.0
    %462 = vmatpush2.msra.mxu0 0.0
    %463 = vmatprep.subr.mxu0 0.0
    %464 = vmatpush2.msra.mxu0 0.0
    %465 = vmatprep.subr.mxu0 0.0
    %466 = vmatpush2.msra.mxu0 0.0
    %467 = vmatprep.subr.mxu0 0.0
    %468 = vmatpush2.msra.mxu0 0.0
    %469 = vmatprep.subr.mxu0 0.0
    %470 = vmatpush2.msra.mxu0 0.0
    %471 = vmatprep.subr.mxu0 0.0
    %472 = vmatpush2.msra.mxu0 0.0
    %473 = vmatprep.subr.mxu0 0.0
    %474 = vmatpush2.msra.mxu0 0.0
    %475 = vmatprep.subr.mxu0 0.0
    %476 = vmatpush2.msra.mxu0 0.0
    %477 = vmatprep.subr.mxu0 0.0
    %478 = vmatpush2.msra.mxu0 0.0
    %479 = vmatprep.subr.mxu0 0.0
    %480 = vmatpush2.msra.mxu0 0.0
    %481 = vmatprep.subr.mxu0 0.0
    %482 = vmatpush2.msra.mxu0 0.0
    %483 = vmatprep.mubr.f32.mxu0 0.0
    %v484 = vand.u32 %v78, 4294901760
    %485 = vmatmul.mubr.f32.gmra.mxu0 %v484
    %v486 = vpop.f32.mrf.mxu0
    %v487 = vadd.f32 %v404, %v486
    %v488 = vpop.f32.mrf.mxu0
    %489 = vdwg.mxu0
    %490 = vmatprep.subr.mxu0 0.0
    %491 = vmatpush1.msra.mxu0 0.0
    %492 = vmatprep.subr.mxu0 0.0
    %493 = vmatpush1.msra.mxu0 0.0
    %494 = vmatprep.subr.mxu0 0.0
    %495 = vmatpush1.msra.mxu0 0.0
    %496 = vmatprep.subr.mxu0 0.0
    %497 = vmatpush1.msra.mxu0 0.0
    %498 = vmatprep.subr.mxu0 0.0
    %499 = vmatpush1.msra.mxu0 0.0
    %500 = vmatprep.subr.mxu0 0.0
    %501 = vmatpush1.msra.mxu0 0.0
    %502 = vmatprep.subr.mxu0 0.0
    %503 = vmatpush1.msra.mxu0 0.0
    %504 = vmatprep.subr.mxu0 0.0
    %505 = vmatpush1.msra.mxu0 0.0
    %506 = vmatprep.subr.mxu0 0.0
    %507 = vmatpush1.msra.mxu0 0.0
    %508 = vmatprep.subr.mxu0 0.0
    %509 = vmatpush1.msra.mxu0 0.0
    %510 = vmatprep.subr.mxu0 0.0
    %511 = vmatpush1.msra.mxu0 0.0
    %512 = vmatprep.subr.mxu0 0.0
    %513 = vmatpush1.msra.mxu0 0.0
    %514 = vmatprep.subr.mxu0 0.0
    %v515 = vand.u32 %v60, 4294901760
    %516 = vmatpush1.msra.mxu0 %v515
    %517 = vmatprep.subr.mxu0 0.0
    %v518 = vand.u32 %v59, 4294901760
    %519 = vmatpush1.msra.mxu0 %v518
    %520 = vmatprep.subr.mxu0 0.0
    %v521 = vand.u32 %v58, 4294901760
    %522 = vmatpush1.msra.mxu0 %v521
    %523 = vmatprep.subr.mxu0 0.0
    %v524 = vand.u32 %v57, 4294901760
    %525 = vmatpush1.msra.mxu0 %v524
    %526 = vmatprep.subr.mxu0 0.0
    %527 = vmatpush2.msra.mxu0 0.0
    %528 = vmatprep.subr.mxu0 0.0
    %529 = vmatpush2.msra.mxu0 0.0
    %530 = vmatprep.subr.mxu0 0.0
    %531 = vmatpush2.msra.mxu0 0.0
    %532 = vmatprep.subr.mxu0 0.0
    %533 = vmatpush2.msra.mxu0 0.0
    %534 = vmatprep.subr.mxu0 0.0
    %535 = vmatpush2.msra.mxu0 0.0
    %536 = vmatprep.subr.mxu0 0.0
    %537 = vmatpush2.msra.mxu0 0.0
    %538 = vmatprep.subr.mxu0 0.0
    %539 = vmatpush2.msra.mxu0 0.0
    %540 = vmatprep.subr.mxu0 0.0
    %541 = vmatpush2.msra.mxu0 0.0
    %542 = vmatprep.subr.mxu0 0.0
    %543 = vmatpush2.msra.mxu0 0.0
    %544 = vmatprep.subr.mxu0 0.0
    %545 = vmatpush2.msra.mxu0 0.0
    %546 = vmatprep.subr.mxu0 0.0
    %547 = vmatpush2.msra.mxu0 0.0
    %548 = vmatprep.subr.mxu0 0.0
    %549 = vmatpush2.msra.mxu0 0.0
    %550 = vmatprep.subr.mxu0 0.0
    %551 = vmatpush2.msra.mxu0 0.0
    %552 = vmatprep.subr.mxu0 0.0
    %553 = vmatpush2.msra.mxu0 0.0
    %554 = vmatprep.subr.mxu0 0.0
    %555 = vmatpush2.msra.mxu0 0.0
    %556 = vmatprep.subr.mxu0 0.0
    %557 = vmatpush2.msra.mxu0 0.0
    %558 = vmatprep.mubr.f32.mxu0 0.0
    %v559 = vand.u32 %v78, 4294901760
    %560 = vmatmul.mubr.f32.gmra.mxu0 %v559
    %v561 = vpop.f32.mrf.mxu0
    %v562 = vadd.f32 %v487, %v561
    %v563 = vpop.f32.mrf.mxu0
    %564 = vdwg.mxu0
    %v565 = vsel %vm76, %v562, 0.0
    %566 = vadd.xlane.f32.xlu0 %v565
    %v567 = vpop.xlane.xlu0 %566
    %v568 = vrcp.pop 32.0
    %v569 = vmul.f32 %v567, %v568
    %v570 = vsub.f32 %v562, %v569
    %v571 = vmul.f32 %v570, %v570
    %v572 = vsel %vm76, %v571, 0.0
    %573 = vadd.xlane.f32.xlu0 %v572
    %v574 = vpop.xlane.xlu0 %573
    %v575 = vmul.f32 %v574, %v568
    %v576 = vadd.f32 %v575, 1e-05
    %v577 = vrsqrt.pop %v576
    %v578 = vmul.f32 %v570, %v577
    %v579 = vlaneseq
    %v580 = vshrl.u32 %v579, 7
    %v581 = vsub.s32 1, %v580
    %v582 = vrot.slane %v71, %v581
    %v584 = vsel %vm76, %v578, 0
    %586 = vmatprep.subr.mxu0 0.0
    %587 = vmatpush1.msra.mxu0 0.0
    %588 = vmatprep.subr.mxu0 0.0
    %589 = vmatpush1.msra.mxu0 0.0
    %590 = vmatprep.subr.mxu0 0.0
    %591 = vmatpush1.msra.mxu0 0.0
    %592 = vmatprep.subr.mxu0 0.0
    %593 = vmatpush1.msra.mxu0 0.0
    %594 = vmatprep.subr.mxu0 0.0
    %595 = vmatpush1.msra.mxu0 0.0
    %596 = vmatprep.subr.mxu0 0.0
    %597 = vmatpush1.msra.mxu0 0.0
    %598 = vmatprep.subr.mxu0 0.0
    %599 = vmatpush1.msra.mxu0 0.0
    %600 = vmatprep.subr.mxu0 0.0
    %601 = vmatpush1.msra.mxu0 0.0
    %602 = vmatprep.subr.mxu0 0.0
    %603 = vmatpush1.msra.mxu0 0.0
    %604 = vmatprep.subr.mxu0 0.0
    %605 = vmatpush1.msra.mxu0 0.0
    %606 = vmatprep.subr.mxu0 0.0
    %607 = vmatpush1.msra.mxu0 0.0
    %608 = vmatprep.subr.mxu0 0.0
    %609 = vmatpush1.msra.mxu0 0.0
    %610 = vmatprep.subr.mxu0 0.0
    %v611 = vand.u32 %v65, 4294901760
    %612 = vmatpush1.msra.mxu0 %v611
    %613 = vmatprep.subr.mxu0 0.0
    %v614 = vand.u32 %v64, 4294901760
    %615 = vmatpush1.msra.mxu0 %v614
    %616 = vmatprep.subr.mxu0 0.0
    %v617 = vand.u32 %v63, 4294901760
    %618 = vmatpush1.msra.mxu0 %v617
    %619 = vmatprep.subr.mxu0 0.0
    %v620 = vand.u32 %v62, 4294901760
    %621 = vmatpush1.msra.mxu0 %v620
    %622 = vmatprep.subr.mxu0 0.0
    %623 = vmatpush2.msra.mxu0 0.0
    %624 = vmatprep.subr.mxu0 0.0
    %625 = vmatpush2.msra.mxu0 0.0
    %626 = vmatprep.subr.mxu0 0.0
    %627 = vmatpush2.msra.mxu0 0.0
    %628 = vmatprep.subr.mxu0 0.0
    %629 = vmatpush2.msra.mxu0 0.0
    %630 = vmatprep.subr.mxu0 0.0
    %631 = vmatpush2.msra.mxu0 0.0
    %632 = vmatprep.subr.mxu0 0.0
    %633 = vmatpush2.msra.mxu0 0.0
    %634 = vmatprep.subr.mxu0 0.0
    %635 = vmatpush2.msra.mxu0 0.0
    %636 = vmatprep.subr.mxu0 0.0
    %637 = vmatpush2.msra.mxu0 0.0
    %638 = vmatprep.subr.mxu0 0.0
    %639 = vmatpush2.msra.mxu0 0.0
    %640 = vmatprep.subr.mxu0 0.0
    %641 = vmatpush2.msra.mxu0 0.0
    %642 = vmatprep.subr.mxu0 0.0
    %643 = vmatpush2.msra.mxu0 0.0
    %644 = vmatprep.subr.mxu0 0.0
    %645 = vmatpush2.msra.mxu0 0.0
    %646 = vmatprep.subr.mxu0 0.0
    %647 = vmatpush2.msra.mxu0 0.0
    %648 = vmatprep.subr.mxu0 0.0
    %649 = vmatpush2.msra.mxu0 0.0
    %650 = vmatprep.subr.mxu0 0.0
    %651 = vmatpush2.msra.mxu0 0.0
    %652 = vmatprep.subr.mxu0 0.0
    %653 = vmatpush2.msra.mxu0 0.0
    %654 = vmatprep.mubr.f32.mxu0 0.0
    %v655 = vand.u32 %v584, 4294901760
    %v656 = vsub.f32 %v584, %v655
    %v657 = vand.u32 %v656, 4294901760
    %v658 = vsub.f32 %v656, %v657
    %v659 = vand.u32 %v658, 4294901760
    %660 = vmatmul.mubr.f32.gmra.mxu0 %v659
    %v661 = vpop.f32.mrf.mxu0
    %v662 = vadd.f32 %v582, %v661
    %v663 = vpop.f32.mrf.mxu0
    %664 = vdwg.mxu0
    %665 = vmatprep.subr.mxu0 0.0
    %666 = vmatpush1.msra.mxu0 0.0
    %667 = vmatprep.subr.mxu0 0.0
    %668 = vmatpush1.msra.mxu0 0.0
    %669 = vmatprep.subr.mxu0 0.0
    %670 = vmatpush1.msra.mxu0 0.0
    %671 = vmatprep.subr.mxu0 0.0
    %672 = vmatpush1.msra.mxu0 0.0
    %673 = vmatprep.subr.mxu0 0.0
    %674 = vmatpush1.msra.mxu0 0.0
    %675 = vmatprep.subr.mxu0 0.0
    %676 = vmatpush1.msra.mxu0 0.0
    %677 = vmatprep.subr.mxu0 0.0
    %678 = vmatpush1.msra.mxu0 0.0
    %679 = vmatprep.subr.mxu0 0.0
    %680 = vmatpush1.msra.mxu0 0.0
    %681 = vmatprep.subr.mxu0 0.0
    %682 = vmatpush1.msra.mxu0 0.0
    %683 = vmatprep.subr.mxu0 0.0
    %684 = vmatpush1.msra.mxu0 0.0
    %685 = vmatprep.subr.mxu0 0.0
    %686 = vmatpush1.msra.mxu0 0.0
    %687 = vmatprep.subr.mxu0 0.0
    %688 = vmatpush1.msra.mxu0 0.0
    %689 = vmatprep.subr.mxu0 0.0
    %v690 = vand.u32 %v65, 4294901760
    %v691 = vsub.f32 %v65, %v690
    %v692 = vand.u32 %v691, 4294901760
    %v693 = vsub.f32 %v691, %v692
    %v694 = vand.u32 %v693, 4294901760
    %695 = vmatpush1.msra.mxu0 %v694
    %696 = vmatprep.subr.mxu0 0.0
    %v697 = vand.u32 %v64, 4294901760
    %v698 = vsub.f32 %v64, %v697
    %v699 = vand.u32 %v698, 4294901760
    %v700 = vsub.f32 %v698, %v699
    %v701 = vand.u32 %v700, 4294901760
    %702 = vmatpush1.msra.mxu0 %v701
    %703 = vmatprep.subr.mxu0 0.0
    %v704 = vand.u32 %v63, 4294901760
    %v705 = vsub.f32 %v63, %v704
    %v706 = vand.u32 %v705, 4294901760
    %v707 = vsub.f32 %v705, %v706
    %v708 = vand.u32 %v707, 4294901760
    %709 = vmatpush1.msra.mxu0 %v708
    %710 = vmatprep.subr.mxu0 0.0
    %v711 = vand.u32 %v62, 4294901760
    %v712 = vsub.f32 %v62, %v711
    %v713 = vand.u32 %v712, 4294901760
    %v714 = vsub.f32 %v712, %v713
    %v715 = vand.u32 %v714, 4294901760
    %716 = vmatpush1.msra.mxu0 %v715
    %717 = vmatprep.subr.mxu0 0.0
    %718 = vmatpush2.msra.mxu0 0.0
    %719 = vmatprep.subr.mxu0 0.0
    %720 = vmatpush2.msra.mxu0 0.0
    %721 = vmatprep.subr.mxu0 0.0
    %722 = vmatpush2.msra.mxu0 0.0
    %723 = vmatprep.subr.mxu0 0.0
    %724 = vmatpush2.msra.mxu0 0.0
    %725 = vmatprep.subr.mxu0 0.0
    %726 = vmatpush2.msra.mxu0 0.0
    %727 = vmatprep.subr.mxu0 0.0
    %728 = vmatpush2.msra.mxu0 0.0
    %729 = vmatprep.subr.mxu0 0.0
    %730 = vmatpush2.msra.mxu0 0.0
    %731 = vmatprep.subr.mxu0 0.0
    %732 = vmatpush2.msra.mxu0 0.0
    %733 = vmatprep.subr.mxu0 0.0
    %734 = vmatpush2.msra.mxu0 0.0
    %735 = vmatprep.subr.mxu0 0.0
    %736 = vmatpush2.msra.mxu0 0.0
    %737 = vmatprep.subr.mxu0 0.0
    %738 = vmatpush2.msra.mxu0 0.0
    %739 = vmatprep.subr.mxu0 0.0
    %740 = vmatpush2.msra.mxu0 0.0
    %741 = vmatprep.subr.mxu0 0.0
    %742 = vmatpush2.msra.mxu0 0.0
    %743 = vmatprep.subr.mxu0 0.0
    %744 = vmatpush2.msra.mxu0 0.0
    %745 = vmatprep.subr.mxu0 0.0
    %746 = vmatpush2.msra.mxu0 0.0
    %747 = vmatprep.subr.mxu0 0.0
    %748 = vmatpush2.msra.mxu0 0.0
    %749 = vmatprep.mubr.f32.mxu0 0.0
    %v750 = vand.u32 %v584, 4294901760
    %751 = vmatmul.mubr.f32.gmra.mxu0 %v750
    %v752 = vpop.f32.mrf.mxu0
    %v753 = vadd.f32 %v662, %v752
    %v754 = vpop.f32.mrf.mxu0
    %755 = vdwg.mxu0
    %756 = vmatprep.subr.mxu0 0.0
    %757 = vmatpush1.msra.mxu0 0.0
    %758 = vmatprep.subr.mxu0 0.0
    %759 = vmatpush1.msra.mxu0 0.0
    %760 = vmatprep.subr.mxu0 0.0
    %761 = vmatpush1.msra.mxu0 0.0
    %762 = vmatprep.subr.mxu0 0.0
    %763 = vmatpush1.msra.mxu0 0.0
    %764 = vmatprep.subr.mxu0 0.0
    %765 = vmatpush1.msra.mxu0 0.0
    %766 = vmatprep.subr.mxu0 0.0
    %767 = vmatpush1.msra.mxu0 0.0
    %768 = vmatprep.subr.mxu0 0.0
    %769 = vmatpush1.msra.mxu0 0.0
    %770 = vmatprep.subr.mxu0 0.0
    %771 = vmatpush1.msra.mxu0 0.0
    %772 = vmatprep.subr.mxu0 0.0
    %773 = vmatpush1.msra.mxu0 0.0
    %774 = vmatprep.subr.mxu0 0.0
    %775 = vmatpush1.msra.mxu0 0.0
    %776 = vmatprep.subr.mxu0 0.0
    %777 = vmatpush1.msra.mxu0 0.0
    %778 = vmatprep.subr.mxu0 0.0
    %779 = vmatpush1.msra.mxu0 0.0
    %780 = vmatprep.subr.mxu0 0.0
    %v781 = vand.u32 %v65, 4294901760
    %v782 = vsub.f32 %v65, %v781
    %783 = vmatpush1.msra.mxu0 %v782
    %784 = vmatprep.subr.mxu0 0.0
    %v785 = vand.u32 %v64, 4294901760
    %v786 = vsub.f32 %v64, %v785
    %787 = vmatpush1.msra.mxu0 %v786
    %788 = vmatprep.subr.mxu0 0.0
    %v789 = vand.u32 %v63, 4294901760
    %v790 = vsub.f32 %v63, %v789
    %791 = vmatpush1.msra.mxu0 %v790
    %792 = vmatprep.subr.mxu0 0.0
    %v793 = vand.u32 %v62, 4294901760
    %v794 = vsub.f32 %v62, %v793
    %795 = vmatpush1.msra.mxu0 %v794
    %796 = vmatprep.subr.mxu0 0.0
    %797 = vmatpush2.msra.mxu0 0.0
    %798 = vmatprep.subr.mxu0 0.0
    %799 = vmatpush2.msra.mxu0 0.0
    %800 = vmatprep.subr.mxu0 0.0
    %801 = vmatpush2.msra.mxu0 0.0
    %802 = vmatprep.subr.mxu0 0.0
    %803 = vmatpush2.msra.mxu0 0.0
    %804 = vmatprep.subr.mxu0 0.0
    %805 = vmatpush2.msra.mxu0 0.0
    %806 = vmatprep.subr.mxu0 0.0
    %807 = vmatpush2.msra.mxu0 0.0
    %808 = vmatprep.subr.mxu0 0.0
    %809 = vmatpush2.msra.mxu0 0.0
    %810 = vmatprep.subr.mxu0 0.0
    %811 = vmatpush2.msra.mxu0 0.0
    %812 = vmatprep.subr.mxu0 0.0
    %813 = vmatpush2.msra.mxu0 0.0
    %814 = vmatprep.subr.mxu0 0.0
    %815 = vmatpush2.msra.mxu0 0.0
    %816 = vmatprep.subr.mxu0 0.0
    %817 = vmatpush2.msra.mxu0 0.0
    %818 = vmatprep.subr.mxu0 0.0
    %819 = vmatpush2.msra.mxu0 0.0
    %820 = vmatprep.subr.mxu0 0.0
    %821 = vmatpush2.msra.mxu0 0.0
    %822 = vmatprep.subr.mxu0 0.0
    %823 = vmatpush2.msra.mxu0 0.0
    %824 = vmatprep.subr.mxu0 0.0
    %825 = vmatpush2.msra.mxu0 0.0
    %826 = vmatprep.subr.mxu0 0.0
    %827 = vmatpush2.msra.mxu0 0.0
    %828 = vmatprep.mubr.f32.mxu0 0.0
    %v829 = vand.u32 %v584, 4294901760
    %v830 = vsub.f32 %v584, %v829
    %831 = vmatmul.mubr.f32.gmra.mxu0 %v830
    %v832 = vpop.f32.mrf.mxu0
    %v833 = vadd.f32 %v753, %v832
    %v834 = vpop.f32.mrf.mxu0
    %835 = vdwg.mxu0
    %836 = vmatprep.subr.mxu0 0.0
    %837 = vmatpush1.msra.mxu0 0.0
    %838 = vmatprep.subr.mxu0 0.0
    %839 = vmatpush1.msra.mxu0 0.0
    %840 = vmatprep.subr.mxu0 0.0
    %841 = vmatpush1.msra.mxu0 0.0
    %842 = vmatprep.subr.mxu0 0.0
    %843 = vmatpush1.msra.mxu0 0.0
    %844 = vmatprep.subr.mxu0 0.0
    %845 = vmatpush1.msra.mxu0 0.0
    %846 = vmatprep.subr.mxu0 0.0
    %847 = vmatpush1.msra.mxu0 0.0
    %848 = vmatprep.subr.mxu0 0.0
    %849 = vmatpush1.msra.mxu0 0.0
    %850 = vmatprep.subr.mxu0 0.0
    %851 = vmatpush1.msra.mxu0 0.0
    %852 = vmatprep.subr.mxu0 0.0
    %853 = vmatpush1.msra.mxu0 0.0
    %854 = vmatprep.subr.mxu0 0.0
    %855 = vmatpush1.msra.mxu0 0.0
    %856 = vmatprep.subr.mxu0 0.0
    %857 = vmatpush1.msra.mxu0 0.0
    %858 = vmatprep.subr.mxu0 0.0
    %859 = vmatpush1.msra.mxu0 0.0
    %860 = vmatprep.subr.mxu0 0.0
    %v861 = vand.u32 %v65, 4294901760
    %862 = vmatpush1.msra.mxu0 %v861
    %863 = vmatprep.subr.mxu0 0.0
    %v864 = vand.u32 %v64, 4294901760
    %865 = vmatpush1.msra.mxu0 %v864
    %866 = vmatprep.subr.mxu0 0.0
    %v867 = vand.u32 %v63, 4294901760
    %868 = vmatpush1.msra.mxu0 %v867
    %869 = vmatprep.subr.mxu0 0.0
    %v870 = vand.u32 %v62, 4294901760
    %871 = vmatpush1.msra.mxu0 %v870
    %872 = vmatprep.subr.mxu0 0.0
    %873 = vmatpush2.msra.mxu0 0.0
    %874 = vmatprep.subr.mxu0 0.0
    %875 = vmatpush2.msra.mxu0 0.0
    %876 = vmatprep.subr.mxu0 0.0
    %877 = vmatpush2.msra.mxu0 0.0
    %878 = vmatprep.subr.mxu0 0.0
    %879 = vmatpush2.msra.mxu0 0.0
    %880 = vmatprep.subr.mxu0 0.0
    %881 = vmatpush2.msra.mxu0 0.0
    %882 = vmatprep.subr.mxu0 0.0
    %883 = vmatpush2.msra.mxu0 0.0
    %884 = vmatprep.subr.mxu0 0.0
    %885 = vmatpush2.msra.mxu0 0.0
    %886 = vmatprep.subr.mxu0 0.0
    %887 = vmatpush2.msra.mxu0 0.0
    %888 = vmatprep.subr.mxu0 0.0
    %889 = vmatpush2.msra.mxu0 0.0
    %890 = vmatprep.subr.mxu0 0.0
    %891 = vmatpush2.msra.mxu0 0.0
    %892 = vmatprep.subr.mxu0 0.0
    %893 = vmatpush2.msra.mxu0 0.0
    %894 = vmatprep.subr.mxu0 0.0
    %895 = vmatpush2.msra.mxu0 0.0
    %896 = vmatprep.subr.mxu0 0.0
    %897 = vmatpush2.msra.mxu0 0.0
    %898 = vmatprep.subr.mxu0 0.0
    %899 = vmatpush2.msra.mxu0 0.0
    %900 = vmatprep.subr.mxu0 0.0
    %901 = vmatpush2.msra.mxu0 0.0
    %902 = vmatprep.subr.mxu0 0.0
    %903 = vmatpush2.msra.mxu0 0.0
    %904 = vmatprep.mubr.f32.mxu0 0.0
    %v905 = vand.u32 %v584, 4294901760
    %v906 = vsub.f32 %v584, %v905
    %v907 = vand.u32 %v906, 4294901760
    %908 = vmatmul.mubr.f32.gmra.mxu0 %v907
    %v909 = vpop.f32.mrf.mxu0
    %v910 = vadd.f32 %v833, %v909
    %v911 = vpop.f32.mrf.mxu0
    %912 = vdwg.mxu0
    %913 = vmatprep.subr.mxu0 0.0
    %914 = vmatpush1.msra.mxu0 0.0
    %915 = vmatprep.subr.mxu0 0.0
    %916 = vmatpush1.msra.mxu0 0.0
    %917 = vmatprep.subr.mxu0 0.0
    %918 = vmatpush1.msra.mxu0 0.0
    %919 = vmatprep.subr.mxu0 0.0
    %920 = vmatpush1.msra.mxu0 0.0
    %921 = vmatprep.subr.mxu0 0.0
    %922 = vmatpush1.msra.mxu0 0.0
    %923 = vmatprep.subr.mxu0 0.0
    %924 = vmatpush1.msra.mxu0 0.0
    %925 = vmatprep.subr.mxu0 0.0
    %926 = vmatpush1.msra.mxu0 0.0
    %927 = vmatprep.subr.mxu0 0.0
    %928 = vmatpush1.msra.mxu0 0.0
    %929 = vmatprep.subr.mxu0 0.0
    %930 = vmatpush1.msra.mxu0 0.0
    %931 = vmatprep.subr.mxu0 0.0
    %932 = vmatpush1.msra.mxu0 0.0
    %933 = vmatprep.subr.mxu0 0.0
    %934 = vmatpush1.msra.mxu0 0.0
    %935 = vmatprep.subr.mxu0 0.0
    %936 = vmatpush1.msra.mxu0 0.0
    %937 = vmatprep.subr.mxu0 0.0
    %v938 = vand.u32 %v65, 4294901760
    %v939 = vsub.f32 %v65, %v938
    %v940 = vand.u32 %v939, 4294901760
    %941 = vmatpush1.msra.mxu0 %v940
    %942 = vmatprep.subr.mxu0 0.0
    %v943 = vand.u32 %v64, 4294901760
    %v944 = vsub.f32 %v64, %v943
    %v945 = vand.u32 %v944, 4294901760
    %946 = vmatpush1.msra.mxu0 %v945
    %947 = vmatprep.subr.mxu0 0.0
    %v948 = vand.u32 %v63, 4294901760
    %v949 = vsub.f32 %v63, %v948
    %v950 = vand.u32 %v949, 4294901760
    %951 = vmatpush1.msra.mxu0 %v950
    %952 = vmatprep.subr.mxu0 0.0
    %v953 = vand.u32 %v62, 4294901760
    %v954 = vsub.f32 %v62, %v953
    %v955 = vand.u32 %v954, 4294901760
    %956 = vmatpush1.msra.mxu0 %v955
    %957 = vmatprep.subr.mxu0 0.0
    %958 = vmatpush2.msra.mxu0 0.0
    %959 = vmatprep.subr.mxu0 0.0
    %960 = vmatpush2.msra.mxu0 0.0
    %961 = vmatprep.subr.mxu0 0.0
    %962 = vmatpush2.msra.mxu0 0.0
    %963 = vmatprep.subr.mxu0 0.0
    %964 = vmatpush2.msra.mxu0 0.0
    %965 = vmatprep.subr.mxu0 0.0
    %966 = vmatpush2.msra.mxu0 0.0
    %967 = vmatprep.subr.mxu0 0.0
    %968 = vmatpush2.msra.mxu0 0.0
    %969 = vmatprep.subr.mxu0 0.0
    %970 = vmatpush2.msra.mxu0 0.0
    %971 = vmatprep.subr.mxu0 0.0
    %972 = vmatpush2.msra.mxu0 0.0
    %973 = vmatprep.subr.mxu0 0.0
    %974 = vmatpush2.msra.mxu0 0.0
    %975 = vmatprep.subr.mxu0 0.0
    %976 = vmatpush2.msra.mxu0 0.0
    %977 = vmatprep.subr.mxu0 0.0
    %978 = vmatpush2.msra.mxu0 0.0
    %979 = vmatprep.subr.mxu0 0.0
    %980 = vmatpush2.msra.mxu0 0.0
    %981 = vmatprep.subr.mxu0 0.0
    %982 = vmatpush2.msra.mxu0 0.0
    %983 = vmatprep.subr.mxu0 0.0
    %984 = vmatpush2.msra.mxu0 0.0
    %985 = vmatprep.subr.mxu0 0.0
    %986 = vmatpush2.msra.mxu0 0.0
    %987 = vmatprep.subr.mxu0 0.0
    %988 = vmatpush2.msra.mxu0 0.0
    %989 = vmatprep.mubr.f32.mxu0 0.0
    %v990 = vand.u32 %v584, 4294901760
    %991 = vmatmul.mubr.f32.gmra.mxu0 %v990
    %v992 = vpop.f32.mrf.mxu0
    %v993 = vadd.f32 %v910, %v992
    %v994 = vpop.f32.mrf.mxu0
    %995 = vdwg.mxu0
    %996 = vmatprep.subr.mxu0 0.0
    %997 = vmatpush1.msra.mxu0 0.0
    %998 = vmatprep.subr.mxu0 0.0
    %999 = vmatpush1.msra.mxu0 0.0
    %1000 = vmatprep.subr.mxu0 0.0
    %1001 = vmatpush1.msra.mxu0 0.0
    %1002 = vmatprep.subr.mxu0 0.0
    %1003 = vmatpush1.msra.mxu0 0.0
    %1004 = vmatprep.subr.mxu0 0.0
    %1005 = vmatpush1.msra.mxu0 0.0
    %1006 = vmatprep.subr.mxu0 0.0
    %1007 = vmatpush1.msra.mxu0 0.0
    %1008 = vmatprep.subr.mxu0 0.0
    %1009 = vmatpush1.msra.mxu0 0.0
    %1010 = vmatprep.subr.mxu0 0.0
    %1011 = vmatpush1.msra.mxu0 0.0
    %1012 = vmatprep.subr.mxu0 0.0
    %1013 = vmatpush1.msra.mxu0 0.0
    %1014 = vmatprep.subr.mxu0 0.0
    %1015 = vmatpush1.msra.mxu0 0.0
    %1016 = vmatprep.subr.mxu0 0.0
    %1017 = vmatpush1.msra.mxu0 0.0
    %1018 = vmatprep.subr.mxu0 0.0
    %1019 = vmatpush1.msra.mxu0 0.0
    %1020 = vmatprep.subr.mxu0 0.0
    %v1021 = vand.u32 %v65, 4294901760
    %1022 = vmatpush1.msra.mxu0 %v1021
    %1023 = vmatprep.subr.mxu0 0.0
    %v1024 = vand.u32 %v64, 4294901760
    %1025 = vmatpush1.msra.mxu0 %v1024
    %1026 = vmatprep.subr.mxu0 0.0
    %v1027 = vand.u32 %v63, 4294901760
    %1028 = vmatpush1.msra.mxu0 %v1027
    %1029 = vmatprep.subr.mxu0 0.0
    %v1030 = vand.u32 %v62, 4294901760
    %1031 = vmatpush1.msra.mxu0 %v1030
    %1032 = vmatprep.subr.mxu0 0.0
    %1033 = vmatpush2.msra.mxu0 0.0
    %1034 = vmatprep.subr.mxu0 0.0
    %1035 = vmatpush2.msra.mxu0 0.0
    %1036 = vmatprep.subr.mxu0 0.0
    %1037 = vmatpush2.msra.mxu0 0.0
    %1038 = vmatprep.subr.mxu0 0.0
    %1039 = vmatpush2.msra.mxu0 0.0
    %1040 = vmatprep.subr.mxu0 0.0
    %1041 = vmatpush2.msra.mxu0 0.0
    %1042 = vmatprep.subr.mxu0 0.0
    %1043 = vmatpush2.msra.mxu0 0.0
    %1044 = vmatprep.subr.mxu0 0.0
    %1045 = vmatpush2.msra.mxu0 0.0
    %1046 = vmatprep.subr.mxu0 0.0
    %1047 = vmatpush2.msra.mxu0 0.0
    %1048 = vmatprep.subr.mxu0 0.0
    %1049 = vmatpush2.msra.mxu0 0.0
    %1050 = vmatprep.subr.mxu0 0.0
    %1051 = vmatpush2.msra.mxu0 0.0
    %1052 = vmatprep.subr.mxu0 0.0
    %1053 = vmatpush2.msra.mxu0 0.0
    %1054 = vmatprep.subr.mxu0 0.0
    %1055 = vmatpush2.msra.mxu0 0.0
    %1056 = vmatprep.subr.mxu0 0.0
    %1057 = vmatpush2.msra.mxu0 0.0
    %1058 = vmatprep.subr.mxu0 0.0
    %1059 = vmatpush2.msra.mxu0 0.0
    %1060 = vmatprep.subr.mxu0 0.0
    %1061 = vmatpush2.msra.mxu0 0.0
    %1062 = vmatprep.subr.mxu0 0.0
    %1063 = vmatpush2.msra.mxu0 0.0
    %1064 = vmatprep.mubr.f32.mxu0 0.0
    %v1065 = vand.u32 %v584, 4294901760
    %1066 = vmatmul.mubr.f32.gmra.mxu0 %v1065
    %v1067 = vpop.f32.mrf.mxu0
    %v1068 = vadd.f32 %v993, %v1067
    %v1069 = vpop.f32.mrf.mxu0
    %1070 = vdwg.mxu0
    %v1071 = vmax.f32 %v1068, 0.0
    %v1072 = vlaneseq
    %v1073 = vshrl.u32 %v1072, 7
    %v1074 = vsub.s32 2, %v1073
    %v1075 = vrot.slane %v71, %v1074
    %v1077 = vsel %vm76, %v1071, 0
    %1079 = vmatprep.subr.mxu0 0.0
    %1080 = vmatpush1.msra.mxu0 0.0
    %1081 = vmatprep.subr.mxu0 0.0
    %1082 = vmatpush1.msra.mxu0 0.0
    %1083 = vmatprep.subr.mxu0 0.0
    %1084 = vmatpush1.msra.mxu0 0.0
    %1085 = vmatprep.subr.mxu0 0.0
    %1086 = vmatpush1.msra.mxu0 0.0
    %1087 = vmatprep.subr.mxu0 0.0
    %1088 = vmatpush1.msra.mxu0 0.0
    %1089 = vmatprep.subr.mxu0 0.0
    %1090 = vmatpush1.msra.mxu0 0.0
    %1091 = vmatprep.subr.mxu0 0.0
    %1092 = vmatpush1.msra.mxu0 0.0
    %1093 = vmatprep.subr.mxu0 0.0
    %1094 = vmatpush1.msra.mxu0 0.0
    %1095 = vmatprep.subr.mxu0 0.0
    %1096 = vmatpush1.msra.mxu0 0.0
    %1097 = vmatprep.subr.mxu0 0.0
    %1098 = vmatpush1.msra.mxu0 0.0
    %1099 = vmatprep.subr.mxu0 0.0
    %1100 = vmatpush1.msra.mxu0 0.0
    %1101 = vmatprep.subr.mxu0 0.0
    %1102 = vmatpush1.msra.mxu0 0.0
    %1103 = vmatprep.subr.mxu0 0.0
    %v1104 = vand.u32 %v70, 4294901760
    %1105 = vmatpush1.msra.mxu0 %v1104
    %1106 = vmatprep.subr.mxu0 0.0
    %v1107 = vand.u32 %v69, 4294901760
    %1108 = vmatpush1.msra.mxu0 %v1107
    %1109 = vmatprep.subr.mxu0 0.0
    %v1110 = vand.u32 %v68, 4294901760
    %1111 = vmatpush1.msra.mxu0 %v1110
    %1112 = vmatprep.subr.mxu0 0.0
    %v1113 = vand.u32 %v67, 4294901760
    %1114 = vmatpush1.msra.mxu0 %v1113
    %1115 = vmatprep.subr.mxu0 0.0
    %1116 = vmatpush2.msra.mxu0 0.0
    %1117 = vmatprep.subr.mxu0 0.0
    %1118 = vmatpush2.msra.mxu0 0.0
    %1119 = vmatprep.subr.mxu0 0.0
    %1120 = vmatpush2.msra.mxu0 0.0
    %1121 = vmatprep.subr.mxu0 0.0
    %1122 = vmatpush2.msra.mxu0 0.0
    %1123 = vmatprep.subr.mxu0 0.0
    %1124 = vmatpush2.msra.mxu0 0.0
    %1125 = vmatprep.subr.mxu0 0.0
    %1126 = vmatpush2.msra.mxu0 0.0
    %1127 = vmatprep.subr.mxu0 0.0
    %1128 = vmatpush2.msra.mxu0 0.0
    %1129 = vmatprep.subr.mxu0 0.0
    %1130 = vmatpush2.msra.mxu0 0.0
    %1131 = vmatprep.subr.mxu0 0.0
    %1132 = vmatpush2.msra.mxu0 0.0
    %1133 = vmatprep.subr.mxu0 0.0
    %1134 = vmatpush2.msra.mxu0 0.0
    %1135 = vmatprep.subr.mxu0 0.0
    %1136 = vmatpush2.msra.mxu0 0.0
    %1137 = vmatprep.subr.mxu0 0.0
    %1138 = vmatpush2.msra.mxu0 0.0
    %1139 = vmatprep.subr.mxu0 0.0
    %1140 = vmatpush2.msra.mxu0 0.0
    %1141 = vmatprep.subr.mxu0 0.0
    %1142 = vmatpush2.msra.mxu0 0.0
    %1143 = vmatprep.subr.mxu0 0.0
    %1144 = vmatpush2.msra.mxu0 0.0
    %1145 = vmatprep.subr.mxu0 0.0
    %1146 = vmatpush2.msra.mxu0 0.0
    %1147 = vmatprep.mubr.f32.mxu0 0.0
    %v1148 = vand.u32 %v1077, 4294901760
    %v1149 = vsub.f32 %v1077, %v1148
    %v1150 = vand.u32 %v1149, 4294901760
    %v1151 = vsub.f32 %v1149, %v1150
    %v1152 = vand.u32 %v1151, 4294901760
    %1153 = vmatmul.mubr.f32.gmra.mxu0 %v1152
    %v1154 = vpop.f32.mrf.mxu0
    %v1155 = vadd.f32 %v1075, %v1154
    %v1156 = vpop.f32.mrf.mxu0
    %1157 = vdwg.mxu0
    %1158 = vmatprep.subr.mxu0 0.0
    %1159 = vmatpush1.msra.mxu0 0.0
    %1160 = vmatprep.subr.mxu0 0.0
    %1161 = vmatpush1.msra.mxu0 0.0
    %1162 = vmatprep.subr.mxu0 0.0
    %1163 = vmatpush1.msra.mxu0 0.0
    %1164 = vmatprep.subr.mxu0 0.0
    %1165 = vmatpush1.msra.mxu0 0.0
    %1166 = vmatprep.subr.mxu0 0.0
    %1167 = vmatpush1.msra.mxu0 0.0
    %1168 = vmatprep.subr.mxu0 0.0
    %1169 = vmatpush1.msra.mxu0 0.0
    %1170 = vmatprep.subr.mxu0 0.0
    %1171 = vmatpush1.msra.mxu0 0.0
    %1172 = vmatprep.subr.mxu0 0.0
    %1173 = vmatpush1.msra.mxu0 0.0
    %1174 = vmatprep.subr.mxu0 0.0
    %1175 = vmatpush1.msra.mxu0 0.0
    %1176 = vmatprep.subr.mxu0 0.0
    %1177 = vmatpush1.msra.mxu0 0.0
    %1178 = vmatprep.subr.mxu0 0.0
    %1179 = vmatpush1.msra.mxu0 0.0
    %1180 = vmatprep.subr.mxu0 0.0
    %1181 = vmatpush1.msra.mxu0 0.0
    %1182 = vmatprep.subr.mxu0 0.0
    %v1183 = vand.u32 %v70, 4294901760
    %v1184 = vsub.f32 %v70, %v1183
    %v1185 = vand.u32 %v1184, 4294901760
    %v1186 = vsub.f32 %v1184, %v1185
    %v1187 = vand.u32 %v1186, 4294901760
    %1188 = vmatpush1.msra.mxu0 %v1187
    %1189 = vmatprep.subr.mxu0 0.0
    %v1190 = vand.u32 %v69, 4294901760
    %v1191 = vsub.f32 %v69, %v1190
    %v1192 = vand.u32 %v1191, 4294901760
    %v1193 = vsub.f32 %v1191, %v1192
    %v1194 = vand.u32 %v1193, 4294901760
    %1195 = vmatpush1.msra.mxu0 %v1194
    %1196 = vmatprep.subr.mxu0 0.0
    %v1197 = vand.u32 %v68, 4294901760
    %v1198 = vsub.f32 %v68, %v1197
    %v1199 = vand.u32 %v1198, 4294901760
    %v1200 = vsub.f32 %v1198, %v1199
    %v1201 = vand.u32 %v1200, 4294901760
    %1202 = vmatpush1.msra.mxu0 %v1201
    %1203 = vmatprep.subr.mxu0 0.0
    %v1204 = vand.u32 %v67, 4294901760
    %v1205 = vsub.f32 %v67, %v1204
    %v1206 = vand.u32 %v1205, 4294901760
    %v1207 = vsub.f32 %v1205, %v1206
    %v1208 = vand.u32 %v1207, 4294901760
    %1209 = vmatpush1.msra.mxu0 %v1208
    %1210 = vmatprep.subr.mxu0 0.0
    %1211 = vmatpush2.msra.mxu0 0.0
    %1212 = vmatprep.subr.mxu0 0.0
    %1213 = vmatpush2.msra.mxu0 0.0
    %1214 = vmatprep.subr.mxu0 0.0
    %1215 = vmatpush2.msra.mxu0 0.0
    %1216 = vmatprep.subr.mxu0 0.0
    %1217 = vmatpush2.msra.mxu0 0.0
    %1218 = vmatprep.subr.mxu0 0.0
    %1219 = vmatpush2.msra.mxu0 0.0
    %1220 = vmatprep.subr.mxu0 0.0
    %1221 = vmatpush2.msra.mxu0 0.0
    %1222 = vmatprep.subr.mxu0 0.0
    %1223 = vmatpush2.msra.mxu0 0.0
    %1224 = vmatprep.subr.mxu0 0.0
    %1225 = vmatpush2.msra.mxu0 0.0
    %1226 = vmatprep.subr.mxu0 0.0
    %1227 = vmatpush2.msra.mxu0 0.0
    %1228 = vmatprep.subr.mxu0 0.0
    %1229 = vmatpush2.msra.mxu0 0.0
    %1230 = vmatprep.subr.mxu0 0.0
    %1231 = vmatpush2.msra.mxu0 0.0
    %1232 = vmatprep.subr.mxu0 0.0
    %1233 = vmatpush2.msra.mxu0 0.0
    %1234 = vmatprep.subr.mxu0 0.0
    %1235 = vmatpush2.msra.mxu0 0.0
    %1236 = vmatprep.subr.mxu0 0.0
    %1237 = vmatpush2.msra.mxu0 0.0
    %1238 = vmatprep.subr.mxu0 0.0
    %1239 = vmatpush2.msra.mxu0 0.0
    %1240 = vmatprep.subr.mxu0 0.0
    %1241 = vmatpush2.msra.mxu0 0.0
    %1242 = vmatprep.mubr.f32.mxu0 0.0
    %v1243 = vand.u32 %v1077, 4294901760
    %1244 = vmatmul.mubr.f32.gmra.mxu0 %v1243
    %v1245 = vpop.f32.mrf.mxu0
    %v1246 = vadd.f32 %v1155, %v1245
    %v1247 = vpop.f32.mrf.mxu0
    %1248 = vdwg.mxu0
    %1249 = vmatprep.subr.mxu0 0.0
    %1250 = vmatpush1.msra.mxu0 0.0
    %1251 = vmatprep.subr.mxu0 0.0
    %1252 = vmatpush1.msra.mxu0 0.0
    %1253 = vmatprep.subr.mxu0 0.0
    %1254 = vmatpush1.msra.mxu0 0.0
    %1255 = vmatprep.subr.mxu0 0.0
    %1256 = vmatpush1.msra.mxu0 0.0
    %1257 = vmatprep.subr.mxu0 0.0
    %1258 = vmatpush1.msra.mxu0 0.0
    %1259 = vmatprep.subr.mxu0 0.0
    %1260 = vmatpush1.msra.mxu0 0.0
    %1261 = vmatprep.subr.mxu0 0.0
    %1262 = vmatpush1.msra.mxu0 0.0
    %1263 = vmatprep.subr.mxu0 0.0
    %1264 = vmatpush1.msra.mxu0 0.0
    %1265 = vmatprep.subr.mxu0 0.0
    %1266 = vmatpush1.msra.mxu0 0.0
    %1267 = vmatprep.subr.mxu0 0.0
    %1268 = vmatpush1.msra.mxu0 0.0
    %1269 = vmatprep.subr.mxu0 0.0
    %1270 = vmatpush1.msra.mxu0 0.0
    %1271 = vmatprep.subr.mxu0 0.0
    %1272 = vmatpush1.msra.mxu0 0.0
    %1273 = vmatprep.subr.mxu0 0.0
    %v1274 = vand.u32 %v70, 4294901760
    %v1275 = vsub.f32 %v70, %v1274
    %1276 = vmatpush1.msra.mxu0 %v1275
    %1277 = vmatprep.subr.mxu0 0.0
    %v1278 = vand.u32 %v69, 4294901760
    %v1279 = vsub.f32 %v69, %v1278
    %1280 = vmatpush1.msra.mxu0 %v1279
    %1281 = vmatprep.subr.mxu0 0.0
    %v1282 = vand.u32 %v68, 4294901760
    %v1283 = vsub.f32 %v68, %v1282
    %1284 = vmatpush1.msra.mxu0 %v1283
    %1285 = vmatprep.subr.mxu0 0.0
    %v1286 = vand.u32 %v67, 4294901760
    %v1287 = vsub.f32 %v67, %v1286
    %1288 = vmatpush1.msra.mxu0 %v1287
    %1289 = vmatprep.subr.mxu0 0.0
    %1290 = vmatpush2.msra.mxu0 0.0
    %1291 = vmatprep.subr.mxu0 0.0
    %1292 = vmatpush2.msra.mxu0 0.0
    %1293 = vmatprep.subr.mxu0 0.0
    %1294 = vmatpush2.msra.mxu0 0.0
    %1295 = vmatprep.subr.mxu0 0.0
    %1296 = vmatpush2.msra.mxu0 0.0
    %1297 = vmatprep.subr.mxu0 0.0
    %1298 = vmatpush2.msra.mxu0 0.0
    %1299 = vmatprep.subr.mxu0 0.0
    %1300 = vmatpush2.msra.mxu0 0.0
    %1301 = vmatprep.subr.mxu0 0.0
    %1302 = vmatpush2.msra.mxu0 0.0
    %1303 = vmatprep.subr.mxu0 0.0
    %1304 = vmatpush2.msra.mxu0 0.0
    %1305 = vmatprep.subr.mxu0 0.0
    %1306 = vmatpush2.msra.mxu0 0.0
    %1307 = vmatprep.subr.mxu0 0.0
    %1308 = vmatpush2.msra.mxu0 0.0
    %1309 = vmatprep.subr.mxu0 0.0
    %1310 = vmatpush2.msra.mxu0 0.0
    %1311 = vmatprep.subr.mxu0 0.0
    %1312 = vmatpush2.msra.mxu0 0.0
    %1313 = vmatprep.subr.mxu0 0.0
    %1314 = vmatpush2.msra.mxu0 0.0
    %1315 = vmatprep.subr.mxu0 0.0
    %1316 = vmatpush2.msra.mxu0 0.0
    %1317 = vmatprep.subr.mxu0 0.0
    %1318 = vmatpush2.msra.mxu0 0.0
    %1319 = vmatprep.subr.mxu0 0.0
    %1320 = vmatpush2.msra.mxu0 0.0
    %1321 = vmatprep.mubr.f32.mxu0 0.0
    %v1322 = vand.u32 %v1077, 4294901760
    %v1323 = vsub.f32 %v1077, %v1322
    %1324 = vmatmul.mubr.f32.gmra.mxu0 %v1323
    %v1325 = vpop.f32.mrf.mxu0
    %v1326 = vadd.f32 %v1246, %v1325
    %v1327 = vpop.f32.mrf.mxu0
    %1328 = vdwg.mxu0
    %1329 = vmatprep.subr.mxu0 0.0
    %1330 = vmatpush1.msra.mxu0 0.0
    %1331 = vmatprep.subr.mxu0 0.0
    %1332 = vmatpush1.msra.mxu0 0.0
    %1333 = vmatprep.subr.mxu0 0.0
    %1334 = vmatpush1.msra.mxu0 0.0
    %1335 = vmatprep.subr.mxu0 0.0
    %1336 = vmatpush1.msra.mxu0 0.0
    %1337 = vmatprep.subr.mxu0 0.0
    %1338 = vmatpush1.msra.mxu0 0.0
    %1339 = vmatprep.subr.mxu0 0.0
    %1340 = vmatpush1.msra.mxu0 0.0
    %1341 = vmatprep.subr.mxu0 0.0
    %1342 = vmatpush1.msra.mxu0 0.0
    %1343 = vmatprep.subr.mxu0 0.0
    %1344 = vmatpush1.msra.mxu0 0.0
    %1345 = vmatprep.subr.mxu0 0.0
    %1346 = vmatpush1.msra.mxu0 0.0
    %1347 = vmatprep.subr.mxu0 0.0
    %1348 = vmatpush1.msra.mxu0 0.0
    %1349 = vmatprep.subr.mxu0 0.0
    %1350 = vmatpush1.msra.mxu0 0.0
    %1351 = vmatprep.subr.mxu0 0.0
    %1352 = vmatpush1.msra.mxu0 0.0
    %1353 = vmatprep.subr.mxu0 0.0
    %v1354 = vand.u32 %v70, 4294901760
    %1355 = vmatpush1.msra.mxu0 %v1354
    %1356 = vmatprep.subr.mxu0 0.0
    %v1357 = vand.u32 %v69, 4294901760
    %1358 = vmatpush1.msra.mxu0 %v1357
    %1359 = vmatprep.subr.mxu0 0.0
    %v1360 = vand.u32 %v68, 4294901760
    %1361 = vmatpush1.msra.mxu0 %v1360
    %1362 = vmatprep.subr.mxu0 0.0
    %v1363 = vand.u32 %v67, 4294901760
    %1364 = vmatpush1.msra.mxu0 %v1363
    %1365 = vmatprep.subr.mxu0 0.0
    %1366 = vmatpush2.msra.mxu0 0.0
    %1367 = vmatprep.subr.mxu0 0.0
    %1368 = vmatpush2.msra.mxu0 0.0
    %1369 = vmatprep.subr.mxu0 0.0
    %1370 = vmatpush2.msra.mxu0 0.0
    %1371 = vmatprep.subr.mxu0 0.0
    %1372 = vmatpush2.msra.mxu0 0.0
    %1373 = vmatprep.subr.mxu0 0.0
    %1374 = vmatpush2.msra.mxu0 0.0
    %1375 = vmatprep.subr.mxu0 0.0
    %1376 = vmatpush2.msra.mxu0 0.0
    %1377 = vmatprep.subr.mxu0 0.0
    %1378 = vmatpush2.msra.mxu0 0.0
    %1379 = vmatprep.subr.mxu0 0.0
    %1380 = vmatpush2.msra.mxu0 0.0
    %1381 = vmatprep.subr.mxu0 0.0
    %1382 = vmatpush2.msra.mxu0 0.0
    %1383 = vmatprep.subr.mxu0 0.0
    %1384 = vmatpush2.msra.mxu0 0.0
    %1385 = vmatprep.subr.mxu0 0.0
    %1386 = vmatpush2.msra.mxu0 0.0
    %1387 = vmatprep.subr.mxu0 0.0
    %1388 = vmatpush2.msra.mxu0 0.0
    %1389 = vmatprep.subr.mxu0 0.0
    %1390 = vmatpush2.msra.mxu0 0.0
    %1391 = vmatprep.subr.mxu0 0.0
    %1392 = vmatpush2.msra.mxu0 0.0
    %1393 = vmatprep.subr.mxu0 0.0
    %1394 = vmatpush2.msra.mxu0 0.0
    %1395 = vmatprep.subr.mxu0 0.0
    %1396 = vmatpush2.msra.mxu0 0.0
    %1397 = vmatprep.mubr.f32.mxu0 0.0
    %v1398 = vand.u32 %v1077, 4294901760
    %v1399 = vsub.f32 %v1077, %v1398
    %v1400 = vand.u32 %v1399, 4294901760
    %1401 = vmatmul.mubr.f32.gmra.mxu0 %v1400
    %v1402 = vpop.f32.mrf.mxu0
    %v1403 = vadd.f32 %v1326, %v1402
    %v1404 = vpop.f32.mrf.mxu0
    %1405 = vdwg.mxu0
    %1406 = vmatprep.subr.mxu0 0.0
    %1407 = vmatpush1.msra.mxu0 0.0
    %1408 = vmatprep.subr.mxu0 0.0
    %1409 = vmatpush1.msra.mxu0 0.0
    %1410 = vmatprep.subr.mxu0 0.0
    %1411 = vmatpush1.msra.mxu0 0.0
    %1412 = vmatprep.subr.mxu0 0.0
    %1413 = vmatpush1.msra.mxu0 0.0
    %1414 = vmatprep.subr.mxu0 0.0
    %1415 = vmatpush1.msra.mxu0 0.0
    %1416 = vmatprep.subr.mxu0 0.0
    %1417 = vmatpush1.msra.mxu0 0.0
    %1418 = vmatprep.subr.mxu0 0.0
    %1419 = vmatpush1.msra.mxu0 0.0
    %1420 = vmatprep.subr.mxu0 0.0
    %1421 = vmatpush1.msra.mxu0 0.0
    %1422 = vmatprep.subr.mxu0 0.0
    %1423 = vmatpush1.msra.mxu0 0.0
    %1424 = vmatprep.subr.mxu0 0.0
    %1425 = vmatpush1.msra.mxu0 0.0
    %1426 = vmatprep.subr.mxu0 0.0
    %1427 = vmatpush1.msra.mxu0 0.0
    %1428 = vmatprep.subr.mxu0 0.0
    %1429 = vmatpush1.msra.mxu0 0.0
    %1430 = vmatprep.subr.mxu0 0.0
    %v1431 = vand.u32 %v70, 4294901760
    %v1432 = vsub.f32 %v70, %v1431
    %v1433 = vand.u32 %v1432, 4294901760
    %1434 = vmatpush1.msra.mxu0 %v1433
    %1435 = vmatprep.subr.mxu0 0.0
    %v1436 = vand.u32 %v69, 4294901760
    %v1437 = vsub.f32 %v69, %v1436
    %v1438 = vand.u32 %v1437, 4294901760
    %1439 = vmatpush1.msra.mxu0 %v1438
    %1440 = vmatprep.subr.mxu0 0.0
    %v1441 = vand.u32 %v68, 4294901760
    %v1442 = vsub.f32 %v68, %v1441
    %v1443 = vand.u32 %v1442, 4294901760
    %1444 = vmatpush1.msra.mxu0 %v1443
    %1445 = vmatprep.subr.mxu0 0.0
    %v1446 = vand.u32 %v67, 4294901760
    %v1447 = vsub.f32 %v67, %v1446
    %v1448 = vand.u32 %v1447, 4294901760
    %1449 = vmatpush1.msra.mxu0 %v1448
    %1450 = vmatprep.subr.mxu0 0.0
    %1451 = vmatpush2.msra.mxu0 0.0
    %1452 = vmatprep.subr.mxu0 0.0
    %1453 = vmatpush2.msra.mxu0 0.0
    %1454 = vmatprep.subr.mxu0 0.0
    %1455 = vmatpush2.msra.mxu0 0.0
    %1456 = vmatprep.subr.mxu0 0.0
    %1457 = vmatpush2.msra.mxu0 0.0
    %1458 = vmatprep.subr.mxu0 0.0
    %1459 = vmatpush2.msra.mxu0 0.0
    %1460 = vmatprep.subr.mxu0 0.0
    %1461 = vmatpush2.msra.mxu0 0.0
    %1462 = vmatprep.subr.mxu0 0.0
    %1463 = vmatpush2.msra.mxu0 0.0
    %1464 = vmatprep.subr.mxu0 0.0
    %1465 = vmatpush2.msra.mxu0 0.0
    %1466 = vmatprep.subr.mxu0 0.0
    %1467 = vmatpush2.msra.mxu0 0.0
    %1468 = vmatprep.subr.mxu0 0.0
    %1469 = vmatpush2.msra.mxu0 0.0
    %1470 = vmatprep.subr.mxu0 0.0
    %1471 = vmatpush2.msra.mxu0 0.0
    %1472 = vmatprep.subr.mxu0 0.0
    %1473 = vmatpush2.msra.mxu0 0.0
    %1474 = vmatprep.subr.mxu0 0.0
    %1475 = vmatpush2.msra.mxu0 0.0
    %1476 = vmatprep.subr.mxu0 0.0
    %1477 = vmatpush2.msra.mxu0 0.0
    %1478 = vmatprep.subr.mxu0 0.0
    %1479 = vmatpush2.msra.mxu0 0.0
    %1480 = vmatprep.subr.mxu0 0.0
    %1481 = vmatpush2.msra.mxu0 0.0
    %1482 = vmatprep.mubr.f32.mxu0 0.0
    %v1483 = vand.u32 %v1077, 4294901760
    %1484 = vmatmul.mubr.f32.gmra.mxu0 %v1483
    %v1485 = vpop.f32.mrf.mxu0
    %v1486 = vadd.f32 %v1403, %v1485
    %v1487 = vpop.f32.mrf.mxu0
    %1488 = vdwg.mxu0
    %1489 = vmatprep.subr.mxu0 0.0
    %1490 = vmatpush1.msra.mxu0 0.0
    %1491 = vmatprep.subr.mxu0 0.0
    %1492 = vmatpush1.msra.mxu0 0.0
    %1493 = vmatprep.subr.mxu0 0.0
    %1494 = vmatpush1.msra.mxu0 0.0
    %1495 = vmatprep.subr.mxu0 0.0
    %1496 = vmatpush1.msra.mxu0 0.0
    %1497 = vmatprep.subr.mxu0 0.0
    %1498 = vmatpush1.msra.mxu0 0.0
    %1499 = vmatprep.subr.mxu0 0.0
    %1500 = vmatpush1.msra.mxu0 0.0
    %1501 = vmatprep.subr.mxu0 0.0
    %1502 = vmatpush1.msra.mxu0 0.0
    %1503 = vmatprep.subr.mxu0 0.0
    %1504 = vmatpush1.msra.mxu0 0.0
    %1505 = vmatprep.subr.mxu0 0.0
    %1506 = vmatpush1.msra.mxu0 0.0
    %1507 = vmatprep.subr.mxu0 0.0
    %1508 = vmatpush1.msra.mxu0 0.0
    %1509 = vmatprep.subr.mxu0 0.0
    %1510 = vmatpush1.msra.mxu0 0.0
    %1511 = vmatprep.subr.mxu0 0.0
    %1512 = vmatpush1.msra.mxu0 0.0
    %1513 = vmatprep.subr.mxu0 0.0
    %v1514 = vand.u32 %v70, 4294901760
    %1515 = vmatpush1.msra.mxu0 %v1514
    %1516 = vmatprep.subr.mxu0 0.0
    %v1517 = vand.u32 %v69, 4294901760
    %1518 = vmatpush1.msra.mxu0 %v1517
    %1519 = vmatprep.subr.mxu0 0.0
    %v1520 = vand.u32 %v68, 4294901760
    %1521 = vmatpush1.msra.mxu0 %v1520
    %1522 = vmatprep.subr.mxu0 0.0
    %v1523 = vand.u32 %v67, 4294901760
    %1524 = vmatpush1.msra.mxu0 %v1523
    %1525 = vmatprep.subr.mxu0 0.0
    %1526 = vmatpush2.msra.mxu0 0.0
    %1527 = vmatprep.subr.mxu0 0.0
    %1528 = vmatpush2.msra.mxu0 0.0
    %1529 = vmatprep.subr.mxu0 0.0
    %1530 = vmatpush2.msra.mxu0 0.0
    %1531 = vmatprep.subr.mxu0 0.0
    %1532 = vmatpush2.msra.mxu0 0.0
    %1533 = vmatprep.subr.mxu0 0.0
    %1534 = vmatpush2.msra.mxu0 0.0
    %1535 = vmatprep.subr.mxu0 0.0
    %1536 = vmatpush2.msra.mxu0 0.0
    %1537 = vmatprep.subr.mxu0 0.0
    %1538 = vmatpush2.msra.mxu0 0.0
    %1539 = vmatprep.subr.mxu0 0.0
    %1540 = vmatpush2.msra.mxu0 0.0
    %1541 = vmatprep.subr.mxu0 0.0
    %1542 = vmatpush2.msra.mxu0 0.0
    %1543 = vmatprep.subr.mxu0 0.0
    %1544 = vmatpush2.msra.mxu0 0.0
    %1545 = vmatprep.subr.mxu0 0.0
    %1546 = vmatpush2.msra.mxu0 0.0
    %1547 = vmatprep.subr.mxu0 0.0
    %1548 = vmatpush2.msra.mxu0 0.0
    %1549 = vmatprep.subr.mxu0 0.0
    %1550 = vmatpush2.msra.mxu0 0.0
    %1551 = vmatprep.subr.mxu0 0.0
    %1552 = vmatpush2.msra.mxu0 0.0
    %1553 = vmatprep.subr.mxu0 0.0
    %1554 = vmatpush2.msra.mxu0 0.0
    %1555 = vmatprep.subr.mxu0 0.0
    %1556 = vmatpush2.msra.mxu0 0.0
    %1557 = vmatprep.mubr.f32.mxu0 0.0
    %v1558 = vand.u32 %v1077, 4294901760
    %1559 = vmatmul.mubr.f32.gmra.mxu0 %v1558
    %v1560 = vpop.f32.mrf.mxu0
    %v1561 = vadd.f32 %v1486, %v1560
    %v1562 = vpop.f32.mrf.mxu0
    %1563 = vdwg.mxu0
    %v1564 = vlaneseq
    %v1565 = vshrl.u32 %v1564, 7
    %v1566 = vsub.s32 3, %v1565
    %v1567 = vrot.slane %v71, %v1566
    %v1568 = vmul.f32 %v578, %v1567
    %v1569 = vadd.f32 %v1568, %v1561
    %v1570 = vsel %vm76, %v1569, 0.0
    %1571 = vadd.xlane.f32.xlu0 %v1570
    %v1572 = vpop.xlane.xlu0 %1571
    %v1573 = vmul.f32 %v1572, %v568
    %v1574 = vsub.f32 %v1569, %v1573
    %v1575 = vmul.f32 %v1574, %v1574
    %v1576 = vsel %vm76, %v1575, 0.0
    %1577 = vadd.xlane.f32.xlu0 %v1576
    %v1578 = vpop.xlane.xlu0 %1577
    %v1579 = vmul.f32 %v1578, %v568
    %v1580 = vadd.f32 %v1579, 1e-05
    %v1581 = vrsqrt.pop %v1580
    %v1582 = vmul.f32 %v1574, %v1581
    %s1583 = scalar_lea.vmem [#allocation2], 96
    %v1584 = vld [vmem:[%s1583] sm:$0xff]
    %v1585 = vld [vmem:[%s1583 + $0x8] sm:$0xff]
    %v1586 = vld [vmem:[%s1583 + $0x10] sm:$0xff]
    %v1587 = vld [vmem:[%s1583 + $0x18] sm:$0xff]
    %s1588 = scalar_lea.vmem [#allocation2], 128
    %v1589 = vld [vmem:[%s1588] sm:$0xff]
    %v1590 = vld [vmem:[%s1588 + $0x8] sm:$0xff]
    %v1591 = vld [vmem:[%s1588 + $0x10] sm:$0xff]
    %v1592 = vld [vmem:[%s1588 + $0x18] sm:$0xff]
    %s1593 = scalar_lea.vmem [#allocation2], 160
    %v1594 = vld [vmem:[%s1593] sm:$0xff]
    %v1595 = vld [vmem:[%s1593 + $0x8] sm:$0xff]
    %v1596 = vld [vmem:[%s1593 + $0x10] sm:$0xff]
    %v1597 = vld [vmem:[%s1593 + $0x18] sm:$0xff]
    %s1598 = scalar_lea.vmem [#allocation5], 8
    %v1599 = vld [vmem:[%s1598] sm:$0xff]
    %v1600 = vlaneseq
    %v1601 = vshrl.u32 %v1600, 7
    %v1602 = vsub.s32 0, %v1601
    %v1603 = vrot.slane %v1599, %v1602
    %v1605 = vsel %vm76, %v1582, 0
    %1607 = vmatprep.subr.mxu0 0.0
    %1608 = vmatpush1.msra.mxu0 0.0
    %1609 = vmatprep.subr.mxu0 0.0
    %1610 = vmatpush1.msra.mxu0 0.0
    %1611 = vmatprep.subr.mxu0 0.0
    %1612 = vmatpush1.msra.mxu0 0.0
    %1613 = vmatprep.subr.mxu0 0.0
    %1614 = vmatpush1.msra.mxu0 0.0
    %1615 = vmatprep.subr.mxu0 0.0
    %1616 = vmatpush1.msra.mxu0 0.0
    %1617 = vmatprep.subr.mxu0 0.0
    %1618 = vmatpush1.msra.mxu0 0.0
    %1619 = vmatprep.subr.mxu0 0.0
    %1620 = vmatpush1.msra.mxu0 0.0
    %1621 = vmatprep.subr.mxu0 0.0
    %1622 = vmatpush1.msra.mxu0 0.0
    %1623 = vmatprep.subr.mxu0 0.0
    %1624 = vmatpush1.msra.mxu0 0.0
    %1625 = vmatprep.subr.mxu0 0.0
    %1626 = vmatpush1.msra.mxu0 0.0
    %1627 = vmatprep.subr.mxu0 0.0
    %1628 = vmatpush1.msra.mxu0 0.0
    %1629 = vmatprep.subr.mxu0 0.0
    %1630 = vmatpush1.msra.mxu0 0.0
    %1631 = vmatprep.subr.mxu0 0.0
    %v1632 = vand.u32 %v1587, 4294901760
    %1633 = vmatpush1.msra.mxu0 %v1632
    %1634 = vmatprep.subr.mxu0 0.0
    %v1635 = vand.u32 %v1586, 4294901760
    %1636 = vmatpush1.msra.mxu0 %v1635
    %1637 = vmatprep.subr.mxu0 0.0
    %v1638 = vand.u32 %v1585, 4294901760
    %1639 = vmatpush1.msra.mxu0 %v1638
    %1640 = vmatprep.subr.mxu0 0.0
    %v1641 = vand.u32 %v1584, 4294901760
    %1642 = vmatpush1.msra.mxu0 %v1641
    %1643 = vmatprep.subr.mxu0 0.0
    %1644 = vmatpush2.msra.mxu0 0.0
    %1645 = vmatprep.subr.mxu0 0.0
    %1646 = vmatpush2.msra.mxu0 0.0
    %1647 = vmatprep.subr.mxu0 0.0
    %1648 = vmatpush2.msra.mxu0 0.0
    %1649 = vmatprep.subr.mxu0 0.0
    %1650 = vmatpush2.msra.mxu0 0.0
    %1651 = vmatprep.subr.mxu0 0.0
    %1652 = vmatpush2.msra.mxu0 0.0
    %1653 = vmatprep.subr.mxu0 0.0
    %1654 = vmatpush2.msra.mxu0 0.0
    %1655 = vmatprep.subr.mxu0 0.0
    %1656 = vmatpush2.msra.mxu0 0.0
    %1657 = vmatprep.subr.mxu0 0.0
    %1658 = vmatpush2.msra.mxu0 0.0
    %1659 = vmatprep.subr.mxu0 0.0
    %1660 = vmatpush2.msra.mxu0 0.0
    %1661 = vmatprep.subr.mxu0 0.0
    %1662 = vmatpush2.msra.mxu0 0.0
    %1663 = vmatprep.subr.mxu0 0.0
    %1664 = vmatpush2.msra.mxu0 0.0
    %1665 = vmatprep.subr.mxu0 0.0
    %1666 = vmatpush2.msra.mxu0 0.0
    %1667 = vmatprep.subr.mxu0 0.0
    %1668 = vmatpush2.msra.mxu0 0.0
    %1669 = vmatprep.subr.mxu0 0.0
    %1670 = vmatpush2.msra.mxu0 0.0
    %1671 = vmatprep.subr.mxu0 0.0
    %1672 = vmatpush2.msra.mxu0 0.0
    %1673 = vmatprep.subr.mxu0 0.0
    %1674 = vmatpush2.msra.mxu0 0.0
    %1675 = vmatprep.mubr.f32.mxu0 0.0
    %v1676 = vand.u32 %v1605, 4294901760
    %v1677 = vsub.f32 %v1605, %v1676
    %v1678 = vand.u32 %v1677, 4294901760
    %v1679 = vsub.f32 %v1677, %v1678
    %v1680 = vand.u32 %v1679, 4294901760
    %1681 = vmatmul.mubr.f32.gmra.mxu0 %v1680
    %v1682 = vpop.f32.mrf.mxu0
    %v1683 = vadd.f32 %v1603, %v1682
    %v1684 = vpop.f32.mrf.mxu0
    %1685 = vdwg.mxu0
    %1686 = vmatprep.subr.mxu0 0.0
    %1687 = vmatpush1.msra.mxu0 0.0
    %1688 = vmatprep.subr.mxu0 0.0
    %1689 = vmatpush1.msra.mxu0 0.0
    %1690 = vmatprep.subr.mxu0 0.0
    %1691 = vmatpush1.msra.mxu0 0.0
    %1692 = vmatprep.subr.mxu0 0.0
    %1693 = vmatpush1.msra.mxu0 0.0
    %1694 = vmatprep.subr.mxu0 0.0
    %1695 = vmatpush1.msra.mxu0 0.0
    %1696 = vmatprep.subr.mxu0 0.0
    %1697 = vmatpush1.msra.mxu0 0.0
    %1698 = vmatprep.subr.mxu0 0.0
    %1699 = vmatpush1.msra.mxu0 0.0
    %1700 = vmatprep.subr.mxu0 0.0
    %1701 = vmatpush1.msra.mxu0 0.0
    %1702 = vmatprep.subr.mxu0 0.0
    %1703 = vmatpush1.msra.mxu0 0.0
    %1704 = vmatprep.subr.mxu0 0.0
    %1705 = vmatpush1.msra.mxu0 0.0
    %1706 = vmatprep.subr.mxu0 0.0
    %1707 = vmatpush1.msra.mxu0 0.0
    %1708 = vmatprep.subr.mxu0 0.0
    %1709 = vmatpush1.msra.mxu0 0.0
    %1710 = vmatprep.subr.mxu0 0.0
    %v1711 = vand.u32 %v1587, 4294901760
    %v1712 = vsub.f32 %v1587, %v1711
    %v1713 = vand.u32 %v1712, 4294901760
    %v1714 = vsub.f32 %v1712, %v1713
    %v1715 = vand.u32 %v1714, 4294901760
    %1716 = vmatpush1.msra.mxu0 %v1715
    %1717 = vmatprep.subr.mxu0 0.0
    %v1718 = vand.u32 %v1586, 4294901760
    %v1719 = vsub.f32 %v1586, %v1718
    %v1720 = vand.u32 %v1719, 4294901760
    %v1721 = vsub.f32 %v1719, %v1720
    %v1722 = vand.u32 %v1721, 4294901760
    %1723 = vmatpush1.msra.mxu0 %v1722
    %1724 = vmatprep.subr.mxu0 0.0
    %v1725 = vand.u32 %v1585, 4294901760
    %v1726 = vsub.f32 %v1585, %v1725
    %v1727 = vand.u32 %v1726, 4294901760
    %v1728 = vsub.f32 %v1726, %v1727
    %v1729 = vand.u32 %v1728, 4294901760
    %1730 = vmatpush1.msra.mxu0 %v1729
    %1731 = vmatprep.subr.mxu0 0.0
    %v1732 = vand.u32 %v1584, 4294901760
    %v1733 = vsub.f32 %v1584, %v1732
    %v1734 = vand.u32 %v1733, 4294901760
    %v1735 = vsub.f32 %v1733, %v1734
    %v1736 = vand.u32 %v1735, 4294901760
    %1737 = vmatpush1.msra.mxu0 %v1736
    %1738 = vmatprep.subr.mxu0 0.0
    %1739 = vmatpush2.msra.mxu0 0.0
    %1740 = vmatprep.subr.mxu0 0.0
    %1741 = vmatpush2.msra.mxu0 0.0
    %1742 = vmatprep.subr.mxu0 0.0
    %1743 = vmatpush2.msra.mxu0 0.0
    %1744 = vmatprep.subr.mxu0 0.0
    %1745 = vmatpush2.msra.mxu0 0.0
    %1746 = vmatprep.subr.mxu0 0.0
    %1747 = vmatpush2.msra.mxu0 0.0
    %1748 = vmatprep.subr.mxu0 0.0
    %1749 = vmatpush2.msra.mxu0 0.0
    %1750 = vmatprep.subr.mxu0 0.0
    %1751 = vmatpush2.msra.mxu0 0.0
    %1752 = vmatprep.subr.mxu0 0.0
    %1753 = vmatpush2.msra.mxu0 0.0
    %1754 = vmatprep.subr.mxu0 0.0
    %1755 = vmatpush2.msra.mxu0 0.0
    %1756 = vmatprep.subr.mxu0 0.0
    %1757 = vmatpush2.msra.mxu0 0.0
    %1758 = vmatprep.subr.mxu0 0.0
    %1759 = vmatpush2.msra.mxu0 0.0
    %1760 = vmatprep.subr.mxu0 0.0
    %1761 = vmatpush2.msra.mxu0 0.0
    %1762 = vmatprep.subr.mxu0 0.0
    %1763 = vmatpush2.msra.mxu0 0.0
    %1764 = vmatprep.subr.mxu0 0.0
    %1765 = vmatpush2.msra.mxu0 0.0
    %1766 = vmatprep.subr.mxu0 0.0
    %1767 = vmatpush2.msra.mxu0 0.0
    %1768 = vmatprep.subr.mxu0 0.0
    %1769 = vmatpush2.msra.mxu0 0.0
    %1770 = vmatprep.mubr.f32.mxu0 0.0
    %v1771 = vand.u32 %v1605, 4294901760
    %1772 = vmatmul.mubr.f32.gmra.mxu0 %v1771
    %v1773 = vpop.f32.mrf.mxu0
    %v1774 = vadd.f32 %v1683, %v1773
    %v1775 = vpop.f32.mrf.mxu0
    %1776 = vdwg.mxu0
    %1777 = vmatprep.subr.mxu0 0.0
    %1778 = vmatpush1.msra.mxu0 0.0
    %1779 = vmatprep.subr.mxu0 0.0
    %1780 = vmatpush1.msra.mxu0 0.0
    %1781 = vmatprep.subr.mxu0 0.0
    %1782 = vmatpush1.msra.mxu0 0.0
    %1783 = vmatprep.subr.mxu0 0.0
    %1784 = vmatpush1.msra.mxu0 0.0
    %1785 = vmatprep.subr.mxu0 0.0
    %1786 = vmatpush1.msra.mxu0 0.0
    %1787 = vmatprep.subr.mxu0 0.0
    %1788 = vmatpush1.msra.mxu0 0.0
    %1789 = vmatprep.subr.mxu0 0.0
    %1790 = vmatpush1.msra.mxu0 0.0
    %1791 = vmatprep.subr.mxu0 0.0
    %1792 = vmatpush1.msra.mxu0 0.0
    %1793 = vmatprep.subr.mxu0 0.0
    %1794 = vmatpush1.msra.mxu0 0.0
    %1795 = vmatprep.subr.mxu0 0.0
    %1796 = vmatpush1.msra.mxu0 0.0
    %1797 = vmatprep.subr.mxu0 0.0
    %1798 = vmatpush1.msra.mxu0 0.0
    %1799 = vmatprep.subr.mxu0 0.0
    %1800 = vmatpush1.msra.mxu0 0.0
    %1801 = vmatprep.subr.mxu0 0.0
    %v1802 = vand.u32 %v1587, 4294901760
    %v1803 = vsub.f32 %v1587, %v1802
    %1804 = vmatpush1.msra.mxu0 %v1803
    %1805 = vmatprep.subr.mxu0 0.0
    %v1806 = vand.u32 %v1586, 4294901760
    %v1807 = vsub.f32 %v1586, %v1806
    %1808 = vmatpush1.msra.mxu0 %v1807
    %1809 = vmatprep.subr.mxu0 0.0
    %v1810 = vand.u32 %v1585, 4294901760
    %v1811 = vsub.f32 %v1585, %v1810
    %1812 = vmatpush1.msra.mxu0 %v1811
    %1813 = vmatprep.subr.mxu0 0.0
    %v1814 = vand.u32 %v1584, 4294901760
    %v1815 = vsub.f32 %v1584, %v1814
    %1816 = vmatpush1.msra.mxu0 %v1815
    %1817 = vmatprep.subr.mxu0 0.0
    %1818 = vmatpush2.msra.mxu0 0.0
    %1819 = vmatprep.subr.mxu0 0.0
    %1820 = vmatpush2.msra.mxu0 0.0
    %1821 = vmatprep.subr.mxu0 0.0
    %1822 = vmatpush2.msra.mxu0 0.0
    %1823 = vmatprep.subr.mxu0 0.0
    %1824 = vmatpush2.msra.mxu0 0.0
    %1825 = vmatprep.subr.mxu0 0.0
    %1826 = vmatpush2.msra.mxu0 0.0
    %1827 = vmatprep.subr.mxu0 0.0
    %1828 = vmatpush2.msra.mxu0 0.0
    %1829 = vmatprep.subr.mxu0 0.0
    %1830 = vmatpush2.msra.mxu0 0.0
    %1831 = vmatprep.subr.mxu0 0.0
    %1832 = vmatpush2.msra.mxu0 0.0
    %1833 = vmatprep.subr.mxu0 0.0
    %1834 = vmatpush2.msra.mxu0 0.0
    %1835 = vmatprep.subr.mxu0 0.0
    %1836 = vmatpush2.msra.mxu0 0.0
    %1837 = vmatprep.subr.mxu0 0.0
    %1838 = vmatpush2.msra.mxu0 0.0
    %1839 = vmatprep.subr.mxu0 0.0
    %1840 = vmatpush2.msra.mxu0 0.0
    %1841 = vmatprep.subr.mxu0 0.0
    %1842 = vmatpush2.msra.mxu0 0.0
    %1843 = vmatprep.subr.mxu0 0.0
    %1844 = vmatpush2.msra.mxu0 0.0
    %1845 = vmatprep.subr.mxu0 0.0
    %1846 = vmatpush2.msra.mxu0 0.0
    %1847 = vmatprep.subr.mxu0 0.0
    %1848 = vmatpush2.msra.mxu0 0.0
    %1849 = vmatprep.mubr.f32.mxu0 0.0
    %v1850 = vand.u32 %v1605, 4294901760
    %v1851 = vsub.f32 %v1605, %v1850
    %1852 = vmatmul.mubr.f32.gmra.mxu0 %v1851
    %v1853 = vpop.f32.mrf.mxu0
    %v1854 = vadd.f32 %v1774, %v1853
    %v1855 = vpop.f32.mrf.mxu0
    %1856 = vdwg.mxu0
    %1857 = vmatprep.subr.mxu0 0.0
    %1858 = vmatpush1.msra.mxu0 0.0
    %1859 = vmatprep.subr.mxu0 0.0
    %1860 = vmatpush1.msra.mxu0 0.0
    %1861 = vmatprep.subr.mxu0 0.0
    %1862 = vmatpush1.msra.mxu0 0.0
    %1863 = vmatprep.subr.mxu0 0.0
    %1864 = vmatpush1.msra.mxu0 0.0
    %1865 = vmatprep.subr.mxu0 0.0
    %1866 = vmatpush1.msra.mxu0 0.0
    %1867 = vmatprep.subr.mxu0 0.0
    %1868 = vmatpush1.msra.mxu0 0.0
    %1869 = vmatprep.subr.mxu0 0.0
    %1870 = vmatpush1.msra.mxu0 0.0
    %1871 = vmatprep.subr.mxu0 0.0
    %1872 = vmatpush1.msra.mxu0 0.0
    %1873 = vmatprep.subr.mxu0 0.0
    %1874 = vmatpush1.msra.mxu0 0.0
    %1875 = vmatprep.subr.mxu0 0.0
    %1876 = vmatpush1.msra.mxu0 0.0
    %1877 = vmatprep.subr.mxu0 0.0
    %1878 = vmatpush1.msra.mxu0 0.0
    %1879 = vmatprep.subr.mxu0 0.0
    %1880 = vmatpush1.msra.mxu0 0.0
    %1881 = vmatprep.subr.mxu0 0.0
    %v1882 = vand.u32 %v1587, 4294901760
    %1883 = vmatpush1.msra.mxu0 %v1882
    %1884 = vmatprep.subr.mxu0 0.0
    %v1885 = vand.u32 %v1586, 4294901760
    %1886 = vmatpush1.msra.mxu0 %v1885
    %1887 = vmatprep.subr.mxu0 0.0
    %v1888 = vand.u32 %v1585, 4294901760
    %1889 = vmatpush1.msra.mxu0 %v1888
    %1890 = vmatprep.subr.mxu0 0.0
    %v1891 = vand.u32 %v1584, 4294901760
    %1892 = vmatpush1.msra.mxu0 %v1891
    %1893 = vmatprep.subr.mxu0 0.0
    %1894 = vmatpush2.msra.mxu0 0.0
    %1895 = vmatprep.subr.mxu0 0.0
    %1896 = vmatpush2.msra.mxu0 0.0
    %1897 = vmatprep.subr.mxu0 0.0
    %1898 = vmatpush2.msra.mxu0 0.0
    %1899 = vmatprep.subr.mxu0 0.0
    %1900 = vmatpush2.msra.mxu0 0.0
    %1901 = vmatprep.subr.mxu0 0.0
    %1902 = vmatpush2.msra.mxu0 0.0
    %1903 = vmatprep.subr.mxu0 0.0
    %1904 = vmatpush2.msra.mxu0 0.0
    %1905 = vmatprep.subr.mxu0 0.0
    %1906 = vmatpush2.msra.mxu0 0.0
    %1907 = vmatprep.subr.mxu0 0.0
    %1908 = vmatpush2.msra.mxu0 0.0
    %1909 = vmatprep.subr.mxu0 0.0
    %1910 = vmatpush2.msra.mxu0 0.0
    %1911 = vmatprep.subr.mxu0 0.0
    %1912 = vmatpush2.msra.mxu0 0.0
    %1913 = vmatprep.subr.mxu0 0.0
    %1914 = vmatpush2.msra.mxu0 0.0
    %1915 = vmatprep.subr.mxu0 0.0
    %1916 = vmatpush2.msra.mxu0 0.0
    %1917 = vmatprep.subr.mxu0 0.0
    %1918 = vmatpush2.msra.mxu0 0.0
    %1919 = vmatprep.subr.mxu0 0.0
    %1920 = vmatpush2.msra.mxu0 0.0
    %1921 = vmatprep.subr.mxu0 0.0
    %1922 = vmatpush2.msra.mxu0 0.0
    %1923 = vmatprep.subr.mxu0 0.0
    %1924 = vmatpush2.msra.mxu0 0.0
    %1925 = vmatprep.mubr.f32.mxu0 0.0
    %v1926 = vand.u32 %v1605, 4294901760
    %v1927 = vsub.f32 %v1605, %v1926
    %v1928 = vand.u32 %v1927, 4294901760
    %1929 = vmatmul.mubr.f32.gmra.mxu0 %v1928
    %v1930 = vpop.f32.mrf.mxu0
    %v1931 = vadd.f32 %v1854, %v1930
    %v1932 = vpop.f32.mrf.mxu0
    %1933 = vdwg.mxu0
    %1934 = vmatprep.subr.mxu0 0.0
    %1935 = vmatpush1.msra.mxu0 0.0
    %1936 = vmatprep.subr.mxu0 0.0
    %1937 = vmatpush1.msra.mxu0 0.0
    %1938 = vmatprep.subr.mxu0 0.0
    %1939 = vmatpush1.msra.mxu0 0.0
    %1940 = vmatprep.subr.mxu0 0.0
    %1941 = vmatpush1.msra.mxu0 0.0
    %1942 = vmatprep.subr.mxu0 0.0
    %1943 = vmatpush1.msra.mxu0 0.0
    %1944 = vmatprep.subr.mxu0 0.0
    %1945 = vmatpush1.msra.mxu0 0.0
    %1946 = vmatprep.subr.mxu0 0.0
    %1947 = vmatpush1.msra.mxu0 0.0
    %1948 = vmatprep.subr.mxu0 0.0
    %1949 = vmatpush1.msra.mxu0 0.0
    %1950 = vmatprep.subr.mxu0 0.0
    %1951 = vmatpush1.msra.mxu0 0.0
    %1952 = vmatprep.subr.mxu0 0.0
    %1953 = vmatpush1.msra.mxu0 0.0
    %1954 = vmatprep.subr.mxu0 0.0
    %1955 = vmatpush1.msra.mxu0 0.0
    %1956 = vmatprep.subr.mxu0 0.0
    %1957 = vmatpush1.msra.mxu0 0.0
    %1958 = vmatprep.subr.mxu0 0.0
    %v1959 = vand.u32 %v1587, 4294901760
    %v1960 = vsub.f32 %v1587, %v1959
    %v1961 = vand.u32 %v1960, 4294901760
    %1962 = vmatpush1.msra.mxu0 %v1961
    %1963 = vmatprep.subr.mxu0 0.0
    %v1964 = vand.u32 %v1586, 4294901760
    %v1965 = vsub.f32 %v1586, %v1964
    %v1966 = vand.u32 %v1965, 4294901760
    %1967 = vmatpush1.msra.mxu0 %v1966
    %1968 = vmatprep.subr.mxu0 0.0
    %v1969 = vand.u32 %v1585, 4294901760
    %v1970 = vsub.f32 %v1585, %v1969
    %v1971 = vand.u32 %v1970, 4294901760
    %1972 = vmatpush1.msra.mxu0 %v1971
    %1973 = vmatprep.subr.mxu0 0.0
    %v1974 = vand.u32 %v1584, 4294901760
    %v1975 = vsub.f32 %v1584, %v1974
    %v1976 = vand.u32 %v1975, 4294901760
    %1977 = vmatpush1.msra.mxu0 %v1976
    %1978 = vmatprep.subr.mxu0 0.0
    %1979 = vmatpush2.msra.mxu0 0.0
    %1980 = vmatprep.subr.mxu0 0.0
    %1981 = vmatpush2.msra.mxu0 0.0
    %1982 = vmatprep.subr.mxu0 0.0
    %1983 = vmatpush2.msra.mxu0 0.0
    %1984 = vmatprep.subr.mxu0 0.0
    %1985 = vmatpush2.msra.mxu0 0.0
    %1986 = vmatprep.subr.mxu0 0.0
    %1987 = vmatpush2.msra.mxu0 0.0
    %1988 = vmatprep.subr.mxu0 0.0
    %1989 = vmatpush2.msra.mxu0 0.0
    %1990 = vmatprep.subr.mxu0 0.0
    %1991 = vmatpush2.msra.mxu0 0.0
    %1992 = vmatprep.subr.mxu0 0.0
    %1993 = vmatpush2.msra.mxu0 0.0
    %1994 = vmatprep.subr.mxu0 0.0
    %1995 = vmatpush2.msra.mxu0 0.0
    %1996 = vmatprep.subr.mxu0 0.0
    %1997 = vmatpush2.msra.mxu0 0.0
    %1998 = vmatprep.subr.mxu0 0.0
    %1999 = vmatpush2.msra.mxu0 0.0
    %2000 = vmatprep.subr.mxu0 0.0
    %2001 = vmatpush2.msra.mxu0 0.0
    %2002 = vmatprep.subr.mxu0 0.0
    %2003 = vmatpush2.msra.mxu0 0.0
    %2004 = vmatprep.subr.mxu0 0.0
    %2005 = vmatpush2.msra.mxu0 0.0
    %2006 = vmatprep.subr.mxu0 0.0
    %2007 = vmatpush2.msra.mxu0 0.0
    %2008 = vmatprep.subr.mxu0 0.0
    %2009 = vmatpush2.msra.mxu0 0.0
    %2010 = vmatprep.mubr.f32.mxu0 0.0
    %v2011 = vand.u32 %v1605, 4294901760
    %2012 = vmatmul.mubr.f32.gmra.mxu0 %v2011
    %v2013 = vpop.f32.mrf.mxu0
    %v2014 = vadd.f32 %v1931, %v2013
    %v2015 = vpop.f32.mrf.mxu0
    %2016 = vdwg.mxu0
    %2017 = vmatprep.subr.mxu0 0.0
    %2018 = vmatpush1.msra.mxu0 0.0
    %2019 = vmatprep.subr.mxu0 0.0
    %2020 = vmatpush1.msra.mxu0 0.0
    %2021 = vmatprep.subr.mxu0 0.0
    %2022 = vmatpush1.msra.mxu0 0.0
    %2023 = vmatprep.subr.mxu0 0.0
    %2024 = vmatpush1.msra.mxu0 0.0
    %2025 = vmatprep.subr.mxu0 0.0
    %2026 = vmatpush1.msra.mxu0 0.0
    %2027 = vmatprep.subr.mxu0 0.0
    %2028 = vmatpush1.msra.mxu0 0.0
    %2029 = vmatprep.subr.mxu0 0.0
    %2030 = vmatpush1.msra.mxu0 0.0
    %2031 = vmatprep.subr.mxu0 0.0
    %2032 = vmatpush1.msra.mxu0 0.0
    %2033 = vmatprep.subr.mxu0 0.0
    %2034 = vmatpush1.msra.mxu0 0.0
    %2035 = vmatprep.subr.mxu0 0.0
    %2036 = vmatpush1.msra.mxu0 0.0
    %2037 = vmatprep.subr.mxu0 0.0
    %2038 = vmatpush1.msra.mxu0 0.0
    %2039 = vmatprep.subr.mxu0 0.0
    %2040 = vmatpush1.msra.mxu0 0.0
    %2041 = vmatprep.subr.mxu0 0.0
    %v2042 = vand.u32 %v1587, 4294901760
    %2043 = vmatpush1.msra.mxu0 %v2042
    %2044 = vmatprep.subr.mxu0 0.0
    %v2045 = vand.u32 %v1586, 4294901760
    %2046 = vmatpush1.msra.mxu0 %v2045
    %2047 = vmatprep.subr.mxu0 0.0
    %v2048 = vand.u32 %v1585, 4294901760
    %2049 = vmatpush1.msra.mxu0 %v2048
    %2050 = vmatprep.subr.mxu0 0.0
    %v2051 = vand.u32 %v1584, 4294901760
    %2052 = vmatpush1.msra.mxu0 %v2051
    %2053 = vmatprep.subr.mxu0 0.0
    %2054 = vmatpush2.msra.mxu0 0.0
    %2055 = vmatprep.subr.mxu0 0.0
    %2056 = vmatpush2.msra.mxu0 0.0
    %2057 = vmatprep.subr.mxu0 0.0
    %2058 = vmatpush2.msra.mxu0 0.0
    %2059 = vmatprep.subr.mxu0 0.0
    %2060 = vmatpush2.msra.mxu0 0.0
    %2061 = vmatprep.subr.mxu0 0.0
    %2062 = vmatpush2.msra.mxu0 0.0
    %2063 = vmatprep.subr.mxu0 0.0
    %2064 = vmatpush2.msra.mxu0 0.0
    %2065 = vmatprep.subr.mxu0 0.0
    %2066 = vmatpush2.msra.mxu0 0.0
    %2067 = vmatprep.subr.mxu0 0.0
    %2068 = vmatpush2.msra.mxu0 0.0
    %2069 = vmatprep.subr.mxu0 0.0
    %2070 = vmatpush2.msra.mxu0 0.0
    %2071 = vmatprep.subr.mxu0 0.0
    %2072 = vmatpush2.msra.mxu0 0.0
    %2073 = vmatprep.subr.mxu0 0.0
    %2074 = vmatpush2.msra.mxu0 0.0
    %2075 = vmatprep.subr.mxu0 0.0
    %2076 = vmatpush2.msra.mxu0 0.0
    %2077 = vmatprep.subr.mxu0 0.0
    %2078 = vmatpush2.msra.mxu0 0.0
    %2079 = vmatprep.subr.mxu0 0.0
    %2080 = vmatpush2.msra.mxu0 0.0
    %2081 = vmatprep.subr.mxu0 0.0
    %2082 = vmatpush2.msra.mxu0 0.0
    %2083 = vmatprep.subr.mxu0 0.0
    %2084 = vmatpush2.msra.mxu0 0.0
    %2085 = vmatprep.mubr.f32.mxu0 0.0
    %v2086 = vand.u32 %v1605, 4294901760
    %2087 = vmatmul.mubr.f32.gmra.mxu0 %v2086
    %v2088 = vpop.f32.mrf.mxu0
    %v2089 = vadd.f32 %v2014, %v2088
    %v2090 = vpop.f32.mrf.mxu0
    %2091 = vdwg.mxu0
    %v2092 = vsel %vm76, %v2089, 0.0
    %2093 = vadd.xlane.f32.xlu0 %v2092
    %v2094 = vpop.xlane.xlu0 %2093
    %v2095 = vmul.f32 %v2094, %v568
    %v2096 = vsub.f32 %v2089, %v2095
    %v2097 = vmul.f32 %v2096, %v2096
    %v2098 = vsel %vm76, %v2097, 0.0
    %2099 = vadd.xlane.f32.xlu0 %v2098
    %v2100 = vpop.xlane.xlu0 %2099
    %v2101 = vmul.f32 %v2100, %v568
    %v2102 = vadd.f32 %v2101, 1e-05
    %v2103 = vrsqrt.pop %v2102
    %v2104 = vmul.f32 %v2096, %v2103
    %v2105 = vlaneseq
    %v2106 = vshrl.u32 %v2105, 7
    %v2107 = vsub.s32 1, %v2106
    %v2108 = vrot.slane %v1599, %v2107
    %v2110 = vsel %vm76, %v2104, 0
    %2112 = vmatprep.subr.mxu0 0.0
    %2113 = vmatpush1.msra.mxu0 0.0
    %2114 = vmatprep.subr.mxu0 0.0
    %2115 = vmatpush1.msra.mxu0 0.0
    %2116 = vmatprep.subr.mxu0 0.0
    %2117 = vmatpush1.msra.mxu0 0.0
    %2118 = vmatprep.subr.mxu0 0.0
    %2119 = vmatpush1.msra.mxu0 0.0
    %2120 = vmatprep.subr.mxu0 0.0
    %2121 = vmatpush1.msra.mxu0 0.0
    %2122 = vmatprep.subr.mxu0 0.0
    %2123 = vmatpush1.msra.mxu0 0.0
    %2124 = vmatprep.subr.mxu0 0.0
    %2125 = vmatpush1.msra.mxu0 0.0
    %2126 = vmatprep.subr.mxu0 0.0
    %2127 = vmatpush1.msra.mxu0 0.0
    %2128 = vmatprep.subr.mxu0 0.0
    %2129 = vmatpush1.msra.mxu0 0.0
    %2130 = vmatprep.subr.mxu0 0.0
    %2131 = vmatpush1.msra.mxu0 0.0
    %2132 = vmatprep.subr.mxu0 0.0
    %2133 = vmatpush1.msra.mxu0 0.0
    %2134 = vmatprep.subr.mxu0 0.0
    %2135 = vmatpush1.msra.mxu0 0.0
    %2136 = vmatprep.subr.mxu0 0.0
    %v2137 = vand.u32 %v1592, 4294901760
    %2138 = vmatpush1.msra.mxu0 %v2137
    %2139 = vmatprep.subr.mxu0 0.0
    %v2140 = vand.u32 %v1591, 4294901760
    %2141 = vmatpush1.msra.mxu0 %v2140
    %2142 = vmatprep.subr.mxu0 0.0
    %v2143 = vand.u32 %v1590, 4294901760
    %2144 = vmatpush1.msra.mxu0 %v2143
    %2145 = vmatprep.subr.mxu0 0.0
    %v2146 = vand.u32 %v1589, 4294901760
    %2147 = vmatpush1.msra.mxu0 %v2146
    %2148 = vmatprep.subr.mxu0 0.0
    %2149 = vmatpush2.msra.mxu0 0.0
    %2150 = vmatprep.subr.mxu0 0.0
    %2151 = vmatpush2.msra.mxu0 0.0
    %2152 = vmatprep.subr.mxu0 0.0
    %2153 = vmatpush2.msra.mxu0 0.0
    %2154 = vmatprep.subr.mxu0 0.0
    %2155 = vmatpush2.msra.mxu0 0.0
    %2156 = vmatprep.subr.mxu0 0.0
    %2157 = vmatpush2.msra.mxu0 0.0
    %2158 = vmatprep.subr.mxu0 0.0
    %2159 = vmatpush2.msra.mxu0 0.0
    %2160 = vmatprep.subr.mxu0 0.0
    %2161 = vmatpush2.msra.mxu0 0.0
    %2162 = vmatprep.subr.mxu0 0.0
    %2163 = vmatpush2.msra.mxu0 0.0
    %2164 = vmatprep.subr.mxu0 0.0
    %2165 = vmatpush2.msra.mxu0 0.0
    %2166 = vmatprep.subr.mxu0 0.0
    %2167 = vmatpush2.msra.mxu0 0.0
    %2168 = vmatprep.subr.mxu0 0.0
    %2169 = vmatpush2.msra.mxu0 0.0
    %2170 = vmatprep.subr.mxu0 0.0
    %2171 = vmatpush2.msra.mxu0 0.0
    %2172 = vmatprep.subr.mxu0 0.0
    %2173 = vmatpush2.msra.mxu0 0.0
    %2174 = vmatprep.subr.mxu0 0.0
    %2175 = vmatpush2.msra.mxu0 0.0
    %2176 = vmatprep.subr.mxu0 0.0
    %2177 = vmatpush2.msra.mxu0 0.0
    %2178 = vmatprep.subr.mxu0 0.0
    %2179 = vmatpush2.msra.mxu0 0.0
    %2180 = vmatprep.mubr.f32.mxu0 0.0
    %v2181 = vand.u32 %v2110, 4294901760
    %v2182 = vsub.f32 %v2110, %v2181
    %v2183 = vand.u32 %v2182, 4294901760
    %v2184 = vsub.f32 %v2182, %v2183
    %v2185 = vand.u32 %v2184, 4294901760
    %2186 = vmatmul.mubr.f32.gmra.mxu0 %v2185
    %v2187 = vpop.f32.mrf.mxu0
    %v2188 = vadd.f32 %v2108, %v2187
    %v2189 = vpop.f32.mrf.mxu0
    %2190 = vdwg.mxu0
    %2191 = vmatprep.subr.mxu0 0.0
    %2192 = vmatpush1.msra.mxu0 0.0
    %2193 = vmatprep.subr.mxu0 0.0
    %2194 = vmatpush1.msra.mxu0 0.0
    %2195 = vmatprep.subr.mxu0 0.0
    %2196 = vmatpush1.msra.mxu0 0.0
    %2197 = vmatprep.subr.mxu0 0.0
    %2198 = vmatpush1.msra.mxu0 0.0
    %2199 = vmatprep.subr.mxu0 0.0
    %2200 = vmatpush1.msra.mxu0 0.0
    %2201 = vmatprep.subr.mxu0 0.0
    %2202 = vmatpush1.msra.mxu0 0.0
    %2203 = vmatprep.subr.mxu0 0.0
    %2204 = vmatpush1.msra.mxu0 0.0
    %2205 = vmatprep.subr.mxu0 0.0
    %2206 = vmatpush1.msra.mxu0 0.0
    %2207 = vmatprep.subr.mxu0 0.0
    %2208 = vmatpush1.msra.mxu0 0.0
    %2209 = vmatprep.subr.mxu0 0.0
    %2210 = vmatpush1.msra.mxu0 0.0
    %2211 = vmatprep.subr.mxu0 0.0
    %2212 = vmatpush1.msra.mxu0 0.0
    %2213 = vmatprep.subr.mxu0 0.0
    %2214 = vmatpush1.msra.mxu0 0.0
    %2215 = vmatprep.subr.mxu0 0.0
    %v2216 = vand.u32 %v1592, 4294901760
    %v2217 = vsub.f32 %v1592, %v2216
    %v2218 = vand.u32 %v2217, 4294901760
    %v2219 = vsub.f32 %v2217, %v2218
    %v2220 = vand.u32 %v2219, 4294901760
    %2221 = vmatpush1.msra.mxu0 %v2220
    %2222 = vmatprep.subr.mxu0 0.0
    %v2223 = vand.u32 %v1591, 4294901760
    %v2224 = vsub.f32 %v1591, %v2223
    %v2225 = vand.u32 %v2224, 4294901760
    %v2226 = vsub.f32 %v2224, %v2225
    %v2227 = vand.u32 %v2226, 4294901760
    %2228 = vmatpush1.msra.mxu0 %v2227
    %2229 = vmatprep.subr.mxu0 0.0
    %v2230 = vand.u32 %v1590, 4294901760
    %v2231 = vsub.f32 %v1590, %v2230
    %v2232 = vand.u32 %v2231, 4294901760
    %v2233 = vsub.f32 %v2231, %v2232
    %v2234 = vand.u32 %v2233, 4294901760
    %2235 = vmatpush1.msra.mxu0 %v2234
    %2236 = vmatprep.subr.mxu0 0.0
    %v2237 = vand.u32 %v1589, 4294901760
    %v2238 = vsub.f32 %v1589, %v2237
    %v2239 = vand.u32 %v2238, 4294901760
    %v2240 = vsub.f32 %v2238, %v2239
    %v2241 = vand.u32 %v2240, 4294901760
    %2242 = vmatpush1.msra.mxu0 %v2241
    %2243 = vmatprep.subr.mxu0 0.0
    %2244 = vmatpush2.msra.mxu0 0.0
    %2245 = vmatprep.subr.mxu0 0.0
    %2246 = vmatpush2.msra.mxu0 0.0
    %2247 = vmatprep.subr.mxu0 0.0
    %2248 = vmatpush2.msra.mxu0 0.0
    %2249 = vmatprep.subr.mxu0 0.0
    %2250 = vmatpush2.msra.mxu0 0.0
    %2251 = vmatprep.subr.mxu0 0.0
    %2252 = vmatpush2.msra.mxu0 0.0
    %2253 = vmatprep.subr.mxu0 0.0
    %2254 = vmatpush2.msra.mxu0 0.0
    %2255 = vmatprep.subr.mxu0 0.0
    %2256 = vmatpush2.msra.mxu0 0.0
    %2257 = vmatprep.subr.mxu0 0.0
    %2258 = vmatpush2.msra.mxu0 0.0
    %2259 = vmatprep.subr.mxu0 0.0
    %2260 = vmatpush2.msra.mxu0 0.0
    %2261 = vmatprep.subr.mxu0 0.0
    %2262 = vmatpush2.msra.mxu0 0.0
    %2263 = vmatprep.subr.mxu0 0.0
    %2264 = vmatpush2.msra.mxu0 0.0
    %2265 = vmatprep.subr.mxu0 0.0
    %2266 = vmatpush2.msra.mxu0 0.0
    %2267 = vmatprep.subr.mxu0 0.0
    %2268 = vmatpush2.msra.mxu0 0.0
    %2269 = vmatprep.subr.mxu0 0.0
    %2270 = vmatpush2.msra.mxu0 0.0
    %2271 = vmatprep.subr.mxu0 0.0
    %2272 = vmatpush2.msra.mxu0 0.0
    %2273 = vmatprep.subr.mxu0 0.0
    %2274 = vmatpush2.msra.mxu0 0.0
    %2275 = vmatprep.mubr.f32.mxu0 0.0
    %v2276 = vand.u32 %v2110, 4294901760
    %2277 = vmatmul.mubr.f32.gmra.mxu0 %v2276
    %v2278 = vpop.f32.mrf.mxu0
    %v2279 = vadd.f32 %v2188, %v2278
    %v2280 = vpop.f32.mrf.mxu0
    %2281 = vdwg.mxu0
    %2282 = vmatprep.subr.mxu0 0.0
    %2283 = vmatpush1.msra.mxu0 0.0
    %2284 = vmatprep.subr.mxu0 0.0
    %2285 = vmatpush1.msra.mxu0 0.0
    %2286 = vmatprep.subr.mxu0 0.0
    %2287 = vmatpush1.msra.mxu0 0.0
    %2288 = vmatprep.subr.mxu0 0.0
    %2289 = vmatpush1.msra.mxu0 0.0
    %2290 = vmatprep.subr.mxu0 0.0
    %2291 = vmatpush1.msra.mxu0 0.0
    %2292 = vmatprep.subr.mxu0 0.0
    %2293 = vmatpush1.msra.mxu0 0.0
    %2294 = vmatprep.subr.mxu0 0.0
    %2295 = vmatpush1.msra.mxu0 0.0
    %2296 = vmatprep.subr.mxu0 0.0
    %2297 = vmatpush1.msra.mxu0 0.0
    %2298 = vmatprep.subr.mxu0 0.0
    %2299 = vmatpush1.msra.mxu0 0.0
    %2300 = vmatprep.subr.mxu0 0.0
    %2301 = vmatpush1.msra.mxu0 0.0
    %2302 = vmatprep.subr.mxu0 0.0
    %2303 = vmatpush1.msra.mxu0 0.0
    %2304 = vmatprep.subr.mxu0 0.0
    %2305 = vmatpush1.msra.mxu0 0.0
    %2306 = vmatprep.subr.mxu0 0.0
    %v2307 = vand.u32 %v1592, 4294901760
    %v2308 = vsub.f32 %v1592, %v2307
    %2309 = vmatpush1.msra.mxu0 %v2308
    %2310 = vmatprep.subr.mxu0 0.0
    %v2311 = vand.u32 %v1591, 4294901760
    %v2312 = vsub.f32 %v1591, %v2311
    %2313 = vmatpush1.msra.mxu0 %v2312
    %2314 = vmatprep.subr.mxu0 0.0
    %v2315 = vand.u32 %v1590, 4294901760
    %v2316 = vsub.f32 %v1590, %v2315
    %2317 = vmatpush1.msra.mxu0 %v2316
    %2318 = vmatprep.subr.mxu0 0.0
    %v2319 = vand.u32 %v1589, 4294901760
    %v2320 = vsub.f32 %v1589, %v2319
    %2321 = vmatpush1.msra.mxu0 %v2320
    %2322 = vmatprep.subr.mxu0 0.0
    %2323 = vmatpush2.msra.mxu0 0.0
    %2324 = vmatprep.subr.mxu0 0.0
    %2325 = vmatpush2.msra.mxu0 0.0
    %2326 = vmatprep.subr.mxu0 0.0
    %2327 = vmatpush2.msra.mxu0 0.0
    %2328 = vmatprep.subr.mxu0 0.0
    %2329 = vmatpush2.msra.mxu0 0.0
    %2330 = vmatprep.subr.mxu0 0.0
    %2331 = vmatpush2.msra.mxu0 0.0
    %2332 = vmatprep.subr.mxu0 0.0
    %2333 = vmatpush2.msra.mxu0 0.0
    %2334 = vmatprep.subr.mxu0 0.0
    %2335 = vmatpush2.msra.mxu0 0.0
    %2336 = vmatprep.subr.mxu0 0.0
    %2337 = vmatpush2.msra.mxu0 0.0
    %2338 = vmatprep.subr.mxu0 0.0
    %2339 = vmatpush2.msra.mxu0 0.0
    %2340 = vmatprep.subr.mxu0 0.0
    %2341 = vmatpush2.msra.mxu0 0.0
    %2342 = vmatprep.subr.mxu0 0.0
    %2343 = vmatpush2.msra.mxu0 0.0
    %2344 = vmatprep.subr.mxu0 0.0
    %2345 = vmatpush2.msra.mxu0 0.0
    %2346 = vmatprep.subr.mxu0 0.0
    %2347 = vmatpush2.msra.mxu0 0.0
    %2348 = vmatprep.subr.mxu0 0.0
    %2349 = vmatpush2.msra.mxu0 0.0
    %2350 = vmatprep.subr.mxu0 0.0
    %2351 = vmatpush2.msra.mxu0 0.0
    %2352 = vmatprep.subr.mxu0 0.0
    %2353 = vmatpush2.msra.mxu0 0.0
    %2354 = vmatprep.mubr.f32.mxu0 0.0
    %v2355 = vand.u32 %v2110, 4294901760
    %v2356 = vsub.f32 %v2110, %v2355
    %2357 = vmatmul.mubr.f32.gmra.mxu0 %v2356
    %v2358 = vpop.f32.mrf.mxu0
    %v2359 = vadd.f32 %v2279, %v2358
    %v2360 = vpop.f32.mrf.mxu0
    %2361 = vdwg.mxu0
    %2362 = vmatprep.subr.mxu0 0.0
    %2363 = vmatpush1.msra.mxu0 0.0
    %2364 = vmatprep.subr.mxu0 0.0
    %2365 = vmatpush1.msra.mxu0 0.0
    %2366 = vmatprep.subr.mxu0 0.0
    %2367 = vmatpush1.msra.mxu0 0.0
    %2368 = vmatprep.subr.mxu0 0.0
    %2369 = vmatpush1.msra.mxu0 0.0
    %2370 = vmatprep.subr.mxu0 0.0
    %2371 = vmatpush1.msra.mxu0 0.0
    %2372 = vmatprep.subr.mxu0 0.0
    %2373 = vmatpush1.msra.mxu0 0.0
    %2374 = vmatprep.subr.mxu0 0.0
    %2375 = vmatpush1.msra.mxu0 0.0
    %2376 = vmatprep.subr.mxu0 0.0
    %2377 = vmatpush1.msra.mxu0 0.0
    %2378 = vmatprep.subr.mxu0 0.0
    %2379 = vmatpush1.msra.mxu0 0.0
    %2380 = vmatprep.subr.mxu0 0.0
    %2381 = vmatpush1.msra.mxu0 0.0
    %2382 = vmatprep.subr.mxu0 0.0
    %2383 = vmatpush1.msra.mxu0 0.0
    %2384 = vmatprep.subr.mxu0 0.0
    %2385 = vmatpush1.msra.mxu0 0.0
    %2386 = vmatprep.subr.mxu0 0.0
    %v2387 = vand.u32 %v1592, 4294901760
    %2388 = vmatpush1.msra.mxu0 %v2387
    %2389 = vmatprep.subr.mxu0 0.0
    %v2390 = vand.u32 %v1591, 4294901760
    %2391 = vmatpush1.msra.mxu0 %v2390
    %2392 = vmatprep.subr.mxu0 0.0
    %v2393 = vand.u32 %v1590, 4294901760
    %2394 = vmatpush1.msra.mxu0 %v2393
    %2395 = vmatprep.subr.mxu0 0.0
    %v2396 = vand.u32 %v1589, 4294901760
    %2397 = vmatpush1.msra.mxu0 %v2396
    %2398 = vmatprep.subr.mxu0 0.0
    %2399 = vmatpush2.msra.mxu0 0.0
    %2400 = vmatprep.subr.mxu0 0.0
    %2401 = vmatpush2.msra.mxu0 0.0
    %2402 = vmatprep.subr.mxu0 0.0
    %2403 = vmatpush2.msra.mxu0 0.0
    %2404 = vmatprep.subr.mxu0 0.0
    %2405 = vmatpush2.msra.mxu0 0.0
    %2406 = vmatprep.subr.mxu0 0.0
    %2407 = vmatpush2.msra.mxu0 0.0
    %2408 = vmatprep.subr.mxu0 0.0
    %2409 = vmatpush2.msra.mxu0 0.0
    %2410 = vmatprep.subr.mxu0 0.0
    %2411 = vmatpush2.msra.mxu0 0.0
    %2412 = vmatprep.subr.mxu0 0.0
    %2413 = vmatpush2.msra.mxu0 0.0
    %2414 = vmatprep.subr.mxu0 0.0
    %2415 = vmatpush2.msra.mxu0 0.0
    %2416 = vmatprep.subr.mxu0 0.0
    %2417 = vmatpush2.msra.mxu0 0.0
    %2418 = vmatprep.subr.mxu0 0.0
    %2419 = vmatpush2.msra.mxu0 0.0
    %2420 = vmatprep.subr.mxu0 0.0
    %2421 = vmatpush2.msra.mxu0 0.0
    %2422 = vmatprep.subr.mxu0 0.0
    %2423 = vmatpush2.msra.mxu0 0.0
    %2424 = vmatprep.subr.mxu0 0.0
    %2425 = vmatpush2.msra.mxu0 0.0
    %2426 = vmatprep.subr.mxu0 0.0
    %2427 = vmatpush2.msra.mxu0 0.0
    %2428 = vmatprep.subr.mxu0 0.0
    %2429 = vmatpush2.msra.mxu0 0.0
    %2430 = vmatprep.mubr.f32.mxu0 0.0
    %v2431 = vand.u32 %v2110, 4294901760
    %v2432 = vsub.f32 %v2110, %v2431
    %v2433 = vand.u32 %v2432, 4294901760
    %2434 = vmatmul.mubr.f32.gmra.mxu0 %v2433
    %v2435 = vpop.f32.mrf.mxu0
    %v2436 = vadd.f32 %v2359, %v2435
    %v2437 = vpop.f32.mrf.mxu0
    %2438 = vdwg.mxu0
    %2439 = vmatprep.subr.mxu0 0.0
    %2440 = vmatpush1.msra.mxu0 0.0
    %2441 = vmatprep.subr.mxu0 0.0
    %2442 = vmatpush1.msra.mxu0 0.0
    %2443 = vmatprep.subr.mxu0 0.0
    %2444 = vmatpush1.msra.mxu0 0.0
    %2445 = vmatprep.subr.mxu0 0.0
    %2446 = vmatpush1.msra.mxu0 0.0
    %2447 = vmatprep.subr.mxu0 0.0
    %2448 = vmatpush1.msra.mxu0 0.0
    %2449 = vmatprep.subr.mxu0 0.0
    %2450 = vmatpush1.msra.mxu0 0.0
    %2451 = vmatprep.subr.mxu0 0.0
    %2452 = vmatpush1.msra.mxu0 0.0
    %2453 = vmatprep.subr.mxu0 0.0
    %2454 = vmatpush1.msra.mxu0 0.0
    %2455 = vmatprep.subr.mxu0 0.0
    %2456 = vmatpush1.msra.mxu0 0.0
    %2457 = vmatprep.subr.mxu0 0.0
    %2458 = vmatpush1.msra.mxu0 0.0
    %2459 = vmatprep.subr.mxu0 0.0
    %2460 = vmatpush1.msra.mxu0 0.0
    %2461 = vmatprep.subr.mxu0 0.0
    %2462 = vmatpush1.msra.mxu0 0.0
    %2463 = vmatprep.subr.mxu0 0.0
    %v2464 = vand.u32 %v1592, 4294901760
    %v2465 = vsub.f32 %v1592, %v2464
    %v2466 = vand.u32 %v2465, 4294901760
    %2467 = vmatpush1.msra.mxu0 %v2466
    %2468 = vmatprep.subr.mxu0 0.0
    %v2469 = vand.u32 %v1591, 4294901760
    %v2470 = vsub.f32 %v1591, %v2469
    %v2471 = vand.u32 %v2470, 4294901760
    %2472 = vmatpush1.msra.mxu0 %v2471
    %2473 = vmatprep.subr.mxu0 0.0
    %v2474 = vand.u32 %v1590, 4294901760
    %v2475 = vsub.f32 %v1590, %v2474
    %v2476 = vand.u32 %v2475, 4294901760
    %2477 = vmatpush1.msra.mxu0 %v2476
    %2478 = vmatprep.subr.mxu0 0.0
    %v2479 = vand.u32 %v1589, 4294901760
    %v2480 = vsub.f32 %v1589, %v2479
    %v2481 = vand.u32 %v2480, 4294901760
    %2482 = vmatpush1.msra.mxu0 %v2481
    %2483 = vmatprep.subr.mxu0 0.0
    %2484 = vmatpush2.msra.mxu0 0.0
    %2485 = vmatprep.subr.mxu0 0.0
    %2486 = vmatpush2.msra.mxu0 0.0
    %2487 = vmatprep.subr.mxu0 0.0
    %2488 = vmatpush2.msra.mxu0 0.0
    %2489 = vmatprep.subr.mxu0 0.0
    %2490 = vmatpush2.msra.mxu0 0.0
    %2491 = vmatprep.subr.mxu0 0.0
    %2492 = vmatpush2.msra.mxu0 0.0
    %2493 = vmatprep.subr.mxu0 0.0
    %2494 = vmatpush2.msra.mxu0 0.0
    %2495 = vmatprep.subr.mxu0 0.0
    %2496 = vmatpush2.msra.mxu0 0.0
    %2497 = vmatprep.subr.mxu0 0.0
    %2498 = vmatpush2.msra.mxu0 0.0
    %2499 = vmatprep.subr.mxu0 0.0
    %2500 = vmatpush2.msra.mxu0 0.0
    %2501 = vmatprep.subr.mxu0 0.0
    %2502 = vmatpush2.msra.mxu0 0.0
    %2503 = vmatprep.subr.mxu0 0.0
    %2504 = vmatpush2.msra.mxu0 0.0
    %2505 = vmatprep.subr.mxu0 0.0
    %2506 = vmatpush2.msra.mxu0 0.0
    %2507 = vmatprep.subr.mxu0 0.0
    %2508 = vmatpush2.msra.mxu0 0.0
    %2509 = vmatprep.subr.mxu0 0.0
    %2510 = vmatpush2.msra.mxu0 0.0
    %2511 = vmatprep.subr.mxu0 0.0
    %2512 = vmatpush2.msra.mxu0 0.0
    %2513 = vmatprep.subr.mxu0 0.0
    %2514 = vmatpush2.msra.mxu0 0.0
    %2515 = vmatprep.mubr.f32.mxu0 0.0
    %v2516 = vand.u32 %v2110, 4294901760
    %2517 = vmatmul.mubr.f32.gmra.mxu0 %v2516
    %v2518 = vpop.f32.mrf.mxu0
    %v2519 = vadd.f32 %v2436, %v2518
    %v2520 = vpop.f32.mrf.mxu0
    %2521 = vdwg.mxu0
    %2522 = vmatprep.subr.mxu0 0.0
    %2523 = vmatpush1.msra.mxu0 0.0
    %2524 = vmatprep.subr.mxu0 0.0
    %2525 = vmatpush1.msra.mxu0 0.0
    %2526 = vmatprep.subr.mxu0 0.0
    %2527 = vmatpush1.msra.mxu0 0.0
    %2528 = vmatprep.subr.mxu0 0.0
    %2529 = vmatpush1.msra.mxu0 0.0
    %2530 = vmatprep.subr.mxu0 0.0
    %2531 = vmatpush1.msra.mxu0 0.0
    %2532 = vmatprep.subr.mxu0 0.0
    %2533 = vmatpush1.msra.mxu0 0.0
    %2534 = vmatprep.subr.mxu0 0.0
    %2535 = vmatpush1.msra.mxu0 0.0
    %2536 = vmatprep.subr.mxu0 0.0
    %2537 = vmatpush1.msra.mxu0 0.0
    %2538 = vmatprep.subr.mxu0 0.0
    %2539 = vmatpush1.msra.mxu0 0.0
    %2540 = vmatprep.subr.mxu0 0.0
    %2541 = vmatpush1.msra.mxu0 0.0
    %2542 = vmatprep.subr.mxu0 0.0
    %2543 = vmatpush1.msra.mxu0 0.0
    %2544 = vmatprep.subr.mxu0 0.0
    %2545 = vmatpush1.msra.mxu0 0.0
    %2546 = vmatprep.subr.mxu0 0.0
    %v2547 = vand.u32 %v1592, 4294901760
    %2548 = vmatpush1.msra.mxu0 %v2547
    %2549 = vmatprep.subr.mxu0 0.0
    %v2550 = vand.u32 %v1591, 4294901760
    %2551 = vmatpush1.msra.mxu0 %v2550
    %2552 = vmatprep.subr.mxu0 0.0
    %v2553 = vand.u32 %v1590, 4294901760
    %2554 = vmatpush1.msra.mxu0 %v2553
    %2555 = vmatprep.subr.mxu0 0.0
    %v2556 = vand.u32 %v1589, 4294901760
    %2557 = vmatpush1.msra.mxu0 %v2556
    %2558 = vmatprep.subr.mxu0 0.0
    %2559 = vmatpush2.msra.mxu0 0.0
    %2560 = vmatprep.subr.mxu0 0.0
    %2561 = vmatpush2.msra.mxu0 0.0
    %2562 = vmatprep.subr.mxu0 0.0
    %2563 = vmatpush2.msra.mxu0 0.0
    %2564 = vmatprep.subr.mxu0 0.0
    %2565 = vmatpush2.msra.mxu0 0.0
    %2566 = vmatprep.subr.mxu0 0.0
    %2567 = vmatpush2.msra.mxu0 0.0
    %2568 = vmatprep.subr.mxu0 0.0
    %2569 = vmatpush2.msra.mxu0 0.0
    %2570 = vmatprep.subr.mxu0 0.0
    %2571 = vmatpush2.msra.mxu0 0.0
    %2572 = vmatprep.subr.mxu0 0.0
    %2573 = vmatpush2.msra.mxu0 0.0
    %2574 = vmatprep.subr.mxu0 0.0
    %2575 = vmatpush2.msra.mxu0 0.0
    %2576 = vmatprep.subr.mxu0 0.0
    %2577 = vmatpush2.msra.mxu0 0.0
    %2578 = vmatprep.subr.mxu0 0.0
    %2579 = vmatpush2.msra.mxu0 0.0
    %2580 = vmatprep.subr.mxu0 0.0
    %2581 = vmatpush2.msra.mxu0 0.0
    %2582 = vmatprep.subr.mxu0 0.0
    %2583 = vmatpush2.msra.mxu0 0.0
    %2584 = vmatprep.subr.mxu0 0.0
    %2585 = vmatpush2.msra.mxu0 0.0
    %2586 = vmatprep.subr.mxu0 0.0
    %2587 = vmatpush2.msra.mxu0 0.0
    %2588 = vmatprep.subr.mxu0 0.0
    %2589 = vmatpush2.msra.mxu0 0.0
    %2590 = vmatprep.mubr.f32.mxu0 0.0
    %v2591 = vand.u32 %v2110, 4294901760
    %2592 = vmatmul.mubr.f32.gmra.mxu0 %v2591
    %v2593 = vpop.f32.mrf.mxu0
    %v2594 = vadd.f32 %v2519, %v2593
    %v2595 = vpop.f32.mrf.mxu0
    %2596 = vdwg.mxu0
    %v2597 = vmax.f32 %v2594, 0.0
    %v2598 = vlaneseq
    %v2599 = vshrl.u32 %v2598, 7
    %v2600 = vsub.s32 2, %v2599
    %v2601 = vrot.slane %v1599, %v2600
    %v2603 = vsel %vm76, %v2597, 0
    %2605 = vmatprep.subr.mxu0 0.0
    %2606 = vmatpush1.msra.mxu0 0.0
    %2607 = vmatprep.subr.mxu0 0.0
    %2608 = vmatpush1.msra.mxu0 0.0
    %2609 = vmatprep.subr.mxu0 0.0
    %2610 = vmatpush1.msra.mxu0 0.0
    %2611 = vmatprep.subr.mxu0 0.0
    %2612 = vmatpush1.msra.mxu0 0.0
    %2613 = vmatprep.subr.mxu0 0.0
    %2614 = vmatpush1.msra.mxu0 0.0
    %2615 = vmatprep.subr.mxu0 0.0
    %2616 = vmatpush1.msra.mxu0 0.0
    %2617 = vmatprep.subr.mxu0 0.0
    %2618 = vmatpush1.msra.mxu0 0.0
    %2619 = vmatprep.subr.mxu0 0.0
    %2620 = vmatpush1.msra.mxu0 0.0
    %2621 = vmatprep.subr.mxu0 0.0
    %2622 = vmatpush1.msra.mxu0 0.0
    %2623 = vmatprep.subr.mxu0 0.0
    %2624 = vmatpush1.msra.mxu0 0.0
    %2625 = vmatprep.subr.mxu0 0.0
    %2626 = vmatpush1.msra.mxu0 0.0
    %2627 = vmatprep.subr.mxu0 0.0
    %2628 = vmatpush1.msra.mxu0 0.0
    %2629 = vmatprep.subr.mxu0 0.0
    %v2630 = vand.u32 %v1597, 4294901760
    %2631 = vmatpush1.msra.mxu0 %v2630
    %2632 = vmatprep.subr.mxu0 0.0
    %v2633 = vand.u32 %v1596, 4294901760
    %2634 = vmatpush1.msra.mxu0 %v2633
    %2635 = vmatprep.subr.mxu0 0.0
    %v2636 = vand.u32 %v1595, 4294901760
    %2637 = vmatpush1.msra.mxu0 %v2636
    %2638 = vmatprep.subr.mxu0 0.0
    %v2639 = vand.u32 %v1594, 4294901760
    %2640 = vmatpush1.msra.mxu0 %v2639
    %2641 = vmatprep.subr.mxu0 0.0
    %2642 = vmatpush2.msra.mxu0 0.0
    %2643 = vmatprep.subr.mxu0 0.0
    %2644 = vmatpush2.msra.mxu0 0.0
    %2645 = vmatprep.subr.mxu0 0.0
    %2646 = vmatpush2.msra.mxu0 0.0
    %2647 = vmatprep.subr.mxu0 0.0
    %2648 = vmatpush2.msra.mxu0 0.0
    %2649 = vmatprep.subr.mxu0 0.0
    %2650 = vmatpush2.msra.mxu0 0.0
    %2651 = vmatprep.subr.mxu0 0.0
    %2652 = vmatpush2.msra.mxu0 0.0
    %2653 = vmatprep.subr.mxu0 0.0
    %2654 = vmatpush2.msra.mxu0 0.0
    %2655 = vmatprep.subr.mxu0 0.0
    %2656 = vmatpush2.msra.mxu0 0.0
    %2657 = vmatprep.subr.mxu0 0.0
    %2658 = vmatpush2.msra.mxu0 0.0
    %2659 = vmatprep.subr.mxu0 0.0
    %2660 = vmatpush2.msra.mxu0 0.0
    %2661 = vmatprep.subr.mxu0 0.0
    %2662 = vmatpush2.msra.mxu0 0.0
    %2663 = vmatprep.subr.mxu0 0.0
    %2664 = vmatpush2.msra.mxu0 0.0
    %2665 = vmatprep.subr.mxu0 0.0
    %2666 = vmatpush2.msra.mxu0 0.0
    %2667 = vmatprep.subr.mxu0 0.0
    %2668 = vmatpush2.msra.mxu0 0.0
    %2669 = vmatprep.subr.mxu0 0.0
    %2670 = vmatpush2.msra.mxu0 0.0
    %2671 = vmatprep.subr.mxu0 0.0
    %2672 = vmatpush2.msra.mxu0 0.0
    %2673 = vmatprep.mubr.f32.mxu0 0.0
    %v2674 = vand.u32 %v2603, 4294901760
    %v2675 = vsub.f32 %v2603, %v2674
    %v2676 = vand.u32 %v2675, 4294901760
    %v2677 = vsub.f32 %v2675, %v2676
    %v2678 = vand.u32 %v2677, 4294901760
    %2679 = vmatmul.mubr.f32.gmra.mxu0 %v2678
    %v2680 = vpop.f32.mrf.mxu0
    %v2681 = vadd.f32 %v2601, %v2680
    %v2682 = vpop.f32.mrf.mxu0
    %2683 = vdwg.mxu0
    %2684 = vmatprep.subr.mxu0 0.0
    %2685 = vmatpush1.msra.mxu0 0.0
    %2686 = vmatprep.subr.mxu0 0.0
    %2687 = vmatpush1.msra.mxu0 0.0
    %2688 = vmatprep.subr.mxu0 0.0
    %2689 = vmatpush1.msra.mxu0 0.0
    %2690 = vmatprep.subr.mxu0 0.0
    %2691 = vmatpush1.msra.mxu0 0.0
    %2692 = vmatprep.subr.mxu0 0.0
    %2693 = vmatpush1.msra.mxu0 0.0
    %2694 = vmatprep.subr.mxu0 0.0
    %2695 = vmatpush1.msra.mxu0 0.0
    %2696 = vmatprep.subr.mxu0 0.0
    %2697 = vmatpush1.msra.mxu0 0.0
    %2698 = vmatprep.subr.mxu0 0.0
    %2699 = vmatpush1.msra.mxu0 0.0
    %2700 = vmatprep.subr.mxu0 0.0
    %2701 = vmatpush1.msra.mxu0 0.0
    %2702 = vmatprep.subr.mxu0 0.0
    %2703 = vmatpush1.msra.mxu0 0.0
    %2704 = vmatprep.subr.mxu0 0.0
    %2705 = vmatpush1.msra.mxu0 0.0
    %2706 = vmatprep.subr.mxu0 0.0
    %2707 = vmatpush1.msra.mxu0 0.0
    %2708 = vmatprep.subr.mxu0 0.0
    %v2709 = vand.u32 %v1597, 4294901760
    %v2710 = vsub.f32 %v1597, %v2709
    %v2711 = vand.u32 %v2710, 4294901760
    %v2712 = vsub.f32 %v2710, %v2711
    %v2713 = vand.u32 %v2712, 4294901760
    %2714 = vmatpush1.msra.mxu0 %v2713
    %2715 = vmatprep.subr.mxu0 0.0
    %v2716 = vand.u32 %v1596, 4294901760
    %v2717 = vsub.f32 %v1596, %v2716
    %v2718 = vand.u32 %v2717, 4294901760
    %v2719 = vsub.f32 %v2717, %v2718
    %v2720 = vand.u32 %v2719, 4294901760
    %2721 = vmatpush1.msra.mxu0 %v2720
    %2722 = vmatprep.subr.mxu0 0.0
    %v2723 = vand.u32 %v1595, 4294901760
    %v2724 = vsub.f32 %v1595, %v2723
    %v2725 = vand.u32 %v2724, 4294901760
    %v2726 = vsub.f32 %v2724, %v2725
    %v2727 = vand.u32 %v2726, 4294901760
    %2728 = vmatpush1.msra.mxu0 %v2727
    %2729 = vmatprep.subr.mxu0 0.0
    %v2730 = vand.u32 %v1594, 4294901760
    %v2731 = vsub.f32 %v1594, %v2730
    %v2732 = vand.u32 %v2731, 4294901760
    %v2733 = vsub.f32 %v2731, %v2732
    %v2734 = vand.u32 %v2733, 4294901760
    %2735 = vmatpush1.msra.mxu0 %v2734
    %2736 = vmatprep.subr.mxu0 0.0
    %2737 = vmatpush2.msra.mxu0 0.0
    %2738 = vmatprep.subr.mxu0 0.0
    %2739 = vmatpush2.msra.mxu0 0.0
    %2740 = vmatprep.subr.mxu0 0.0
    %2741 = vmatpush2.msra.mxu0 0.0
    %2742 = vmatprep.subr.mxu0 0.0
    %2743 = vmatpush2.msra.mxu0 0.0
    %2744 = vmatprep.subr.mxu0 0.0
    %2745 = vmatpush2.msra.mxu0 0.0
    %2746 = vmatprep.subr.mxu0 0.0
    %2747 = vmatpush2.msra.mxu0 0.0
    %2748 = vmatprep.subr.mxu0 0.0
    %2749 = vmatpush2.msra.mxu0 0.0
    %2750 = vmatprep.subr.mxu0 0.0
    %2751 = vmatpush2.msra.mxu0 0.0
    %2752 = vmatprep.subr.mxu0 0.0
    %2753 = vmatpush2.msra.mxu0 0.0
    %2754 = vmatprep.subr.mxu0 0.0
    %2755 = vmatpush2.msra.mxu0 0.0
    %2756 = vmatprep.subr.mxu0 0.0
    %2757 = vmatpush2.msra.mxu0 0.0
    %2758 = vmatprep.subr.mxu0 0.0
    %2759 = vmatpush2.msra.mxu0 0.0
    %2760 = vmatprep.subr.mxu0 0.0
    %2761 = vmatpush2.msra.mxu0 0.0
    %2762 = vmatprep.subr.mxu0 0.0
    %2763 = vmatpush2.msra.mxu0 0.0
    %2764 = vmatprep.subr.mxu0 0.0
    %2765 = vmatpush2.msra.mxu0 0.0
    %2766 = vmatprep.subr.mxu0 0.0
    %2767 = vmatpush2.msra.mxu0 0.0
    %2768 = vmatprep.mubr.f32.mxu0 0.0
    %v2769 = vand.u32 %v2603, 4294901760
    %2770 = vmatmul.mubr.f32.gmra.mxu0 %v2769
    %v2771 = vpop.f32.mrf.mxu0
    %v2772 = vadd.f32 %v2681, %v2771
    %v2773 = vpop.f32.mrf.mxu0
    %2774 = vdwg.mxu0
    %2775 = vmatprep.subr.mxu0 0.0
    %2776 = vmatpush1.msra.mxu0 0.0
    %2777 = vmatprep.subr.mxu0 0.0
    %2778 = vmatpush1.msra.mxu0 0.0
    %2779 = vmatprep.subr.mxu0 0.0
    %2780 = vmatpush1.msra.mxu0 0.0
    %2781 = vmatprep.subr.mxu0 0.0
    %2782 = vmatpush1.msra.mxu0 0.0
    %2783 = vmatprep.subr.mxu0 0.0
    %2784 = vmatpush1.msra.mxu0 0.0
    %2785 = vmatprep.subr.mxu0 0.0
    %2786 = vmatpush1.msra.mxu0 0.0
    %2787 = vmatprep.subr.mxu0 0.0
    %2788 = vmatpush1.msra.mxu0 0.0
    %2789 = vmatprep.subr.mxu0 0.0
    %2790 = vmatpush1.msra.mxu0 0.0
    %2791 = vmatprep.subr.mxu0 0.0
    %2792 = vmatpush1.msra.mxu0 0.0
    %2793 = vmatprep.subr.mxu0 0.0
    %2794 = vmatpush1.msra.mxu0 0.0
    %2795 = vmatprep.subr.mxu0 0.0
    %2796 = vmatpush1.msra.mxu0 0.0
    %2797 = vmatprep.subr.mxu0 0.0
    %2798 = vmatpush1.msra.mxu0 0.0
    %2799 = vmatprep.subr.mxu0 0.0
    %v2800 = vand.u32 %v1597, 4294901760
    %v2801 = vsub.f32 %v1597, %v2800
    %2802 = vmatpush1.msra.mxu0 %v2801
    %2803 = vmatprep.subr.mxu0 0.0
    %v2804 = vand.u32 %v1596, 4294901760
    %v2805 = vsub.f32 %v1596, %v2804
    %2806 = vmatpush1.msra.mxu0 %v2805
    %2807 = vmatprep.subr.mxu0 0.0
    %v2808 = vand.u32 %v1595, 4294901760
    %v2809 = vsub.f32 %v1595, %v2808
    %2810 = vmatpush1.msra.mxu0 %v2809
    %2811 = vmatprep.subr.mxu0 0.0
    %v2812 = vand.u32 %v1594, 4294901760
    %v2813 = vsub.f32 %v1594, %v2812
    %2814 = vmatpush1.msra.mxu0 %v2813
    %2815 = vmatprep.subr.mxu0 0.0
    %2816 = vmatpush2.msra.mxu0 0.0
    %2817 = vmatprep.subr.mxu0 0.0
    %2818 = vmatpush2.msra.mxu0 0.0
    %2819 = vmatprep.subr.mxu0 0.0
    %2820 = vmatpush2.msra.mxu0 0.0
    %2821 = vmatprep.subr.mxu0 0.0
    %2822 = vmatpush2.msra.mxu0 0.0
    %2823 = vmatprep.subr.mxu0 0.0
    %2824 = vmatpush2.msra.mxu0 0.0
    %2825 = vmatprep.subr.mxu0 0.0
    %2826 = vmatpush2.msra.mxu0 0.0
    %2827 = vmatprep.subr.mxu0 0.0
    %2828 = vmatpush2.msra.mxu0 0.0
    %2829 = vmatprep.subr.mxu0 0.0
    %2830 = vmatpush2.msra.mxu0 0.0
    %2831 = vmatprep.subr.mxu0 0.0
    %2832 = vmatpush2.msra.mxu0 0.0
    %2833 = vmatprep.subr.mxu0 0.0
    %2834 = vmatpush2.msra.mxu0 0.0
    %2835 = vmatprep.subr.mxu0 0.0
    %2836 = vmatpush2.msra.mxu0 0.0
    %2837 = vmatprep.subr.mxu0 0.0
    %2838 = vmatpush2.msra.mxu0 0.0
    %2839 = vmatprep.subr.mxu0 0.0
    %2840 = vmatpush2.msra.mxu0 0.0
    %2841 = vmatprep.subr.mxu0 0.0
    %2842 = vmatpush2.msra.mxu0 0.0
    %2843 = vmatprep.subr.mxu0 0.0
    %2844 = vmatpush2.msra.mxu0 0.0
    %2845 = vmatprep.subr.mxu0 0.0
    %2846 = vmatpush2.msra.mxu0 0.0
    %2847 = vmatprep.mubr.f32.mxu0 0.0
    %v2848 = vand.u32 %v2603, 4294901760
    %v2849 = vsub.f32 %v2603, %v2848
    %2850 = vmatmul.mubr.f32.gmra.mxu0 %v2849
    %v2851 = vpop.f32.mrf.mxu0
    %v2852 = vadd.f32 %v2772, %v2851
    %v2853 = vpop.f32.mrf.mxu0
    %2854 = vdwg.mxu0
    %2855 = vmatprep.subr.mxu0 0.0
    %2856 = vmatpush1.msra.mxu0 0.0
    %2857 = vmatprep.subr.mxu0 0.0
    %2858 = vmatpush1.msra.mxu0 0.0
    %2859 = vmatprep.subr.mxu0 0.0
    %2860 = vmatpush1.msra.mxu0 0.0
    %2861 = vmatprep.subr.mxu0 0.0
    %2862 = vmatpush1.msra.mxu0 0.0
    %2863 = vmatprep.subr.mxu0 0.0
    %2864 = vmatpush1.msra.mxu0 0.0
    %2865 = vmatprep.subr.mxu0 0.0
    %2866 = vmatpush1.msra.mxu0 0.0
    %2867 = vmatprep.subr.mxu0 0.0
    %2868 = vmatpush1.msra.mxu0 0.0
    %2869 = vmatprep.subr.mxu0 0.0
    %2870 = vmatpush1.msra.mxu0 0.0
    %2871 = vmatprep.subr.mxu0 0.0
    %2872 = vmatpush1.msra.mxu0 0.0
    %2873 = vmatprep.subr.mxu0 0.0
    %2874 = vmatpush1.msra.mxu0 0.0
    %2875 = vmatprep.subr.mxu0 0.0
    %2876 = vmatpush1.msra.mxu0 0.0
    %2877 = vmatprep.subr.mxu0 0.0
    %2878 = vmatpush1.msra.mxu0 0.0
    %2879 = vmatprep.subr.mxu0 0.0
    %v2880 = vand.u32 %v1597, 4294901760
    %2881 = vmatpush1.msra.mxu0 %v2880
    %2882 = vmatprep.subr.mxu0 0.0
    %v2883 = vand.u32 %v1596, 4294901760
    %2884 = vmatpush1.msra.mxu0 %v2883
    %2885 = vmatprep.subr.mxu0 0.0
    %v2886 = vand.u32 %v1595, 4294901760
    %2887 = vmatpush1.msra.mxu0 %v2886
    %2888 = vmatprep.subr.mxu0 0.0
    %v2889 = vand.u32 %v1594, 4294901760
    %2890 = vmatpush1.msra.mxu0 %v2889
    %2891 = vmatprep.subr.mxu0 0.0
    %2892 = vmatpush2.msra.mxu0 0.0
    %2893 = vmatprep.subr.mxu0 0.0
    %2894 = vmatpush2.msra.mxu0 0.0
    %2895 = vmatprep.subr.mxu0 0.0
    %2896 = vmatpush2.msra.mxu0 0.0
    %2897 = vmatprep.subr.mxu0 0.0
    %2898 = vmatpush2.msra.mxu0 0.0
    %2899 = vmatprep.subr.mxu0 0.0
    %2900 = vmatpush2.msra.mxu0 0.0
    %2901 = vmatprep.subr.mxu0 0.0
    %2902 = vmatpush2.msra.mxu0 0.0
    %2903 = vmatprep.subr.mxu0 0.0
    %2904 = vmatpush2.msra.mxu0 0.0
    %2905 = vmatprep.subr.mxu0 0.0
    %2906 = vmatpush2.msra.mxu0 0.0
    %2907 = vmatprep.subr.mxu0 0.0
    %2908 = vmatpush2.msra.mxu0 0.0
    %2909 = vmatprep.subr.mxu0 0.0
    %2910 = vmatpush2.msra.mxu0 0.0
    %2911 = vmatprep.subr.mxu0 0.0
    %2912 = vmatpush2.msra.mxu0 0.0
    %2913 = vmatprep.subr.mxu0 0.0
    %2914 = vmatpush2.msra.mxu0 0.0
    %2915 = vmatprep.subr.mxu0 0.0
    %2916 = vmatpush2.msra.mxu0 0.0
    %2917 = vmatprep.subr.mxu0 0.0
    %2918 = vmatpush2.msra.mxu0 0.0
    %2919 = vmatprep.subr.mxu0 0.0
    %2920 = vmatpush2.msra.mxu0 0.0
    %2921 = vmatprep.subr.mxu0 0.0
    %2922 = vmatpush2.msra.mxu0 0.0
    %2923 = vmatprep.mubr.f32.mxu0 0.0
    %v2924 = vand.u32 %v2603, 4294901760
    %v2925 = vsub.f32 %v2603, %v2924
    %v2926 = vand.u32 %v2925, 4294901760
    %2927 = vmatmul.mubr.f32.gmra.mxu0 %v2926
    %v2928 = vpop.f32.mrf.mxu0
    %v2929 = vadd.f32 %v2852, %v2928
    %v2930 = vpop.f32.mrf.mxu0
    %2931 = vdwg.mxu0
    %2932 = vmatprep.subr.mxu0 0.0
    %2933 = vmatpush1.msra.mxu0 0.0
    %2934 = vmatprep.subr.mxu0 0.0
    %2935 = vmatpush1.msra.mxu0 0.0
    %2936 = vmatprep.subr.mxu0 0.0
    %2937 = vmatpush1.msra.mxu0 0.0
    %2938 = vmatprep.subr.mxu0 0.0
    %2939 = vmatpush1.msra.mxu0 0.0
    %2940 = vmatprep.subr.mxu0 0.0
    %2941 = vmatpush1.msra.mxu0 0.0
    %2942 = vmatprep.subr.mxu0 0.0
    %2943 = vmatpush1.msra.mxu0 0.0
    %2944 = vmatprep.subr.mxu0 0.0
    %2945 = vmatpush1.msra.mxu0 0.0
    %2946 = vmatprep.subr.mxu0 0.0
    %2947 = vmatpush1.msra.mxu0 0.0
    %2948 = vmatprep.subr.mxu0 0.0
    %2949 = vmatpush1.msra.mxu0 0.0
    %2950 = vmatprep.subr.mxu0 0.0
    %2951 = vmatpush1.msra.mxu0 0.0
    %2952 = vmatprep.subr.mxu0 0.0
    %2953 = vmatpush1.msra.mxu0 0.0
    %2954 = vmatprep.subr.mxu0 0.0
    %2955 = vmatpush1.msra.mxu0 0.0
    %2956 = vmatprep.subr.mxu0 0.0
    %v2957 = vand.u32 %v1597, 4294901760
    %v2958 = vsub.f32 %v1597, %v2957
    %v2959 = vand.u32 %v2958, 4294901760
    %2960 = vmatpush1.msra.mxu0 %v2959
    %2961 = vmatprep.subr.mxu0 0.0
    %v2962 = vand.u32 %v1596, 4294901760
    %v2963 = vsub.f32 %v1596, %v2962
    %v2964 = vand.u32 %v2963, 4294901760
    %2965 = vmatpush1.msra.mxu0 %v2964
    %2966 = vmatprep.subr.mxu0 0.0
    %v2967 = vand.u32 %v1595, 4294901760
    %v2968 = vsub.f32 %v1595, %v2967
    %v2969 = vand.u32 %v2968, 4294901760
    %2970 = vmatpush1.msra.mxu0 %v2969
    %2971 = vmatprep.subr.mxu0 0.0
    %v2972 = vand.u32 %v1594, 4294901760
    %v2973 = vsub.f32 %v1594, %v2972
    %v2974 = vand.u32 %v2973, 4294901760
    %2975 = vmatpush1.msra.mxu0 %v2974
    %2976 = vmatprep.subr.mxu0 0.0
    %2977 = vmatpush2.msra.mxu0 0.0
    %2978 = vmatprep.subr.mxu0 0.0
    %2979 = vmatpush2.msra.mxu0 0.0
    %2980 = vmatprep.subr.mxu0 0.0
    %2981 = vmatpush2.msra.mxu0 0.0
    %2982 = vmatprep.subr.mxu0 0.0
    %2983 = vmatpush2.msra.mxu0 0.0
    %2984 = vmatprep.subr.mxu0 0.0
    %2985 = vmatpush2.msra.mxu0 0.0
    %2986 = vmatprep.subr.mxu0 0.0
    %2987 = vmatpush2.msra.mxu0 0.0
    %2988 = vmatprep.subr.mxu0 0.0
    %2989 = vmatpush2.msra.mxu0 0.0
    %2990 = vmatprep.subr.mxu0 0.0
    %2991 = vmatpush2.msra.mxu0 0.0
    %2992 = vmatprep.subr.mxu0 0.0
    %2993 = vmatpush2.msra.mxu0 0.0
    %2994 = vmatprep.subr.mxu0 0.0
    %2995 = vmatpush2.msra.mxu0 0.0
    %2996 = vmatprep.subr.mxu0 0.0
    %2997 = vmatpush2.msra.mxu0 0.0
    %2998 = vmatprep.subr.mxu0 0.0
    %2999 = vmatpush2.msra.mxu0 0.0
    %3000 = vmatprep.subr.mxu0 0.0
    %3001 = vmatpush2.msra.mxu0 0.0
    %3002 = vmatprep.subr.mxu0 0.0
    %3003 = vmatpush2.msra.mxu0 0.0
    %3004 = vmatprep.subr.mxu0 0.0
    %3005 = vmatpush2.msra.mxu0 0.0
    %3006 = vmatprep.subr.mxu0 0.0
    %3007 = vmatpush2.msra.mxu0 0.0
    %3008 = vmatprep.mubr.f32.mxu0 0.0
    %v3009 = vand.u32 %v2603, 4294901760
    %3010 = vmatmul.mubr.f32.gmra.mxu0 %v3009
    %v3011 = vpop.f32.mrf.mxu0
    %v3012 = vadd.f32 %v2929, %v3011
    %v3013 = vpop.f32.mrf.mxu0
    %3014 = vdwg.mxu0
    %3015 = vmatprep.subr.mxu0 0.0
    %3016 = vmatpush1.msra.mxu0 0.0
    %3017 = vmatprep.subr.mxu0 0.0
    %3018 = vmatpush1.msra.mxu0 0.0
    %3019 = vmatprep.subr.mxu0 0.0
    %3020 = vmatpush1.msra.mxu0 0.0
    %3021 = vmatprep.subr.mxu0 0.0
    %3022 = vmatpush1.msra.mxu0 0.0
    %3023 = vmatprep.subr.mxu0 0.0
    %3024 = vmatpush1.msra.mxu0 0.0
    %3025 = vmatprep.subr.mxu0 0.0
    %3026 = vmatpush1.msra.mxu0 0.0
    %3027 = vmatprep.subr.mxu0 0.0
    %3028 = vmatpush1.msra.mxu0 0.0
    %3029 = vmatprep.subr.mxu0 0.0
    %3030 = vmatpush1.msra.mxu0 0.0
    %3031 = vmatprep.subr.mxu0 0.0
    %3032 = vmatpush1.msra.mxu0 0.0
    %3033 = vmatprep.subr.mxu0 0.0
    %3034 = vmatpush1.msra.mxu0 0.0
    %3035 = vmatprep.subr.mxu0 0.0
    %3036 = vmatpush1.msra.mxu0 0.0
    %3037 = vmatprep.subr.mxu0 0.0
    %3038 = vmatpush1.msra.mxu0 0.0
    %3039 = vmatprep.subr.mxu0 0.0
    %v3040 = vand.u32 %v1597, 4294901760
    %3041 = vmatpush1.msra.mxu0 %v3040
    %3042 = vmatprep.subr.mxu0 0.0
    %v3043 = vand.u32 %v1596, 4294901760
    %3044 = vmatpush1.msra.mxu0 %v3043
    %3045 = vmatprep.subr.mxu0 0.0
    %v3046 = vand.u32 %v1595, 4294901760
    %3047 = vmatpush1.msra.mxu0 %v3046
    %3048 = vmatprep.subr.mxu0 0.0
    %v3049 = vand.u32 %v1594, 4294901760
    %3050 = vmatpush1.msra.mxu0 %v3049
    %3051 = vmatprep.subr.mxu0 0.0
    %3052 = vmatpush2.msra.mxu0 0.0
    %3053 = vmatprep.subr.mxu0 0.0
    %3054 = vmatpush2.msra.mxu0 0.0
    %3055 = vmatprep.subr.mxu0 0.0
    %3056 = vmatpush2.msra.mxu0 0.0
    %3057 = vmatprep.subr.mxu0 0.0
    %3058 = vmatpush2.msra.mxu0 0.0
    %3059 = vmatprep.subr.mxu0 0.0
    %3060 = vmatpush2.msra.mxu0 0.0
    %3061 = vmatprep.subr.mxu0 0.0
    %3062 = vmatpush2.msra.mxu0 0.0
    %3063 = vmatprep.subr.mxu0 0.0
    %3064 = vmatpush2.msra.mxu0 0.0
    %3065 = vmatprep.subr.mxu0 0.0
    %3066 = vmatpush2.msra.mxu0 0.0
    %3067 = vmatprep.subr.mxu0 0.0
    %3068 = vmatpush2.msra.mxu0 0.0
    %3069 = vmatprep.subr.mxu0 0.0
    %3070 = vmatpush2.msra.mxu0 0.0
    %3071 = vmatprep.subr.mxu0 0.0
    %3072 = vmatpush2.msra.mxu0 0.0
    %3073 = vmatprep.subr.mxu0 0.0
    %3074 = vmatpush2.msra.mxu0 0.0
    %3075 = vmatprep.subr.mxu0 0.0
    %3076 = vmatpush2.msra.mxu0 0.0
    %3077 = vmatprep.subr.mxu0 0.0
    %3078 = vmatpush2.msra.mxu0 0.0
    %3079 = vmatprep.subr.mxu0 0.0
    %3080 = vmatpush2.msra.mxu0 0.0
    %3081 = vmatprep.subr.mxu0 0.0
    %3082 = vmatpush2.msra.mxu0 0.0
    %3083 = vmatprep.mubr.f32.mxu0 0.0
    %v3084 = vand.u32 %v2603, 4294901760
    %3085 = vmatmul.mubr.f32.gmra.mxu0 %v3084
    %v3086 = vpop.f32.mrf.mxu0
    %v3087 = vadd.f32 %v3012, %v3086
    %v3088 = vpop.f32.mrf.mxu0
    %3089 = vdwg.mxu0
    %v3090 = vlaneseq
    %v3091 = vshrl.u32 %v3090, 7
    %v3092 = vsub.s32 3, %v3091
    %v3093 = vrot.slane %v1599, %v3092
    %v3094 = vmul.f32 %v2104, %v3093
    %v3095 = vadd.f32 %v3094, %v3087
    %v3096 = vsel %vm76, %v3095, 0.0
    %3097 = vadd.xlane.f32.xlu0 %v3096
    %v3098 = vpop.xlane.xlu0 %3097
    %v3099 = vmul.f32 %v3098, %v568
    %v3100 = vsub.f32 %v3095, %v3099
    %v3101 = vmul.f32 %v3100, %v3100
    %v3102 = vsel %vm76, %v3101, 0.0
    %3103 = vadd.xlane.f32.xlu0 %v3102
    %v3104 = vpop.xlane.xlu0 %3103
    %v3105 = vmul.f32 %v3104, %v568
    %v3106 = vadd.f32 %v3105, 1e-05
    %v3107 = vrsqrt.pop %v3106
    %v3108 = vmul.f32 %v3100, %v3107
    %v3109 = vld [vmem:[#allocation7 + $0x8] sm:$0x1]
    %v3110 = vld [vmem:[#allocation7 + $0x9] sm:$0x1]
    %v3111 = vmul.f32 %v3108, %v3109
    %vm3112 = vcmask 253952
    %v3113 = vsel %vm3112, %v3111, 0.0
    %3114 = vadd.xlane.f32.xlu0 %v3113
    %v3115 = vpop.xlane.xlu0 %3114
    %v3116 = vadd.f32 %v3115, %v3110
    %3118 = vset.pattern.permute.xlu0 0
    %3119 = vperm.xlu0 %3118, %v3116
    %v3120 = vpop.permute.xlu0 %3119
    %3122 = vst [vmem:[#allocation8] sm:$0x1] %v3120
    // Predicated region
    $region26: #{tpu_custom_call.1} parent=1 // pred_check
      _
    $region27: #{tpu_custom_call.1} parent=1 // pred_check_branch
      %3124 = sbr.rel (0) target = $region29
    $region28: #{tpu_custom_call.1} parent=1 // pred_region
      %s3126 = ssub.s32 16, 16
      %3127 = vsyncadd [#allocation4], %s3126
      %s3129 = sshll.u32 [#allocation8], 4
      %s3130 = int_to_ptr.vmem [resolvable:$true] %s3129
      %3132 = dma.vmem_to_hbm [thread:$0]  %s3130, 16, %s3, [#allocation4]
    $region29: #{tpu_custom_call.1} parent=1 // pred_fallthru
      _
    // Predicated region
    $region30: #{tpu_custom_call.1} parent=1 // pred_check
      _
    $region31: #{tpu_custom_call.1} parent=1 // pred_check_branch
      %3134 = sbr.rel (0) target = $region33
    $region32: #{tpu_custom_call.1} parent=1 // pred_region
      %3135 = dma.done [#allocation4], 16
    $region33: #{tpu_custom_call.1} parent=1 // pred_fallthru
      _
    %3136 = vsyncpa [#allocation3], 1
    %3137 = vsyncpa [#allocation6], 1
    %3138 = vsyncpa [#allocation4], 1

</llo_original>
